<compile_context>
chip_gen: v7x
topology: tpu7x:2x2x1
jax: 0.10.0
libtpu: 0.0.40
codegen_flags: <defaults>
</compile_context>

<pallas_src>
import functools

import jax
import jax.numpy as jnp
from jax.experimental import pallas as pl
from jax.experimental.pallas import tpu as pltpu

# ---------------- model config (small, synthetic) ----------------
MAX_WIDTH = 32
MAX_HEIGHT = 32
PATCH = 8
CHANNELS = 1
DIM = 32          # attn_layers.dim
DEPTH = 2         # encoder depth
HEADS = 4
DIM_HEAD = 8
FF_MULT = 4
EPS = 1e-5        # PyTorch nn.LayerNorm default eps
INNER = HEADS * DIM_HEAD
FF_DIM = DIM * FF_MULT


# ---------------- fused forward kernel ----------------
def _vit_kernel(patches_ref, base_ref, attn_bias_ref, conv_w_ref,
                ln1_g_ref, ln1_b_ref, wqkv_ref, wo_ref, bo_ref,
                ln2_g_ref, ln2_b_ref, w1_ref, b1_ref, w2_ref, b2_ref,
                norm_g_ref, norm_b_ref, out_ref, *, depth, heads):
    rows = patches_ref.shape[0]          # B*seq (batch folded into rows)
    dim = base_ref.shape[1]

    def ln(x, g, b):
        # LayerNorm statistics kept in f32.
        mu = jnp.mean(x, axis=-1, keepdims=True)
        var = jnp.mean(jnp.square(x - mu), axis=-1, keepdims=True)
        return (x - mu) * jax.lax.rsqrt(var + EPS) * g + b

    def bmm(a, w):
        # heads-batched matmul (h,m,k)x(h,k,n)->(h,m,n), f32 MXU accumulation.
        return jax.lax.dot_general(a, w, (((2,), (1,)), ((0,), (0,))),
                                   preferred_element_type=jnp.float32)

    # Patch embedding. `base` already carries cls token + positional embedding
    # + Conv2d bias per row; the cls rows of `patches` are zero.
    x = base_ref[...] + jnp.dot(patches_ref[...], conv_w_ref[...],
                                preferred_element_type=jnp.float32)   # (rows, DIM) f32

    attn_bias = attn_bias_ref[...][None]      # (1, rows, rows) block-diag batch mask

    # TODO(synk): at real depth (>=4) switch to lax.fori_loop over stacked
    # weights (or a depth grid axis) to bound vreg live ranges.
    for l in range(depth):
        # ---- pre-norm multi-head self-attention, batched over heads ----
        xn = ln(x, ln1_g_ref[l], ln1_b_ref[l]).astype(jnp.bfloat16)
        xh = jnp.broadcast_to(xn[None], (3 * heads, rows, dim))
        qkv = bmm(xh, wqkv_ref[l])                      # (3H, rows, dh) f32
        q = qkv[:heads].astype(jnp.bfloat16)            # 1/sqrt(dh) folded into Wq
        k = qkv[heads:2 * heads].astype(jnp.bfloat16)
        v = qkv[2 * heads:].astype(jnp.bfloat16)
        s = jax.lax.dot_general(q, k, (((2,), (2,)), ((0,), (0,))),
                                preferred_element_type=jnp.float32)   # (H, rows, rows)
        s = s + attn_bias                               # kill cross-batch scores
        s = s - jnp.max(s, axis=-1, keepdims=True)
        p = jnp.exp(s)
        p = p * pl.reciprocal(jnp.sum(p, axis=-1, keepdims=True), approx=True)
        o = bmm(p.astype(jnp.bfloat16), v)              # (H, rows, dh) f32
        c = bmm(o.astype(jnp.bfloat16), wo_ref[l])      # (H, rows, DIM) f32
        attn = c[0]
        for hh in range(1, heads):                      # no lane concat: sum heads
            attn = attn + c[hh]
        x = x + attn + bo_ref[l]

        # ---- pre-norm feed-forward ----
        xn = ln(x, ln2_g_ref[l], ln2_b_ref[l]).astype(jnp.bfloat16)
        h1 = jnp.dot(xn, w1_ref[l], preferred_element_type=jnp.float32) + b1_ref[l]
        # TODO(synk): PyTorch nn.GELU() default is the exact erf form; use the
        # tanh approximation (difference < 1e-3) for robust Mosaic lowering.
        h1 = jax.nn.gelu(h1, approximate=True).astype(jnp.bfloat16)
        x = x + jnp.dot(h1, w2_ref[l], preferred_element_type=jnp.float32) + b2_ref[l]

    # final LayerNorm (self.norm); one contiguous (rows, DIM) slab store.
    out_ref[...] = ln(x, norm_g_ref[...], norm_b_ref[...])


# ---------------- parameters ----------------
def init_params(key):
    kit = iter(jax.random.split(key, 16))

    def nrm(shape, std=0.02):
        return jax.random.normal(next(kit), shape, jnp.float32) * std

    patch_dim = CHANNELS * PATCH * PATCH
    num_patches = (MAX_WIDTH // PATCH) * (MAX_HEIGHT // PATCH)

    # q/k/v weights stored per head as (DEPTH, 3*HEADS, DIM, DIM_HEAD) with the
    # attention scale 1/sqrt(dim_head) pre-folded into the q slabs.
    wqkv = nrm((DEPTH, 3 * HEADS, DIM, DIM_HEAD))
    wqkv = wqkv.at[:, :HEADS].multiply(DIM_HEAD ** -0.5)

    return {
        # Conv2d weight (dim, C, p, p) stored pre-flattened/transposed as
        # (C*p*p, dim); bf16 for MXU-native matmul (f32 accumulation in-kernel).
        "conv_w": nrm((patch_dim, DIM)).astype(jnp.bfloat16),
        "conv_b": nrm((DIM,)),
        "pos_embedding": jax.random.normal(next(kit), (1, num_patches + 1, DIM),
                                           jnp.float32),
        "cls_token": jax.random.normal(next(kit), (1, 1, DIM), jnp.float32),
        # per-layer weights stacked over DEPTH (the fused kernel indexes [l]).
        "ln1_g": jnp.ones((DEPTH, 1, DIM), jnp.float32),
        "ln1_b": jnp.zeros((DEPTH, 1, DIM), jnp.float32),
        "wqkv": wqkv.astype(jnp.bfloat16),                       # bias-free q/k/v
        "wo": nrm((DEPTH, HEADS, DIM_HEAD, DIM)).astype(jnp.bfloat16),
        "bo": jnp.zeros((DEPTH, 1, DIM), jnp.float32),
        "ln2_g": jnp.ones((DEPTH, 1, DIM), jnp.float32),
        "ln2_b": jnp.zeros((DEPTH, 1, DIM), jnp.float32),
        "w1": nrm((DEPTH, DIM, FF_DIM)).astype(jnp.bfloat16),
        "b1": jnp.zeros((DEPTH, 1, FF_DIM), jnp.float32),
        "w2": nrm((DEPTH, FF_DIM, DIM)).astype(jnp.bfloat16),
        "b2": jnp.zeros((DEPTH, 1, DIM), jnp.float32),
        "norm_g": jnp.ones((1, DIM), jnp.float32),
        "norm_b": jnp.zeros((1, DIM), jnp.float32),
    }


# ---------------- forward ----------------
def vit_forward(img, params):
    # layout: img is NCHW (B, C, H, W), same as the PyTorch module.
    B, C, H, W = img.shape
    p = PATCH
    h, w = H // p, W // p
    n = h * w
    seq = n + 1
    patch_dim = C * p * p

    # Conv2d(kernel=stride=p) == patch extraction + matmul; the matmul happens
    # inside the fused kernel, this is pure layout glue. The zero row in each
    # cls slot lets one folded (B*seq, patch_dim) matmul cover every row; this
    # padded tensor IS the kernel input (no extra HBM copy beyond input
    # materialization).
    patches = (img.reshape(B, C, h, p, w, p)
                  .transpose(0, 2, 4, 1, 3, 5)
                  .reshape(B, n, patch_dim))
    patches = jnp.pad(patches, ((0, 0), (1, 0), (0, 0)))           # (B, seq, pd)
    patches = patches.reshape(B * seq, patch_dim).astype(jnp.bfloat16)

    # positional-embedding index selection (images smaller than max size),
    # folded with the cls token and the Conv2d bias into one additive per-row
    # base. emb_dropout = 0.0 (eval mode) -> identity.
    rows_idx = jnp.repeat(jnp.arange(h) * (MAX_WIDTH // p - w), w) + jnp.arange(n)
    pos_ind = jnp.concatenate(
        [jnp.zeros((1,), jnp.int32), rows_idx.astype(jnp.int32) + 1])
    pos = params["pos_embedding"][0, pos_ind]                      # (seq, DIM)
    base = jnp.concatenate(
        [pos[0:1] + params["cls_token"][0],
         pos[1:] + params["conv_b"][None, :]], axis=0)             # (seq, DIM)
    base = jnp.tile(base, (B, 1))                                  # (B*seq, DIM)

    # Batch folded into matmul rows: one grid step processes the whole batch as
    # a (B*seq, .) row block. Cross-batch attention is removed with an additive
    # block-diagonal bias (exact: masked probabilities underflow to 0).
    # TODO(synk): for large B, tile batch into BT-sized row blocks (BT*seq a
    # multiple of 8) on a "parallel" grid axis for megacore sharding; at real
    # pix2tex sizes (DIM=256, seq~1024, depth>=4) add a flash-style kv grid
    # axis with m/l/acc scratch instead of a dense (rows, rows) score matrix.
    rows = B * seq
    bid = jnp.arange(rows, dtype=jnp.int32) // seq
    attn_bias = jnp.where(bid[:, None] == bid[None, :],
                          jnp.float32(0.0), jnp.float32(-1e9))     # (rows, rows)

    kernel = functools.partial(_vit_kernel, depth=DEPTH, heads=HEADS)

    def full_spec(a):
        nd = a.ndim
        return pl.BlockSpec(a.shape, lambda i, _nd=nd: (0,) * _nd)

    const_inputs = [
        attn_bias, params["conv_w"],
        params["ln1_g"], params["ln1_b"], params["wqkv"], params["wo"],
        params["bo"], params["ln2_g"], params["ln2_b"],
        params["w1"], params["b1"], params["w2"], params["b2"],
        params["norm_g"], params["norm_b"],
    ]
    # TODO(synk): these specs are grid-invariant; at real sizes single-buffer
    # them (pipeline_mode=pl.Buffered(1)) or stage once into VMEM scratch.
    in_specs = ([pl.BlockSpec((rows, patch_dim), lambda i: (i, 0)),
                 pl.BlockSpec((rows, DIM), lambda i: (i, 0))]
                + [full_spec(a) for a in const_inputs])

    out = pl.pallas_call(
        kernel,
        out_shape=jax.ShapeDtypeStruct((B * seq, DIM), jnp.float32),
        grid=(1,),
        in_specs=in_specs,
        out_specs=pl.BlockSpec((rows, DIM), lambda i: (i, 0)),
        compiler_params=pltpu.CompilerParams(
            dimension_semantics=("parallel",),
            vmem_limit_bytes=32 * 1024 * 1024),
    )(patches, base, *const_inputs)

    # TODO(synk): DIM=32 keeps the final store lane-masked; at real sizes pack
    # batch elements along the lane axis (or use DIM>=128) for unmasked vst.
    return out.reshape(B, seq, DIM)


if __name__ == "__main__":
    key = jax.random.PRNGKey(0)
    pkey, ikey = jax.random.split(key)
    params = init_params(pkey)

    # small input, smaller than (MAX_HEIGHT, MAX_WIDTH) to exercise pos-index logic
    img = jax.random.normal(ikey, (2, CHANNELS, 16, 16), jnp.float32)

    out = jax.jit(vit_forward)(img, params)
    out = jax.block_until_ready(out)

    expected_seq = (16 // PATCH) * (16 // PATCH) + 1
    assert out.shape == (2, expected_seq, DIM), out.shape
    assert jnp.all(jnp.isfinite(out))
    print("KERNEL_OK")
</pallas_src>

<mosaic_0001>
module attributes {stable_mosaic.version = 11 : i64} {
  func.func @_vit_kernel(%arg0: i32, %arg1: memref<10x64xbf16, #tpu.memory_space<vmem>>, %arg2: memref<10x32xf32, #tpu.memory_space<vmem>>, %arg3: memref<10x10xf32, #tpu.memory_space<vmem>>, %arg4: memref<64x32xbf16, #tpu.memory_space<vmem>>, %arg5: memref<2x1x32xf32, #tpu.memory_space<vmem>>, %arg6: memref<2x1x32xf32, #tpu.memory_space<vmem>>, %arg7: memref<2x12x32x8xbf16, #tpu.memory_space<vmem>>, %arg8: memref<2x4x8x32xbf16, #tpu.memory_space<vmem>>, %arg9: memref<2x1x32xf32, #tpu.memory_space<vmem>>, %arg10: memref<2x1x32xf32, #tpu.memory_space<vmem>>, %arg11: memref<2x1x32xf32, #tpu.memory_space<vmem>>, %arg12: memref<2x32x128xbf16, #tpu.memory_space<vmem>>, %arg13: memref<2x1x128xf32, #tpu.memory_space<vmem>>, %arg14: memref<2x128x32xbf16, #tpu.memory_space<vmem>>, %arg15: memref<2x1x32xf32, #tpu.memory_space<vmem>>, %arg16: memref<1x32xf32, #tpu.memory_space<vmem>>, %arg17: memref<1x32xf32, #tpu.memory_space<vmem>>, %arg18: memref<10x32xf32, #tpu.memory_space<vmem>>) attributes {dimension_semantics = [#tpu.dimension_semantics<parallel>], iteration_bounds = array<i64: 1>, scalar_prefetch = 0 : i64, scratch_operands = 0 : i64, tpu.core_type = #tpu.core_type<tc>, window_params = [{transform_indices = @transform_0, window_bounds = array<i64: 10, 64>}, {transform_indices = @transform_1, window_bounds = array<i64: 10, 32>}, {pipeline_mode = #tpu.pipeline_mode<synchronous>, transform_indices = @transform_2, window_bounds = array<i64: 10, 10>}, {pipeline_mode = #tpu.pipeline_mode<synchronous>, transform_indices = @transform_3, window_bounds = array<i64: 64, 32>}, {pipeline_mode = #tpu.pipeline_mode<synchronous>, transform_indices = @transform_4, window_bounds = array<i64: 2, 1, 32>}, {pipeline_mode = #tpu.pipeline_mode<synchronous>, transform_indices = @transform_5, window_bounds = array<i64: 2, 1, 32>}, {pipeline_mode = #tpu.pipeline_mode<synchronous>, transform_indices = @transform_6, window_bounds = array<i64: 2, 12, 32, 8>}, {pipeline_mode = #tpu.pipeline_mode<synchronous>, transform_indices = @transform_7, window_bounds = array<i64: 2, 4, 8, 32>}, {pipeline_mode = #tpu.pipeline_mode<synchronous>, transform_indices = @transform_8, window_bounds = array<i64: 2, 1, 32>}, {pipeline_mode = #tpu.pipeline_mode<synchronous>, transform_indices = @transform_9, window_bounds = array<i64: 2, 1, 32>}, {pipeline_mode = #tpu.pipeline_mode<synchronous>, transform_indices = @transform_10, window_bounds = array<i64: 2, 1, 32>}, {pipeline_mode = #tpu.pipeline_mode<synchronous>, transform_indices = @transform_11, window_bounds = array<i64: 2, 32, 128>}, {pipeline_mode = #tpu.pipeline_mode<synchronous>, transform_indices = @transform_12, window_bounds = array<i64: 2, 1, 128>}, {pipeline_mode = #tpu.pipeline_mode<synchronous>, transform_indices = @transform_13, window_bounds = array<i64: 2, 128, 32>}, {pipeline_mode = #tpu.pipeline_mode<synchronous>, transform_indices = @transform_14, window_bounds = array<i64: 2, 1, 32>}, {pipeline_mode = #tpu.pipeline_mode<synchronous>, transform_indices = @transform_15, window_bounds = array<i64: 1, 32>}, {pipeline_mode = #tpu.pipeline_mode<synchronous>, transform_indices = @transform_16, window_bounds = array<i64: 1, 32>}, {transform_indices = @transform_17, window_bounds = array<i64: 10, 32>}]} {
    %c0 = arith.constant 0 : index
    %c0_0 = arith.constant 0 : index
    %0 = vector.load %arg2[%c0, %c0_0] : memref<10x32xf32, #tpu.memory_space<vmem>>, vector<10x32xf32>
    %c0_1 = arith.constant 0 : index
    %c0_2 = arith.constant 0 : index
    %1 = vector.load %arg1[%c0_1, %c0_2] : memref<10x64xbf16, #tpu.memory_space<vmem>>, vector<10x64xbf16>
    %c0_3 = arith.constant 0 : index
    %c0_4 = arith.constant 0 : index
    %2 = vector.load %arg4[%c0_3, %c0_4] : memref<64x32xbf16, #tpu.memory_space<vmem>>, vector<64x32xbf16>
    %cst = arith.constant dense<0.000000e+00> : vector<10x32xf32>
    %3 = tpu.matmul %1, %2, %cst {dimension_numbers = #tpu.dot_dimension_numbers<[1], [0], [0], [1], [0, 0, 1, 1], [], []>} : vector<10x64xbf16>, vector<64x32xbf16>, vector<10x32xf32> -> vector<10x32xf32>
    %4 = arith.addf %0, %3 : vector<10x32xf32>
    %c0_5 = arith.constant 0 : index
    %c0_6 = arith.constant 0 : index
    %5 = vector.load %arg3[%c0_5, %c0_6] : memref<10x10xf32, #tpu.memory_space<vmem>>, vector<10x10xf32>
    %6 = vector.shape_cast %5 : vector<10x10xf32> to vector<1x10x10xf32>
    %c0_7 = arith.constant 0 : index
    %c0_8 = arith.constant 0 : index
    %c0_9 = arith.constant 0 : index
    %7 = vector.load %arg5[%c0_7, %c0_8, %c0_9] : memref<2x1x32xf32, #tpu.memory_space<vmem>>, vector<1x1x32xf32>
    %8 = vector.shape_cast %7 : vector<1x1x32xf32> to vector<1x32xf32>
    %c0_10 = arith.constant 0 : index
    %c0_11 = arith.constant 0 : index
    %c0_12 = arith.constant 0 : index
    %9 = vector.load %arg6[%c0_10, %c0_11, %c0_12] : memref<2x1x32xf32, #tpu.memory_space<vmem>>, vector<1x1x32xf32>
    %10 = vector.shape_cast %9 : vector<1x1x32xf32> to vector<1x32xf32>
    %cst_13 = arith.constant dense<0.000000e+00> : vector<10xf32>
    %11 = vector.multi_reduction <add>, %4, %cst_13 [1] : vector<10x32xf32> to vector<10xf32>
    %12 = vector.shape_cast %11 : vector<10xf32> to vector<10x1xf32>
    %cst_14 = arith.constant 3.200000e+01 : f32
    %13 = vector.broadcast %cst_14 : f32 to vector<10x1xf32>
    %14 = arith.divf %12, %13 : vector<10x1xf32>
    %15 = vector.broadcast %14 : vector<10x1xf32> to vector<10x32xf32>
    %16 = arith.subf %4, %15 : vector<10x32xf32>
    %17 = arith.mulf %16, %16 : vector<10x32xf32>
    %cst_15 = arith.constant dense<0.000000e+00> : vector<10xf32>
    %18 = vector.multi_reduction <add>, %17, %cst_15 [1] : vector<10x32xf32> to vector<10xf32>
    %19 = vector.shape_cast %18 : vector<10xf32> to vector<10x1xf32>
    %cst_16 = arith.constant 3.200000e+01 : f32
    %20 = vector.broadcast %cst_16 : f32 to vector<10x1xf32>
    %21 = arith.divf %19, %20 : vector<10x1xf32>
    %22 = vector.broadcast %14 : vector<10x1xf32> to vector<10x32xf32>
    %23 = arith.subf %4, %22 : vector<10x32xf32>
    %cst_17 = arith.constant 9.99999974E-6 : f32
    %24 = vector.broadcast %cst_17 : f32 to vector<10x1xf32>
    %25 = arith.addf %21, %24 : vector<10x1xf32>
    %26 = math.rsqrt %25 : vector<10x1xf32>
    %27 = vector.broadcast %26 : vector<10x1xf32> to vector<10x32xf32>
    %28 = arith.mulf %23, %27 : vector<10x32xf32>
    %29 = vector.broadcast %8 : vector<1x32xf32> to vector<10x32xf32>
    %30 = arith.mulf %28, %29 : vector<10x32xf32>
    %31 = vector.broadcast %10 : vector<1x32xf32> to vector<10x32xf32>
    %32 = arith.addf %30, %31 : vector<10x32xf32>
    %33 = arith.truncf %32 : vector<10x32xf32> to vector<10x32xbf16>
    %34 = vector.shape_cast %33 : vector<10x32xbf16> to vector<1x10x32xbf16>
    %35 = vector.shape_cast %34 : vector<1x10x32xbf16> to vector<1x10x32xbf16>
    %36 = vector.broadcast %35 : vector<1x10x32xbf16> to vector<12x10x32xbf16>
    %c0_18 = arith.constant 0 : index
    %c0_19 = arith.constant 0 : index
    %c0_20 = arith.constant 0 : index
    %c0_21 = arith.constant 0 : index
    %37 = vector.load %arg7[%c0_18, %c0_19, %c0_20, %c0_21] : memref<2x12x32x8xbf16, #tpu.memory_space<vmem>>, vector<1x12x32x8xbf16>
    %38 = vector.shape_cast %37 : vector<1x12x32x8xbf16> to vector<12x32x8xbf16>
    %cst_22 = arith.constant dense<0.000000e+00> : vector<12x10x8xf32>
    %39 = tpu.matmul %36, %38, %cst_22 {dimension_numbers = #tpu.dot_dimension_numbers<[2], [1], [1], [2], [0, 0, 0, 1, 1, 2], [0], [0]>} : vector<12x10x32xbf16>, vector<12x32x8xbf16>, vector<12x10x8xf32> -> vector<12x10x8xf32>
    %40 = vector.extract_strided_slice %39 {offsets = [0, 0, 0], sizes = [4, 10, 8], strides = [1, 1, 1]} : vector<12x10x8xf32> to vector<4x10x8xf32>
    %41 = arith.truncf %40 : vector<4x10x8xf32> to vector<4x10x8xbf16>
    %42 = vector.extract_strided_slice %39 {offsets = [4, 0, 0], sizes = [4, 10, 8], strides = [1, 1, 1]} : vector<12x10x8xf32> to vector<4x10x8xf32>
    %43 = arith.truncf %42 : vector<4x10x8xf32> to vector<4x10x8xbf16>
    %44 = vector.extract_strided_slice %39 {offsets = [8, 0, 0], sizes = [4, 10, 8], strides = [1, 1, 1]} : vector<12x10x8xf32> to vector<4x10x8xf32>
    %45 = arith.truncf %44 : vector<4x10x8xf32> to vector<4x10x8xbf16>
    %cst_23 = arith.constant dense<0.000000e+00> : vector<4x10x10xf32>
    %46 = tpu.matmul %41, %43, %cst_23 {dimension_numbers = #tpu.dot_dimension_numbers<[2], [2], [1], [1], [0, 0, 0, 1, 1, 1], [0], [0]>} : vector<4x10x8xbf16>, vector<4x10x8xbf16>, vector<4x10x10xf32> -> vector<4x10x10xf32>
    %47 = vector.broadcast %6 : vector<1x10x10xf32> to vector<4x10x10xf32>
    %48 = arith.addf %46, %47 : vector<4x10x10xf32>
    %cst_24 = arith.constant dense<0xFF800000> : vector<4x10xf32>
    %49 = vector.multi_reduction <maximumf>, %48, %cst_24 [2] : vector<4x10x10xf32> to vector<4x10xf32>
    %50 = vector.shape_cast %49 : vector<4x10xf32> to vector<4x10x1xf32>
    %51 = vector.broadcast %50 : vector<4x10x1xf32> to vector<4x10x10xf32>
    %52 = arith.subf %48, %51 : vector<4x10x10xf32>
    %53 = math.exp %52 : vector<4x10x10xf32>
    %cst_25 = arith.constant dense<0.000000e+00> : vector<4x10xf32>
    %54 = vector.multi_reduction <add>, %53, %cst_25 [2] : vector<4x10x10xf32> to vector<4x10xf32>
    %55 = vector.shape_cast %54 : vector<4x10xf32> to vector<4x10x1xf32>
    %56 = tpu.reciprocal %55 {approx = true} : vector<4x10x1xf32> -> vector<4x10x1xf32>
    %57 = vector.broadcast %56 : vector<4x10x1xf32> to vector<4x10x10xf32>
    %58 = arith.mulf %53, %57 : vector<4x10x10xf32>
    %59 = arith.truncf %58 : vector<4x10x10xf32> to vector<4x10x10xbf16>
    %cst_26 = arith.constant dense<0.000000e+00> : vector<4x10x8xf32>
    %60 = tpu.matmul %59, %45, %cst_26 {dimension_numbers = #tpu.dot_dimension_numbers<[2], [1], [1], [2], [0, 0, 0, 1, 1, 2], [0], [0]>} : vector<4x10x10xbf16>, vector<4x10x8xbf16>, vector<4x10x8xf32> -> vector<4x10x8xf32>
    %61 = arith.truncf %60 : vector<4x10x8xf32> to vector<4x10x8xbf16>
    %c0_27 = arith.constant 0 : index
    %c0_28 = arith.constant 0 : index
    %c0_29 = arith.constant 0 : index
    %c0_30 = arith.constant 0 : index
    %62 = vector.load %arg8[%c0_27, %c0_28, %c0_29, %c0_30] : memref<2x4x8x32xbf16, #tpu.memory_space<vmem>>, vector<1x4x8x32xbf16>
    %63 = vector.shape_cast %62 : vector<1x4x8x32xbf16> to vector<4x8x32xbf16>
    %cst_31 = arith.constant dense<0.000000e+00> : vector<4x10x32xf32>
    %64 = tpu.matmul %61, %63, %cst_31 {dimension_numbers = #tpu.dot_dimension_numbers<[2], [1], [1], [2], [0, 0, 0, 1, 1, 2], [0], [0]>} : vector<4x10x8xbf16>, vector<4x8x32xbf16>, vector<4x10x32xf32> -> vector<4x10x32xf32>
    %65 = vector.extract_strided_slice %64 {offsets = [0, 0, 0], sizes = [1, 10, 32], strides = [1, 1, 1]} : vector<4x10x32xf32> to vector<1x10x32xf32>
    %66 = vector.shape_cast %65 : vector<1x10x32xf32> to vector<10x32xf32>
    %67 = vector.extract_strided_slice %64 {offsets = [1, 0, 0], sizes = [1, 10, 32], strides = [1, 1, 1]} : vector<4x10x32xf32> to vector<1x10x32xf32>
    %68 = vector.shape_cast %67 : vector<1x10x32xf32> to vector<10x32xf32>
    %69 = arith.addf %66, %68 : vector<10x32xf32>
    %70 = vector.extract_strided_slice %64 {offsets = [2, 0, 0], sizes = [1, 10, 32], strides = [1, 1, 1]} : vector<4x10x32xf32> to vector<1x10x32xf32>
    %71 = vector.shape_cast %70 : vector<1x10x32xf32> to vector<10x32xf32>
    %72 = arith.addf %69, %71 : vector<10x32xf32>
    %73 = vector.extract_strided_slice %64 {offsets = [3, 0, 0], sizes = [1, 10, 32], strides = [1, 1, 1]} : vector<4x10x32xf32> to vector<1x10x32xf32>
    %74 = vector.shape_cast %73 : vector<1x10x32xf32> to vector<10x32xf32>
    %75 = arith.addf %72, %74 : vector<10x32xf32>
    %76 = arith.addf %4, %75 : vector<10x32xf32>
    %c0_32 = arith.constant 0 : index
    %c0_33 = arith.constant 0 : index
    %c0_34 = arith.constant 0 : index
    %77 = vector.load %arg9[%c0_32, %c0_33, %c0_34] : memref<2x1x32xf32, #tpu.memory_space<vmem>>, vector<1x1x32xf32>
    %78 = vector.shape_cast %77 : vector<1x1x32xf32> to vector<1x32xf32>
    %79 = vector.broadcast %78 : vector<1x32xf32> to vector<10x32xf32>
    %80 = arith.addf %76, %79 : vector<10x32xf32>
    %c0_35 = arith.constant 0 : index
    %c0_36 = arith.constant 0 : index
    %c0_37 = arith.constant 0 : index
    %81 = vector.load %arg10[%c0_35, %c0_36, %c0_37] : memref<2x1x32xf32, #tpu.memory_space<vmem>>, vector<1x1x32xf32>
    %82 = vector.shape_cast %81 : vector<1x1x32xf32> to vector<1x32xf32>
    %c0_38 = arith.constant 0 : index
    %c0_39 = arith.constant 0 : index
    %c0_40 = arith.constant 0 : index
    %83 = vector.load %arg11[%c0_38, %c0_39, %c0_40] : memref<2x1x32xf32, #tpu.memory_space<vmem>>, vector<1x1x32xf32>
    %84 = vector.shape_cast %83 : vector<1x1x32xf32> to vector<1x32xf32>
    %cst_41 = arith.constant dense<0.000000e+00> : vector<10xf32>
    %85 = vector.multi_reduction <add>, %80, %cst_41 [1] : vector<10x32xf32> to vector<10xf32>
    %86 = vector.shape_cast %85 : vector<10xf32> to vector<10x1xf32>
    %cst_42 = arith.constant 3.200000e+01 : f32
    %87 = vector.broadcast %cst_42 : f32 to vector<10x1xf32>
    %88 = arith.divf %86, %87 : vector<10x1xf32>
    %89 = vector.broadcast %88 : vector<10x1xf32> to vector<10x32xf32>
    %90 = arith.subf %80, %89 : vector<10x32xf32>
    %91 = arith.mulf %90, %90 : vector<10x32xf32>
    %cst_43 = arith.constant dense<0.000000e+00> : vector<10xf32>
    %92 = vector.multi_reduction <add>, %91, %cst_43 [1] : vector<10x32xf32> to vector<10xf32>
    %93 = vector.shape_cast %92 : vector<10xf32> to vector<10x1xf32>
    %cst_44 = arith.constant 3.200000e+01 : f32
    %94 = vector.broadcast %cst_44 : f32 to vector<10x1xf32>
    %95 = arith.divf %93, %94 : vector<10x1xf32>
    %96 = vector.broadcast %88 : vector<10x1xf32> to vector<10x32xf32>
    %97 = arith.subf %80, %96 : vector<10x32xf32>
    %cst_45 = arith.constant 9.99999974E-6 : f32
    %98 = vector.broadcast %cst_45 : f32 to vector<10x1xf32>
    %99 = arith.addf %95, %98 : vector<10x1xf32>
    %100 = math.rsqrt %99 : vector<10x1xf32>
    %101 = vector.broadcast %100 : vector<10x1xf32> to vector<10x32xf32>
    %102 = arith.mulf %97, %101 : vector<10x32xf32>
    %103 = vector.broadcast %82 : vector<1x32xf32> to vector<10x32xf32>
    %104 = arith.mulf %102, %103 : vector<10x32xf32>
    %105 = vector.broadcast %84 : vector<1x32xf32> to vector<10x32xf32>
    %106 = arith.addf %104, %105 : vector<10x32xf32>
    %107 = arith.truncf %106 : vector<10x32xf32> to vector<10x32xbf16>
    %c0_46 = arith.constant 0 : index
    %c0_47 = arith.constant 0 : index
    %c0_48 = arith.constant 0 : index
    %108 = vector.load %arg12[%c0_46, %c0_47, %c0_48] : memref<2x32x128xbf16, #tpu.memory_space<vmem>>, vector<1x32x128xbf16>
    %109 = vector.shape_cast %108 : vector<1x32x128xbf16> to vector<32x128xbf16>
    %cst_49 = arith.constant dense<0.000000e+00> : vector<10x128xf32>
    %110 = tpu.matmul %107, %109, %cst_49 {dimension_numbers = #tpu.dot_dimension_numbers<[1], [0], [0], [1], [0, 0, 1, 1], [], []>} : vector<10x32xbf16>, vector<32x128xbf16>, vector<10x128xf32> -> vector<10x128xf32>
    %c0_50 = arith.constant 0 : index
    %c0_51 = arith.constant 0 : index
    %c0_52 = arith.constant 0 : index
    %111 = vector.load %arg13[%c0_50, %c0_51, %c0_52] : memref<2x1x128xf32, #tpu.memory_space<vmem>>, vector<1x1x128xf32>
    %112 = vector.shape_cast %111 : vector<1x1x128xf32> to vector<1x128xf32>
    %113 = vector.broadcast %112 : vector<1x128xf32> to vector<10x128xf32>
    %114 = arith.addf %110, %113 : vector<10x128xf32>
    %115 = arith.mulf %114, %114 : vector<10x128xf32>
    %116 = arith.mulf %114, %115 : vector<10x128xf32>
    %cst_53 = arith.constant 4.471500e-02 : f32
    %117 = vector.broadcast %cst_53 : f32 to vector<10x128xf32>
    %118 = arith.mulf %117, %116 : vector<10x128xf32>
    %119 = arith.addf %114, %118 : vector<10x128xf32>
    %cst_54 = arith.constant 0.797884583 : f32
    %120 = vector.broadcast %cst_54 : f32 to vector<10x128xf32>
    %121 = arith.mulf %120, %119 : vector<10x128xf32>
    %122 = math.tanh %121 : vector<10x128xf32>
    %cst_55 = arith.constant 1.000000e+00 : f32
    %123 = vector.broadcast %cst_55 : f32 to vector<10x128xf32>
    %124 = arith.addf %123, %122 : vector<10x128xf32>
    %cst_56 = arith.constant 5.000000e-01 : f32
    %125 = vector.broadcast %cst_56 : f32 to vector<10x128xf32>
    %126 = arith.mulf %125, %124 : vector<10x128xf32>
    %127 = arith.mulf %114, %126 : vector<10x128xf32>
    %128 = arith.truncf %127 : vector<10x128xf32> to vector<10x128xbf16>
    %c0_57 = arith.constant 0 : index
    %c0_58 = arith.constant 0 : index
    %c0_59 = arith.constant 0 : index
    %129 = vector.load %arg14[%c0_57, %c0_58, %c0_59] : memref<2x128x32xbf16, #tpu.memory_space<vmem>>, vector<1x128x32xbf16>
    %130 = vector.shape_cast %129 : vector<1x128x32xbf16> to vector<128x32xbf16>
    %cst_60 = arith.constant dense<0.000000e+00> : vector<10x32xf32>
    %131 = tpu.matmul %128, %130, %cst_60 {dimension_numbers = #tpu.dot_dimension_numbers<[1], [0], [0], [1], [0, 0, 1, 1], [], []>} : vector<10x128xbf16>, vector<128x32xbf16>, vector<10x32xf32> -> vector<10x32xf32>
    %132 = arith.addf %80, %131 : vector<10x32xf32>
    %c0_61 = arith.constant 0 : index
    %c0_62 = arith.constant 0 : index
    %c0_63 = arith.constant 0 : index
    %133 = vector.load %arg15[%c0_61, %c0_62, %c0_63] : memref<2x1x32xf32, #tpu.memory_space<vmem>>, vector<1x1x32xf32>
    %134 = vector.shape_cast %133 : vector<1x1x32xf32> to vector<1x32xf32>
    %135 = vector.broadcast %134 : vector<1x32xf32> to vector<10x32xf32>
    %136 = arith.addf %132, %135 : vector<10x32xf32>
    %c1 = arith.constant 1 : index
    %c0_64 = arith.constant 0 : index
    %c0_65 = arith.constant 0 : index
    %137 = vector.load %arg5[%c1, %c0_64, %c0_65] : memref<2x1x32xf32, #tpu.memory_space<vmem>>, vector<1x1x32xf32>
    %138 = vector.shape_cast %137 : vector<1x1x32xf32> to vector<1x32xf32>
    %c1_66 = arith.constant 1 : index
    %c0_67 = arith.constant 0 : index
    %c0_68 = arith.constant 0 : index
    %139 = vector.load %arg6[%c1_66, %c0_67, %c0_68] : memref<2x1x32xf32, #tpu.memory_space<vmem>>, vector<1x1x32xf32>
    %140 = vector.shape_cast %139 : vector<1x1x32xf32> to vector<1x32xf32>
    %cst_69 = arith.constant dense<0.000000e+00> : vector<10xf32>
    %141 = vector.multi_reduction <add>, %136, %cst_69 [1] : vector<10x32xf32> to vector<10xf32>
    %142 = vector.shape_cast %141 : vector<10xf32> to vector<10x1xf32>
    %cst_70 = arith.constant 3.200000e+01 : f32
    %143 = vector.broadcast %cst_70 : f32 to vector<10x1xf32>
    %144 = arith.divf %142, %143 : vector<10x1xf32>
    %145 = vector.broadcast %144 : vector<10x1xf32> to vector<10x32xf32>
    %146 = arith.subf %136, %145 : vector<10x32xf32>
    %147 = arith.mulf %146, %146 : vector<10x32xf32>
    %cst_71 = arith.constant dense<0.000000e+00> : vector<10xf32>
    %148 = vector.multi_reduction <add>, %147, %cst_71 [1] : vector<10x32xf32> to vector<10xf32>
    %149 = vector.shape_cast %148 : vector<10xf32> to vector<10x1xf32>
    %cst_72 = arith.constant 3.200000e+01 : f32
    %150 = vector.broadcast %cst_72 : f32 to vector<10x1xf32>
    %151 = arith.divf %149, %150 : vector<10x1xf32>
    %152 = vector.broadcast %144 : vector<10x1xf32> to vector<10x32xf32>
    %153 = arith.subf %136, %152 : vector<10x32xf32>
    %cst_73 = arith.constant 9.99999974E-6 : f32
    %154 = vector.broadcast %cst_73 : f32 to vector<10x1xf32>
    %155 = arith.addf %151, %154 : vector<10x1xf32>
    %156 = math.rsqrt %155 : vector<10x1xf32>
    %157 = vector.broadcast %156 : vector<10x1xf32> to vector<10x32xf32>
    %158 = arith.mulf %153, %157 : vector<10x32xf32>
    %159 = vector.broadcast %138 : vector<1x32xf32> to vector<10x32xf32>
    %160 = arith.mulf %158, %159 : vector<10x32xf32>
    %161 = vector.broadcast %140 : vector<1x32xf32> to vector<10x32xf32>
    %162 = arith.addf %160, %161 : vector<10x32xf32>
    %163 = arith.truncf %162 : vector<10x32xf32> to vector<10x32xbf16>
    %164 = vector.shape_cast %163 : vector<10x32xbf16> to vector<1x10x32xbf16>
    %165 = vector.shape_cast %164 : vector<1x10x32xbf16> to vector<1x10x32xbf16>
    %166 = vector.broadcast %165 : vector<1x10x32xbf16> to vector<12x10x32xbf16>
    %c1_74 = arith.constant 1 : index
    %c0_75 = arith.constant 0 : index
    %c0_76 = arith.constant 0 : index
    %c0_77 = arith.constant 0 : index
    %167 = vector.load %arg7[%c1_74, %c0_75, %c0_76, %c0_77] : memref<2x12x32x8xbf16, #tpu.memory_space<vmem>>, vector<1x12x32x8xbf16>
    %168 = vector.shape_cast %167 : vector<1x12x32x8xbf16> to vector<12x32x8xbf16>
    %cst_78 = arith.constant dense<0.000000e+00> : vector<12x10x8xf32>
    %169 = tpu.matmul %166, %168, %cst_78 {dimension_numbers = #tpu.dot_dimension_numbers<[2], [1], [1], [2], [0, 0, 0, 1, 1, 2], [0], [0]>} : vector<12x10x32xbf16>, vector<12x32x8xbf16>, vector<12x10x8xf32> -> vector<12x10x8xf32>
    %170 = vector.extract_strided_slice %169 {offsets = [0, 0, 0], sizes = [4, 10, 8], strides = [1, 1, 1]} : vector<12x10x8xf32> to vector<4x10x8xf32>
    %171 = arith.truncf %170 : vector<4x10x8xf32> to vector<4x10x8xbf16>
    %172 = vector.extract_strided_slice %169 {offsets = [4, 0, 0], sizes = [4, 10, 8], strides = [1, 1, 1]} : vector<12x10x8xf32> to vector<4x10x8xf32>
    %173 = arith.truncf %172 : vector<4x10x8xf32> to vector<4x10x8xbf16>
    %174 = vector.extract_strided_slice %169 {offsets = [8, 0, 0], sizes = [4, 10, 8], strides = [1, 1, 1]} : vector<12x10x8xf32> to vector<4x10x8xf32>
    %175 = arith.truncf %174 : vector<4x10x8xf32> to vector<4x10x8xbf16>
    %cst_79 = arith.constant dense<0.000000e+00> : vector<4x10x10xf32>
    %176 = tpu.matmul %171, %173, %cst_79 {dimension_numbers = #tpu.dot_dimension_numbers<[2], [2], [1], [1], [0, 0, 0, 1, 1, 1], [0], [0]>} : vector<4x10x8xbf16>, vector<4x10x8xbf16>, vector<4x10x10xf32> -> vector<4x10x10xf32>
    %177 = vector.broadcast %6 : vector<1x10x10xf32> to vector<4x10x10xf32>
    %178 = arith.addf %176, %177 : vector<4x10x10xf32>
    %cst_80 = arith.constant dense<0xFF800000> : vector<4x10xf32>
    %179 = vector.multi_reduction <maximumf>, %178, %cst_80 [2] : vector<4x10x10xf32> to vector<4x10xf32>
    %180 = vector.shape_cast %179 : vector<4x10xf32> to vector<4x10x1xf32>
    %181 = vector.broadcast %180 : vector<4x10x1xf32> to vector<4x10x10xf32>
    %182 = arith.subf %178, %181 : vector<4x10x10xf32>
    %183 = math.exp %182 : vector<4x10x10xf32>
    %cst_81 = arith.constant dense<0.000000e+00> : vector<4x10xf32>
    %184 = vector.multi_reduction <add>, %183, %cst_81 [2] : vector<4x10x10xf32> to vector<4x10xf32>
    %185 = vector.shape_cast %184 : vector<4x10xf32> to vector<4x10x1xf32>
    %186 = tpu.reciprocal %185 {approx = true} : vector<4x10x1xf32> -> vector<4x10x1xf32>
    %187 = vector.broadcast %186 : vector<4x10x1xf32> to vector<4x10x10xf32>
    %188 = arith.mulf %183, %187 : vector<4x10x10xf32>
    %189 = arith.truncf %188 : vector<4x10x10xf32> to vector<4x10x10xbf16>
    %cst_82 = arith.constant dense<0.000000e+00> : vector<4x10x8xf32>
    %190 = tpu.matmul %189, %175, %cst_82 {dimension_numbers = #tpu.dot_dimension_numbers<[2], [1], [1], [2], [0, 0, 0, 1, 1, 2], [0], [0]>} : vector<4x10x10xbf16>, vector<4x10x8xbf16>, vector<4x10x8xf32> -> vector<4x10x8xf32>
    %191 = arith.truncf %190 : vector<4x10x8xf32> to vector<4x10x8xbf16>
    %c1_83 = arith.constant 1 : index
    %c0_84 = arith.constant 0 : index
    %c0_85 = arith.constant 0 : index
    %c0_86 = arith.constant 0 : index
    %192 = vector.load %arg8[%c1_83, %c0_84, %c0_85, %c0_86] : memref<2x4x8x32xbf16, #tpu.memory_space<vmem>>, vector<1x4x8x32xbf16>
    %193 = vector.shape_cast %192 : vector<1x4x8x32xbf16> to vector<4x8x32xbf16>
    %cst_87 = arith.constant dense<0.000000e+00> : vector<4x10x32xf32>
    %194 = tpu.matmul %191, %193, %cst_87 {dimension_numbers = #tpu.dot_dimension_numbers<[2], [1], [1], [2], [0, 0, 0, 1, 1, 2], [0], [0]>} : vector<4x10x8xbf16>, vector<4x8x32xbf16>, vector<4x10x32xf32> -> vector<4x10x32xf32>
    %195 = vector.extract_strided_slice %194 {offsets = [0, 0, 0], sizes = [1, 10, 32], strides = [1, 1, 1]} : vector<4x10x32xf32> to vector<1x10x32xf32>
    %196 = vector.shape_cast %195 : vector<1x10x32xf32> to vector<10x32xf32>
    %197 = vector.extract_strided_slice %194 {offsets = [1, 0, 0], sizes = [1, 10, 32], strides = [1, 1, 1]} : vector<4x10x32xf32> to vector<1x10x32xf32>
    %198 = vector.shape_cast %197 : vector<1x10x32xf32> to vector<10x32xf32>
    %199 = arith.addf %196, %198 : vector<10x32xf32>
    %200 = vector.extract_strided_slice %194 {offsets = [2, 0, 0], sizes = [1, 10, 32], strides = [1, 1, 1]} : vector<4x10x32xf32> to vector<1x10x32xf32>
    %201 = vector.shape_cast %200 : vector<1x10x32xf32> to vector<10x32xf32>
    %202 = arith.addf %199, %201 : vector<10x32xf32>
    %203 = vector.extract_strided_slice %194 {offsets = [3, 0, 0], sizes = [1, 10, 32], strides = [1, 1, 1]} : vector<4x10x32xf32> to vector<1x10x32xf32>
    %204 = vector.shape_cast %203 : vector<1x10x32xf32> to vector<10x32xf32>
    %205 = arith.addf %202, %204 : vector<10x32xf32>
    %206 = arith.addf %136, %205 : vector<10x32xf32>
    %c1_88 = arith.constant 1 : index
    %c0_89 = arith.constant 0 : index
    %c0_90 = arith.constant 0 : index
    %207 = vector.load %arg9[%c1_88, %c0_89, %c0_90] : memref<2x1x32xf32, #tpu.memory_space<vmem>>, vector<1x1x32xf32>
    %208 = vector.shape_cast %207 : vector<1x1x32xf32> to vector<1x32xf32>
    %209 = vector.broadcast %208 : vector<1x32xf32> to vector<10x32xf32>
    %210 = arith.addf %206, %209 : vector<10x32xf32>
    %c1_91 = arith.constant 1 : index
    %c0_92 = arith.constant 0 : index
    %c0_93 = arith.constant 0 : index
    %211 = vector.load %arg10[%c1_91, %c0_92, %c0_93] : memref<2x1x32xf32, #tpu.memory_space<vmem>>, vector<1x1x32xf32>
    %212 = vector.shape_cast %211 : vector<1x1x32xf32> to vector<1x32xf32>
    %c1_94 = arith.constant 1 : index
    %c0_95 = arith.constant 0 : index
    %c0_96 = arith.constant 0 : index
    %213 = vector.load %arg11[%c1_94, %c0_95, %c0_96] : memref<2x1x32xf32, #tpu.memory_space<vmem>>, vector<1x1x32xf32>
    %214 = vector.shape_cast %213 : vector<1x1x32xf32> to vector<1x32xf32>
    %cst_97 = arith.constant dense<0.000000e+00> : vector<10xf32>
    %215 = vector.multi_reduction <add>, %210, %cst_97 [1] : vector<10x32xf32> to vector<10xf32>
    %216 = vector.shape_cast %215 : vector<10xf32> to vector<10x1xf32>
    %cst_98 = arith.constant 3.200000e+01 : f32
    %217 = vector.broadcast %cst_98 : f32 to vector<10x1xf32>
    %218 = arith.divf %216, %217 : vector<10x1xf32>
    %219 = vector.broadcast %218 : vector<10x1xf32> to vector<10x32xf32>
    %220 = arith.subf %210, %219 : vector<10x32xf32>
    %221 = arith.mulf %220, %220 : vector<10x32xf32>
    %cst_99 = arith.constant dense<0.000000e+00> : vector<10xf32>
    %222 = vector.multi_reduction <add>, %221, %cst_99 [1] : vector<10x32xf32> to vector<10xf32>
    %223 = vector.shape_cast %222 : vector<10xf32> to vector<10x1xf32>
    %cst_100 = arith.constant 3.200000e+01 : f32
    %224 = vector.broadcast %cst_100 : f32 to vector<10x1xf32>
    %225 = arith.divf %223, %224 : vector<10x1xf32>
    %226 = vector.broadcast %218 : vector<10x1xf32> to vector<10x32xf32>
    %227 = arith.subf %210, %226 : vector<10x32xf32>
    %cst_101 = arith.constant 9.99999974E-6 : f32
    %228 = vector.broadcast %cst_101 : f32 to vector<10x1xf32>
    %229 = arith.addf %225, %228 : vector<10x1xf32>
    %230 = math.rsqrt %229 : vector<10x1xf32>
    %231 = vector.broadcast %230 : vector<10x1xf32> to vector<10x32xf32>
    %232 = arith.mulf %227, %231 : vector<10x32xf32>
    %233 = vector.broadcast %212 : vector<1x32xf32> to vector<10x32xf32>
    %234 = arith.mulf %232, %233 : vector<10x32xf32>
    %235 = vector.broadcast %214 : vector<1x32xf32> to vector<10x32xf32>
    %236 = arith.addf %234, %235 : vector<10x32xf32>
    %237 = arith.truncf %236 : vector<10x32xf32> to vector<10x32xbf16>
    %c1_102 = arith.constant 1 : index
    %c0_103 = arith.constant 0 : index
    %c0_104 = arith.constant 0 : index
    %238 = vector.load %arg12[%c1_102, %c0_103, %c0_104] : memref<2x32x128xbf16, #tpu.memory_space<vmem>>, vector<1x32x128xbf16>
    %239 = vector.shape_cast %238 : vector<1x32x128xbf16> to vector<32x128xbf16>
    %cst_105 = arith.constant dense<0.000000e+00> : vector<10x128xf32>
    %240 = tpu.matmul %237, %239, %cst_105 {dimension_numbers = #tpu.dot_dimension_numbers<[1], [0], [0], [1], [0, 0, 1, 1], [], []>} : vector<10x32xbf16>, vector<32x128xbf16>, vector<10x128xf32> -> vector<10x128xf32>
    %c1_106 = arith.constant 1 : index
    %c0_107 = arith.constant 0 : index
    %c0_108 = arith.constant 0 : index
    %241 = vector.load %arg13[%c1_106, %c0_107, %c0_108] : memref<2x1x128xf32, #tpu.memory_space<vmem>>, vector<1x1x128xf32>
    %242 = vector.shape_cast %241 : vector<1x1x128xf32> to vector<1x128xf32>
    %243 = vector.broadcast %242 : vector<1x128xf32> to vector<10x128xf32>
    %244 = arith.addf %240, %243 : vector<10x128xf32>
    %245 = arith.mulf %244, %244 : vector<10x128xf32>
    %246 = arith.mulf %244, %245 : vector<10x128xf32>
    %cst_109 = arith.constant 4.471500e-02 : f32
    %247 = vector.broadcast %cst_109 : f32 to vector<10x128xf32>
    %248 = arith.mulf %247, %246 : vector<10x128xf32>
    %249 = arith.addf %244, %248 : vector<10x128xf32>
    %cst_110 = arith.constant 0.797884583 : f32
    %250 = vector.broadcast %cst_110 : f32 to vector<10x128xf32>
    %251 = arith.mulf %250, %249 : vector<10x128xf32>
    %252 = math.tanh %251 : vector<10x128xf32>
    %cst_111 = arith.constant 1.000000e+00 : f32
    %253 = vector.broadcast %cst_111 : f32 to vector<10x128xf32>
    %254 = arith.addf %253, %252 : vector<10x128xf32>
    %cst_112 = arith.constant 5.000000e-01 : f32
    %255 = vector.broadcast %cst_112 : f32 to vector<10x128xf32>
    %256 = arith.mulf %255, %254 : vector<10x128xf32>
    %257 = arith.mulf %244, %256 : vector<10x128xf32>
    %258 = arith.truncf %257 : vector<10x128xf32> to vector<10x128xbf16>
    %c1_113 = arith.constant 1 : index
    %c0_114 = arith.constant 0 : index
    %c0_115 = arith.constant 0 : index
    %259 = vector.load %arg14[%c1_113, %c0_114, %c0_115] : memref<2x128x32xbf16, #tpu.memory_space<vmem>>, vector<1x128x32xbf16>
    %260 = vector.shape_cast %259 : vector<1x128x32xbf16> to vector<128x32xbf16>
    %cst_116 = arith.constant dense<0.000000e+00> : vector<10x32xf32>
    %261 = tpu.matmul %258, %260, %cst_116 {dimension_numbers = #tpu.dot_dimension_numbers<[1], [0], [0], [1], [0, 0, 1, 1], [], []>} : vector<10x128xbf16>, vector<128x32xbf16>, vector<10x32xf32> -> vector<10x32xf32>
    %262 = arith.addf %210, %261 : vector<10x32xf32>
    %c1_117 = arith.constant 1 : index
    %c0_118 = arith.constant 0 : index
    %c0_119 = arith.constant 0 : index
    %263 = vector.load %arg15[%c1_117, %c0_118, %c0_119] : memref<2x1x32xf32, #tpu.memory_space<vmem>>, vector<1x1x32xf32>
    %264 = vector.shape_cast %263 : vector<1x1x32xf32> to vector<1x32xf32>
    %265 = vector.broadcast %264 : vector<1x32xf32> to vector<10x32xf32>
    %266 = arith.addf %262, %265 : vector<10x32xf32>
    %c0_120 = arith.constant 0 : index
    %c0_121 = arith.constant 0 : index
    %267 = vector.load %arg16[%c0_120, %c0_121] : memref<1x32xf32, #tpu.memory_space<vmem>>, vector<1x32xf32>
    %c0_122 = arith.constant 0 : index
    %c0_123 = arith.constant 0 : index
    %268 = vector.load %arg17[%c0_122, %c0_123] : memref<1x32xf32, #tpu.memory_space<vmem>>, vector<1x32xf32>
    %cst_124 = arith.constant dense<0.000000e+00> : vector<10xf32>
    %269 = vector.multi_reduction <add>, %266, %cst_124 [1] : vector<10x32xf32> to vector<10xf32>
    %270 = vector.shape_cast %269 : vector<10xf32> to vector<10x1xf32>
    %cst_125 = arith.constant 3.200000e+01 : f32
    %271 = vector.broadcast %cst_125 : f32 to vector<10x1xf32>
    %272 = arith.divf %270, %271 : vector<10x1xf32>
    %273 = vector.broadcast %272 : vector<10x1xf32> to vector<10x32xf32>
    %274 = arith.subf %266, %273 : vector<10x32xf32>
    %275 = arith.mulf %274, %274 : vector<10x32xf32>
    %cst_126 = arith.constant dense<0.000000e+00> : vector<10xf32>
    %276 = vector.multi_reduction <add>, %275, %cst_126 [1] : vector<10x32xf32> to vector<10xf32>
    %277 = vector.shape_cast %276 : vector<10xf32> to vector<10x1xf32>
    %cst_127 = arith.constant 3.200000e+01 : f32
    %278 = vector.broadcast %cst_127 : f32 to vector<10x1xf32>
    %279 = arith.divf %277, %278 : vector<10x1xf32>
    %280 = vector.broadcast %272 : vector<10x1xf32> to vector<10x32xf32>
    %281 = arith.subf %266, %280 : vector<10x32xf32>
    %cst_128 = arith.constant 9.99999974E-6 : f32
    %282 = vector.broadcast %cst_128 : f32 to vector<10x1xf32>
    %283 = arith.addf %279, %282 : vector<10x1xf32>
    %284 = math.rsqrt %283 : vector<10x1xf32>
    %285 = vector.broadcast %284 : vector<10x1xf32> to vector<10x32xf32>
    %286 = arith.mulf %281, %285 : vector<10x32xf32>
    %287 = vector.broadcast %267 : vector<1x32xf32> to vector<10x32xf32>
    %288 = arith.mulf %286, %287 : vector<10x32xf32>
    %289 = vector.broadcast %268 : vector<1x32xf32> to vector<10x32xf32>
    %290 = arith.addf %288, %289 : vector<10x32xf32>
    %c0_129 = arith.constant 0 : index
    %c0_130 = arith.constant 0 : index
    %291 = vector.load %arg18[%c0_129, %c0_130] : memref<10x32xf32, #tpu.memory_space<vmem>>, vector<10x32xf32>
    tpu.vector_store %arg18[%c0_129, %c0_130], %290 {strides = array<i32>} : memref<10x32xf32, #tpu.memory_space<vmem>>, vector<10x32xf32>,
    return
  }
  func.func @transform_0(%arg0: i32) -> (i32, i32) {
    %c0_i32 = arith.constant 0 : i32
    %c0_i32_0 = arith.constant 0 : i32
    return %arg0, %c0_i32 : i32, i32
  }
  func.func @transform_1(%arg0: i32) -> (i32, i32) {
    %c0_i32 = arith.constant 0 : i32
    %c0_i32_0 = arith.constant 0 : i32
    return %arg0, %c0_i32 : i32, i32
  }
  func.func @transform_2(%arg0: i32) -> (i32, i32) {
    %c0_i32 = arith.constant 0 : i32
    %c0_i32_0 = arith.constant 0 : i32
    %c0_i32_1 = arith.constant 0 : i32
    return %c0_i32, %c0_i32_0 : i32, i32
  }
  func.func @transform_3(%arg0: i32) -> (i32, i32) {
    %c0_i32 = arith.constant 0 : i32
    %c0_i32_0 = arith.constant 0 : i32
    %c0_i32_1 = arith.constant 0 : i32
    return %c0_i32, %c0_i32_0 : i32, i32
  }
  func.func @transform_4(%arg0: i32) -> (i32, i32, i32) {
    %c0_i32 = arith.constant 0 : i32
    %c0_i32_0 = arith.constant 0 : i32
    %c0_i32_1 = arith.constant 0 : i32
    %c0_i32_2 = arith.constant 0 : i32
    return %c0_i32, %c0_i32_0, %c0_i32_1 : i32, i32, i32
  }
  func.func @transform_5(%arg0: i32) -> (i32, i32, i32) {
    %c0_i32 = arith.constant 0 : i32
    %c0_i32_0 = arith.constant 0 : i32
    %c0_i32_1 = arith.constant 0 : i32
    %c0_i32_2 = arith.constant 0 : i32
    return %c0_i32, %c0_i32_0, %c0_i32_1 : i32, i32, i32
  }
  func.func @transform_6(%arg0: i32) -> (i32, i32, i32, i32) {
    %c0_i32 = arith.constant 0 : i32
    %c0_i32_0 = arith.constant 0 : i32
    %c0_i32_1 = arith.constant 0 : i32
    %c0_i32_2 = arith.constant 0 : i32
    %c0_i32_3 = arith.constant 0 : i32
    return %c0_i32, %c0_i32_0, %c0_i32_1, %c0_i32_2 : i32, i32, i32, i32
  }
  func.func @transform_7(%arg0: i32) -> (i32, i32, i32, i32) {
    %c0_i32 = arith.constant 0 : i32
    %c0_i32_0 = arith.constant 0 : i32
    %c0_i32_1 = arith.constant 0 : i32
    %c0_i32_2 = arith.constant 0 : i32
    %c0_i32_3 = arith.constant 0 : i32
    return %c0_i32, %c0_i32_0, %c0_i32_1, %c0_i32_2 : i32, i32, i32, i32
  }
  func.func @transform_8(%arg0: i32) -> (i32, i32, i32) {
    %c0_i32 = arith.constant 0 : i32
    %c0_i32_0 = arith.constant 0 : i32
    %c0_i32_1 = arith.constant 0 : i32
    %c0_i32_2 = arith.constant 0 : i32
    return %c0_i32, %c0_i32_0, %c0_i32_1 : i32, i32, i32
  }
  func.func @transform_9(%arg0: i32) -> (i32, i32, i32) {
    %c0_i32 = arith.constant 0 : i32
    %c0_i32_0 = arith.constant 0 : i32
    %c0_i32_1 = arith.constant 0 : i32
    %c0_i32_2 = arith.constant 0 : i32
    return %c0_i32, %c0_i32_0, %c0_i32_1 : i32, i32, i32
  }
  func.func @transform_10(%arg0: i32) -> (i32, i32, i32) {
    %c0_i32 = arith.constant 0 : i32
    %c0_i32_0 = arith.constant 0 : i32
    %c0_i32_1 = arith.constant 0 : i32
    %c0_i32_2 = arith.constant 0 : i32
    return %c0_i32, %c0_i32_0, %c0_i32_1 : i32, i32, i32
  }
  func.func @transform_11(%arg0: i32) -> (i32, i32, i32) {
    %c0_i32 = arith.constant 0 : i32
    %c0_i32_0 = arith.constant 0 : i32
    %c0_i32_1 = arith.constant 0 : i32
    %c0_i32_2 = arith.constant 0 : i32
    return %c0_i32, %c0_i32_0, %c0_i32_1 : i32, i32, i32
  }
  func.func @transform_12(%arg0: i32) -> (i32, i32, i32) {
    %c0_i32 = arith.constant 0 : i32
    %c0_i32_0 = arith.constant 0 : i32
    %c0_i32_1 = arith.constant 0 : i32
    %c0_i32_2 = arith.constant 0 : i32
    return %c0_i32, %c0_i32_0, %c0_i32_1 : i32, i32, i32
  }
  func.func @transform_13(%arg0: i32) -> (i32, i32, i32) {
    %c0_i32 = arith.constant 0 : i32
    %c0_i32_0 = arith.constant 0 : i32
    %c0_i32_1 = arith.constant 0 : i32
    %c0_i32_2 = arith.constant 0 : i32
    return %c0_i32, %c0_i32_0, %c0_i32_1 : i32, i32, i32
  }
  func.func @transform_14(%arg0: i32) -> (i32, i32, i32) {
    %c0_i32 = arith.constant 0 : i32
    %c0_i32_0 = arith.constant 0 : i32
    %c0_i32_1 = arith.constant 0 : i32
    %c0_i32_2 = arith.constant 0 : i32
    return %c0_i32, %c0_i32_0, %c0_i32_1 : i32, i32, i32
  }
  func.func @transform_15(%arg0: i32) -> (i32, i32) {
    %c0_i32 = arith.constant 0 : i32
    %c0_i32_0 = arith.constant 0 : i32
    %c0_i32_1 = arith.constant 0 : i32
    return %c0_i32, %c0_i32_0 : i32, i32
  }
  func.func @transform_16(%arg0: i32) -> (i32, i32) {
    %c0_i32 = arith.constant 0 : i32
    %c0_i32_0 = arith.constant 0 : i32
    %c0_i32_1 = arith.constant 0 : i32
    return %c0_i32, %c0_i32_0 : i32, i32
  }
  func.func @transform_17(%arg0: i32) -> (i32, i32) {
    %c0_i32 = arith.constant 0 : i32
    %c0_i32_0 = arith.constant 0 : i32
    return %arg0, %c0_i32 : i32, i32
  }
}

</mosaic_0001>

<llo_original>
// kernel: tile.9
$region0: #{tile.9}
  %s0 = inlined_call_operand.vmem [shape: f32[2,5,32], index: 0, kind: input, shape index: {}]
  %s1 = inlined_call_operand.vmem [shape: f32[10,32], index: 1, kind: output, shape index: {}]
  %v2 = vld [vmem:[%s0] sm:$0x1f]
  %vm3 = vcmask 261120
  %4 = vst.msk [vmem:[%s1] sm:$0x1f] %vm3, %v2
  %s5 = scalar_lea.vmem %s0, 8
  %v6 = vld [vmem:[%s5] sm:$0x1f]
  %vm7 = vcmask 261120
  %s8 = scalar_lea.vmem %s1, 5
  %9 = vst.msk [vmem:[%s8] sm:$0x1f] %vm7, %v6

// kernel: vit_forward.1
$region0: #{vit_forward.1}
  #allocation0 [shape = 'u32[]', space=smem, size = 0x4, offset = 0x4, fixed_abs, tag = 'smem constant byte address 0x4 - core index']
  #allocation1 [shape = 'u32[144,128]{1,0:T(1,128)}', space=vmem, size = 0x12000, scoped, tag = 'internal scratch']
  %s0 = inlined_call_operand.vmem [shape: bf16[10,64], index: 0, kind: input, shape index: {}]
  %s1 = inlined_call_operand.vmem [shape: f32[10,32], index: 1, kind: input, shape index: {}]
  %s2 = inlined_call_operand.vmem [shape: f32[10,10], index: 2, kind: input, shape index: {}]
  %s3 = inlined_call_operand.vmem [shape: bf16[64,32], index: 3, kind: input, shape index: {}]
  %s4 = inlined_call_operand.vmem [shape: f32[2,1,32], index: 4, kind: input, shape index: {}]
  %s5 = inlined_call_operand.vmem [shape: f32[2,1,32], index: 5, kind: input, shape index: {}]
  %s6 = inlined_call_operand.vmem [shape: bf16[2,12,32,8], index: 6, kind: input, shape index: {}]
  %s7 = inlined_call_operand.vmem [shape: bf16[2,4,8,32], index: 7, kind: input, shape index: {}]
  %s8 = inlined_call_operand.vmem [shape: f32[2,1,32], index: 8, kind: input, shape index: {}]
  %s9 = inlined_call_operand.vmem [shape: f32[2,1,32], index: 9, kind: input, shape index: {}]
  %s10 = inlined_call_operand.vmem [shape: f32[2,1,32], index: 10, kind: input, shape index: {}]
  %s11 = inlined_call_operand.vmem [shape: bf16[2,32,128], index: 11, kind: input, shape index: {}]
  %s12 = inlined_call_operand.vmem [shape: f32[2,1,128], index: 12, kind: input, shape index: {}]
  %s13 = inlined_call_operand.vmem [shape: bf16[2,128,32], index: 13, kind: input, shape index: {}]
  %s14 = inlined_call_operand.vmem [shape: f32[2,1,32], index: 14, kind: input, shape index: {}]
  %s15 = inlined_call_operand.vmem [shape: f32[1,32], index: 15, kind: input, shape index: {}]
  %s16 = inlined_call_operand.vmem [shape: f32[1,32], index: 16, kind: input, shape index: {}]
  %s17 = inlined_call_operand.vmem [shape: f32[10,32], index: 17, kind: output, shape index: {}]
  %s18 = sld [smem:[#allocation0]]
  $region78: #{vit_forward.1} parent=0
    _
  %s20 = ssub.s32 1, %s18
  %s21 = scalar_select 0, %s20, %s18
  // Predicated region
  $region2: #{vit_forward.1} parent=0 // pred_check
    _
  $region3: #{vit_forward.1} parent=0 // pred_check_branch
    %23 = sbr.rel (0) target = $region5
  $region4: #{vit_forward.1} parent=0 // pred_region
    _
  $region5: #{vit_forward.1} parent=0 // pred_fallthru
    _
  // Predicated region
  $region6: #{vit_forward.1} parent=0 // pred_check
    _
  $region7: #{vit_forward.1} parent=0 // pred_check_branch
    %25 = sbr.rel (0) target = $region9
  $region8: #{vit_forward.1} parent=0 // pred_region
    _
  $region9: #{vit_forward.1} parent=0 // pred_fallthru
    _
  // Predicated region
  $region10: #{vit_forward.1} parent=0 // pred_check
    _
  $region11: #{vit_forward.1} parent=0 // pred_check_branch
    %27 = sbr.rel (0) target = $region13
  $region12: #{vit_forward.1} parent=0 // pred_region
    _
  $region13: #{vit_forward.1} parent=0 // pred_fallthru
    _
  // Predicated region
  $region14: #{vit_forward.1} parent=0 // pred_check
    _
  $region15: #{vit_forward.1} parent=0 // pred_check_branch
    %29 = sbr.rel (0) target = $region17
  $region16: #{vit_forward.1} parent=0 // pred_region
    _
  $region17: #{vit_forward.1} parent=0 // pred_fallthru
    _
  // Predicated region
  $region18: #{vit_forward.1} parent=0 // pred_check
    _
  $region19: #{vit_forward.1} parent=0 // pred_check_branch
    %31 = sbr.rel (0) target = $region21
  $region20: #{vit_forward.1} parent=0 // pred_region
    _
  $region21: #{vit_forward.1} parent=0 // pred_fallthru
    _
  // Predicated region
  $region22: #{vit_forward.1} parent=0 // pred_check
    _
  $region23: #{vit_forward.1} parent=0 // pred_check_branch
    %33 = sbr.rel (0) target = $region25
  $region24: #{vit_forward.1} parent=0 // pred_region
    _
  $region25: #{vit_forward.1} parent=0 // pred_fallthru
    _
  // Predicated region
  $region26: #{vit_forward.1} parent=0 // pred_check
    _
  $region27: #{vit_forward.1} parent=0 // pred_check_branch
    %35 = sbr.rel (0) target = $region29
  $region28: #{vit_forward.1} parent=0 // pred_region
    _
  $region29: #{vit_forward.1} parent=0 // pred_fallthru
    _
  // Predicated region
  $region30: #{vit_forward.1} parent=0 // pred_check
    _
  $region31: #{vit_forward.1} parent=0 // pred_check_branch
    %37 = sbr.rel (0) target = $region33
  $region32: #{vit_forward.1} parent=0 // pred_region
    _
  $region33: #{vit_forward.1} parent=0 // pred_fallthru
    _
  // Predicated region
  $region34: #{vit_forward.1} parent=0 // pred_check
    _
  $region35: #{vit_forward.1} parent=0 // pred_check_branch
    %39 = sbr.rel (0) target = $region37
  $region36: #{vit_forward.1} parent=0 // pred_region
    _
  $region37: #{vit_forward.1} parent=0 // pred_fallthru
    _
  // Predicated region
  $region38: #{vit_forward.1} parent=0 // pred_check
    _
  $region39: #{vit_forward.1} parent=0 // pred_check_branch
    %41 = sbr.rel (0) target = $region41
  $region40: #{vit_forward.1} parent=0 // pred_region
    _
  $region41: #{vit_forward.1} parent=0 // pred_fallthru
    _
  // Predicated region
  $region42: #{vit_forward.1} parent=0 // pred_check
    _
  $region43: #{vit_forward.1} parent=0 // pred_check_branch
    %43 = sbr.rel (0) target = $region45
  $region44: #{vit_forward.1} parent=0 // pred_region
    _
  $region45: #{vit_forward.1} parent=0 // pred_fallthru
    _
  // Predicated region
  $region46: #{vit_forward.1} parent=0 // pred_check
    _
  $region47: #{vit_forward.1} parent=0 // pred_check_branch
    %45 = sbr.rel (0) target = $region49
  $region48: #{vit_forward.1} parent=0 // pred_region
    _
  $region49: #{vit_forward.1} parent=0 // pred_fallthru
    _
  // Predicated region
  $region50: #{vit_forward.1} parent=0 // pred_check
    _
  $region51: #{vit_forward.1} parent=0 // pred_check_branch
    %47 = sbr.rel (0) target = $region53
  $region52: #{vit_forward.1} parent=0 // pred_region
    _
  $region53: #{vit_forward.1} parent=0 // pred_fallthru
    _
  // Predicated region
  $region54: #{vit_forward.1} parent=0 // pred_check
    _
  $region55: #{vit_forward.1} parent=0 // pred_check_branch
    %49 = sbr.rel (0) target = $region57
  $region56: #{vit_forward.1} parent=0 // pred_region
    _
  $region57: #{vit_forward.1} parent=0 // pred_fallthru
    _
  // Predicated region
  $region58: #{vit_forward.1} parent=0 // pred_check
    _
  $region59: #{vit_forward.1} parent=0 // pred_check_branch
    %51 = sbr.rel (0) target = $region61
  $region60: #{vit_forward.1} parent=0 // pred_region
    _
  $region61: #{vit_forward.1} parent=0 // pred_fallthru
    _
  // Predicated region
  $region62: #{vit_forward.1} parent=0 // pred_check
    _
  $region63: #{vit_forward.1} parent=0 // pred_check_branch
    %53 = sbr.rel (0) target = $region65
  $region64: #{vit_forward.1} parent=0 // pred_region
    _
  $region65: #{vit_forward.1} parent=0 // pred_fallthru
    _
  // Predicated region
  $region66: #{vit_forward.1} parent=0 // pred_check
    _
  $region67: #{vit_forward.1} parent=0 // pred_check_branch
    %55 = sbr.rel (0) target = $region69
  $region68: #{vit_forward.1} parent=0 // pred_region
    _
  $region69: #{vit_forward.1} parent=0 // pred_fallthru
    _
  %v57 = vld [vmem:[%s1] sm:$0xff]
  %v58 = vld [vmem:[%s1 + $0x8] sm:$0x3]
  %v59 = vld [vmem:[%s0] sm:$0xf]
  %v60 = vld [vmem:[%s0 + $0x4] sm:$0x1]
  %v61 = vld [vmem:[%s3] sm:$0xf]
  %v62 = vld [vmem:[%s3 + $0x4] sm:$0xf]
  %v63 = vld [vmem:[%s3 + $0x8] sm:$0xf]
  %v64 = vld [vmem:[%s3 + $0xc] sm:$0xf]
  %v65 = vld [vmem:[%s3 + $0x10] sm:$0xf]
  %v66 = vld [vmem:[%s3 + $0x14] sm:$0xf]
  %v67 = vld [vmem:[%s3 + $0x18] sm:$0xf]
  %v68 = vld [vmem:[%s3 + $0x1c] sm:$0xf]
  %v71 = vunpack.c.l.b16 %v59
  %v72 = vunpack.c.l.b16 %v60
  %v73 = vpack.c.b16 %v72, %v71
  %v82 = vunpack.c.l.b16 %v61
  %v83 = vunpack.c.l.b16 %v62
  %v84 = vunpack.c.l.b16 %v63
  %v85 = vunpack.c.l.b16 %v64
  %v86 = vunpack.c.l.b16 %v65
  %v87 = vunpack.c.l.b16 %v66
  %v88 = vunpack.c.l.b16 %v67
  %v89 = vunpack.c.l.b16 %v68
  %v90 = vpack.c.b16 %v83, %v82
  %v91 = vpack.c.b16 %v85, %v84
  %v92 = vpack.c.b16 %v87, %v86
  %v93 = vpack.c.b16 %v89, %v88
  %vm98 = vcmask 523264
  %v100 = vsel %vm98, %v73, 0
  %102 = vmatprep.subr.bf16.mxu0 0
  %103 = vmatpush1.bf16.msra.mxu0 %v90
  %104 = vmatprep.subr.bf16.mxu0 0
  %105 = vmatpush1.bf16.msra.mxu0 %v91
  %106 = vmatprep.subr.bf16.mxu0 0
  %107 = vmatpush1.bf16.msra.mxu0 %v92
  %108 = vmatprep.subr.bf16.mxu0 0
  %109 = vmatpush1.bf16.msra.mxu0 %v93
  %110 = vmatprep.subr.bf16.mxu0 0
  %111 = vmatpush1.bf16.msra.mxu0 0
  %112 = vmatprep.subr.bf16.mxu0 0
  %113 = vmatpush1.bf16.msra.mxu0 0
  %114 = vmatprep.subr.bf16.mxu0 0
  %115 = vmatpush1.bf16.msra.mxu0 0
  %116 = vmatprep.subr.bf16.mxu0 0
  %117 = vmatpush1.bf16.msra.mxu0 0
  %118 = vmatprep.subr.bf16.mxu0 0
  %119 = vmatpush1.bf16.msra.mxu0 0
  %120 = vmatprep.subr.bf16.mxu0 0
  %121 = vmatpush1.bf16.msra.mxu0 0
  %122 = vmatprep.subr.bf16.mxu0 0
  %123 = vmatpush1.bf16.msra.mxu0 0
  %124 = vmatprep.subr.bf16.mxu0 0
  %125 = vmatpush1.bf16.msra.mxu0 0
  %126 = vmatprep.subr.bf16.mxu0 0
  %127 = vmatpush1.bf16.msra.mxu0 0
  %128 = vmatprep.subr.bf16.mxu0 0
  %129 = vmatpush1.bf16.msra.mxu0 0
  %130 = vmatprep.subr.bf16.mxu0 0
  %131 = vmatpush1.bf16.msra.mxu0 0
  %132 = vmatprep.subr.bf16.mxu0 0
  %133 = vmatpush1.bf16.msra.mxu0 0
  %134 = vmatprep.mubr.bf16.mxu0 0
  %135 = vmatmul.mubr.bf16.gmra.mrb[0].mxu0 %v100
  %v136 = vpop.f32.mrb[0].mxu0
  %v137 = vadd.f32 0.0, %v136
  %v138 = vpop.f32.mrb[0].mxu0
  %v139 = vpop.f32.mrb[0].mxu0
  %v140 = vadd.f32 0.0, %v139
  %v141 = vpop.f32.mrb[0].mxu0
  %142 = vdwg.mxu0
  %v143 = vadd.f32 %v57, %v137
  %v144 = vadd.f32 %v58, %v140
  %v145 = vld [vmem:[%s2] sm:$0xff]
  %v146 = vld [vmem:[%s2 + $0x8] sm:$0x3]
  %v147 = vld [vmem:[%s4] sm:$0x1]
  %v148 = vld [vmem:[%s5] sm:$0x1]
  %vm149 = vcmask 261120
  %v150 = vsel %vm149, %v143, 0.0
  %151 = vadd.xlane.f32.xlu0 %v150
  %v152 = vpop.xlane.xlu0 %151
  %vm153 = vcmask 254976
  %v154 = vsel %vm153, %v144, 0.0
  %155 = vadd.xlane.f32.xlu0 %v154
  %v156 = vpop.xlane.xlu0 %155
  %v157 = vrcp.pop 32.0
  %v158 = vmul.f32 %v152, %v157
  %v159 = vmul.f32 %v156, %v157
  %v160 = vsub.f32 %v143, %v158
  %v161 = vsub.f32 %v144, %v159
  %v162 = vmul.f32 %v160, %v160
  %v163 = vmul.f32 %v161, %v161
  %v164 = vsel %vm149, %v162, 0.0
  %165 = vadd.xlane.f32.xlu0 %v164
  %v166 = vpop.xlane.xlu0 %165
  %v167 = vsel %vm153, %v163, 0.0
  %168 = vadd.xlane.f32.xlu0 %v167
  %v169 = vpop.xlane.xlu0 %168
  %v170 = vmul.f32 %v166, %v157
  %v171 = vmul.f32 %v169, %v157
  %v172 = vadd.f32 %v170, 1e-05
  %v173 = vadd.f32 %v171, 1e-05
  %v174 = vrsqrt.pop %v172
  %v175 = vrsqrt.pop %v173
  %v176 = vmul.f32 %v160, %v174
  %v177 = vmul.f32 %v161, %v175
  %v179 = vlaneseq
  %v180 = vshrl.u32 %v179, 7
  %v181 = vsub.s32 0, %v180
  %v182 = vrot.slane %v147, %v181
  %v184 = vmul.f32 %v176, %v182
  %v185 = vmul.f32 %v177, %v182
  %v187 = vlaneseq
  %v188 = vshrl.u32 %v187, 7
  %v189 = vsub.s32 0, %v188
  %v190 = vrot.slane %v148, %v189
  %v192 = vadd.f32 %v184, %v190
  %v193 = vadd.f32 %v185, %v190
  %v194 = vpack.c.bf16 %v193, %v192
  %v195 = vld [vmem:[%s6] sm:$0xf]
  %v196 = vld [vmem:[%s6 + $0x4] sm:$0xf]
  %v197 = vld [vmem:[%s6 + $0x8] sm:$0xf]
  %v198 = vld [vmem:[%s6 + $0xc] sm:$0xf]
  %v199 = vld [vmem:[%s6 + $0x10] sm:$0xf]
  %v200 = vld [vmem:[%s6 + $0x14] sm:$0xf]
  %v201 = vld [vmem:[%s6 + $0x18] sm:$0xf]
  %v202 = vld [vmem:[%s6 + $0x1c] sm:$0xf]
  %v203 = vld [vmem:[%s6 + $0x20] sm:$0xf]
  %v204 = vld [vmem:[%s6 + $0x24] sm:$0xf]
  %v205 = vld [vmem:[%s6 + $0x28] sm:$0xf]
  %v206 = vld [vmem:[%s6 + $0x2c] sm:$0xf]
  %v207 = vld [vmem:[%s6 + $0x30] sm:$0xf]
  %v208 = vld [vmem:[%s6 + $0x34] sm:$0xf]
  %v209 = vld [vmem:[%s6 + $0x38] sm:$0xf]
  %v210 = vld [vmem:[%s6 + $0x3c] sm:$0xf]
  %v211 = vld [vmem:[%s6 + $0x40] sm:$0xf]
  %v212 = vld [vmem:[%s6 + $0x44] sm:$0xf]
  %v213 = vld [vmem:[%s6 + $0x48] sm:$0xf]
  %v214 = vld [vmem:[%s6 + $0x4c] sm:$0xf]
  %v215 = vld [vmem:[%s6 + $0x50] sm:$0xf]
  %v216 = vld [vmem:[%s6 + $0x54] sm:$0xf]
  %v217 = vld [vmem:[%s6 + $0x58] sm:$0xf]
  %v218 = vld [vmem:[%s6 + $0x5c] sm:$0xf]
  %v219 = vld [vmem:[%s6 + $0x60] sm:$0xf]
  %v220 = vld [vmem:[%s6 + $0x64] sm:$0xf]
  %v221 = vld [vmem:[%s6 + $0x68] sm:$0xf]
  %v222 = vld [vmem:[%s6 + $0x6c] sm:$0xf]
  %v223 = vld [vmem:[%s6 + $0x70] sm:$0xf]
  %v224 = vld [vmem:[%s6 + $0x74] sm:$0xf]
  %v225 = vld [vmem:[%s6 + $0x78] sm:$0xf]
  %v226 = vld [vmem:[%s6 + $0x7c] sm:$0xf]
  %v227 = vld [vmem:[%s6 + $0x80] sm:$0xf]
  %v228 = vld [vmem:[%s6 + $0x84] sm:$0xf]
  %v229 = vld [vmem:[%s6 + $0x88] sm:$0xf]
  %v230 = vld [vmem:[%s6 + $0x8c] sm:$0xf]
  %v231 = vld [vmem:[%s6 + $0x90] sm:$0xf]
  %v232 = vld [vmem:[%s6 + $0x94] sm:$0xf]
  %v233 = vld [vmem:[%s6 + $0x98] sm:$0xf]
  %v234 = vld [vmem:[%s6 + $0x9c] sm:$0xf]
  %v235 = vld [vmem:[%s6 + $0xa0] sm:$0xf]
  %v236 = vld [vmem:[%s6 + $0xa4] sm:$0xf]
  %v237 = vld [vmem:[%s6 + $0xa8] sm:$0xf]
  %v238 = vld [vmem:[%s6 + $0xac] sm:$0xf]
  %v239 = vld [vmem:[%s6 + $0xb0] sm:$0xf]
  %v240 = vld [vmem:[%s6 + $0xb4] sm:$0xf]
  %v241 = vld [vmem:[%s6 + $0xb8] sm:$0xf]
  %v242 = vld [vmem:[%s6 + $0xbc] sm:$0xf]
  %v247 = vunpack.c.l.b16 %v195
  %v248 = vunpack.c.l.b16 %v196
  %v249 = vunpack.c.l.b16 %v197
  %v250 = vunpack.c.l.b16 %v198
  %v251 = vpack.c.b16 %v248, %v247
  %v252 = vpack.c.b16 %v250, %v249
  %v256 = vsel %vm149, %v194, 0
  %258 = vmatprep.subr.bf16.mxu0 0
  %259 = vmatpush1.bf16.msra.mxu0 %v251
  %260 = vmatprep.subr.bf16.mxu0 0
  %261 = vmatpush1.bf16.msra.mxu0 %v252
  %262 = vmatprep.subr.bf16.mxu0 0
  %263 = vmatpush1.bf16.msra.mxu0 0
  %264 = vmatprep.subr.bf16.mxu0 0
  %265 = vmatpush1.bf16.msra.mxu0 0
  %266 = vmatprep.subr.bf16.mxu0 0
  %267 = vmatpush1.bf16.msra.mxu0 0
  %268 = vmatprep.subr.bf16.mxu0 0
  %269 = vmatpush1.bf16.msra.mxu0 0
  %270 = vmatprep.subr.bf16.mxu0 0
  %271 = vmatpush1.bf16.msra.mxu0 0
  %272 = vmatprep.subr.bf16.mxu0 0
  %273 = vmatpush1.bf16.msra.mxu0 0
  %274 = vmatprep.subr.bf16.mxu0 0
  %275 = vmatpush1.bf16.msra.mxu0 0
  %276 = vmatprep.subr.bf16.mxu0 0
  %277 = vmatpush1.bf16.msra.mxu0 0
  %278 = vmatprep.subr.bf16.mxu0 0
  %279 = vmatpush1.bf16.msra.mxu0 0
  %280 = vmatprep.subr.bf16.mxu0 0
  %281 = vmatpush1.bf16.msra.mxu0 0
  %282 = vmatprep.subr.bf16.mxu0 0
  %283 = vmatpush1.bf16.msra.mxu0 0
  %284 = vmatprep.subr.bf16.mxu0 0
  %285 = vmatpush1.bf16.msra.mxu0 0
  %286 = vmatprep.subr.bf16.mxu0 0
  %287 = vmatpush1.bf16.msra.mxu0 0
  %288 = vmatprep.subr.bf16.mxu0 0
  %289 = vmatpush1.bf16.msra.mxu0 0
  %290 = vmatprep.mubr.bf16.mxu0 0
  %291 = vmatmul.mubr.bf16.gmra.mrb[0].mxu0 %v256
  %v292 = vpop.f32.mrb[0].mxu0
  %v293 = vadd.f32 0.0, %v292
  %v294 = vpop.f32.mrb[0].mxu0
  %v295 = vpop.f32.mrb[0].mxu0
  %v296 = vadd.f32 0.0, %v295
  %v297 = vpop.f32.mrb[0].mxu0
  %298 = vdwg.mxu0
  %v303 = vunpack.c.l.b16 %v199
  %v304 = vunpack.c.l.b16 %v200
  %v305 = vunpack.c.l.b16 %v201
  %v306 = vunpack.c.l.b16 %v202
  %v307 = vpack.c.b16 %v304, %v303
  %v308 = vpack.c.b16 %v306, %v305
  %311 = vmatprep.subr.bf16.mxu0 0
  %312 = vmatpush1.bf16.msra.mxu0 %v307
  %313 = vmatprep.subr.bf16.mxu0 0
  %314 = vmatpush1.bf16.msra.mxu0 %v308
  %315 = vmatprep.subr.bf16.mxu0 0
  %316 = vmatpush1.bf16.msra.mxu0 0
  %317 = vmatprep.subr.bf16.mxu0 0
  %318 = vmatpush1.bf16.msra.mxu0 0
  %319 = vmatprep.subr.bf16.mxu0 0
  %320 = vmatpush1.bf16.msra.mxu0 0
  %321 = vmatprep.subr.bf16.mxu0 0
  %322 = vmatpush1.bf16.msra.mxu0 0
  %323 = vmatprep.subr.bf16.mxu0 0
  %324 = vmatpush1.bf16.msra.mxu0 0
  %325 = vmatprep.subr.bf16.mxu0 0
  %326 = vmatpush1.bf16.msra.mxu0 0
  %327 = vmatprep.subr.bf16.mxu0 0
  %328 = vmatpush1.bf16.msra.mxu0 0
  %329 = vmatprep.subr.bf16.mxu0 0
  %330 = vmatpush1.bf16.msra.mxu0 0
  %331 = vmatprep.subr.bf16.mxu0 0
  %332 = vmatpush1.bf16.msra.mxu0 0
  %333 = vmatprep.subr.bf16.mxu0 0
  %334 = vmatpush1.bf16.msra.mxu0 0
  %335 = vmatprep.subr.bf16.mxu0 0
  %336 = vmatpush1.bf16.msra.mxu0 0
  %337 = vmatprep.subr.bf16.mxu0 0
  %338 = vmatpush1.bf16.msra.mxu0 0
  %339 = vmatprep.subr.bf16.mxu0 0
  %340 = vmatpush1.bf16.msra.mxu0 0
  %341 = vmatprep.subr.bf16.mxu0 0
  %342 = vmatpush1.bf16.msra.mxu0 0
  %343 = vmatprep.mubr.bf16.mxu0 0
  %344 = vmatmul.mubr.bf16.gmra.mrb[0].mxu0 %v256
  %v345 = vpop.f32.mrb[0].mxu0
  %v346 = vadd.f32 0.0, %v345
  %v347 = vpop.f32.mrb[0].mxu0
  %v348 = vpop.f32.mrb[0].mxu0
  %v349 = vadd.f32 0.0, %v348
  %v350 = vpop.f32.mrb[0].mxu0
  %351 = vdwg.mxu0
  %v356 = vunpack.c.l.b16 %v203
  %v357 = vunpack.c.l.b16 %v204
  %v358 = vunpack.c.l.b16 %v205
  %v359 = vunpack.c.l.b16 %v206
  %v360 = vpack.c.b16 %v357, %v356
  %v361 = vpack.c.b16 %v359, %v358
  %364 = vmatprep.subr.bf16.mxu0 0
  %365 = vmatpush1.bf16.msra.mxu0 %v360
  %366 = vmatprep.subr.bf16.mxu0 0
  %367 = vmatpush1.bf16.msra.mxu0 %v361
  %368 = vmatprep.subr.bf16.mxu0 0
  %369 = vmatpush1.bf16.msra.mxu0 0
  %370 = vmatprep.subr.bf16.mxu0 0
  %371 = vmatpush1.bf16.msra.mxu0 0
  %372 = vmatprep.subr.bf16.mxu0 0
  %373 = vmatpush1.bf16.msra.mxu0 0
  %374 = vmatprep.subr.bf16.mxu0 0
  %375 = vmatpush1.bf16.msra.mxu0 0
  %376 = vmatprep.subr.bf16.mxu0 0
  %377 = vmatpush1.bf16.msra.mxu0 0
  %378 = vmatprep.subr.bf16.mxu0 0
  %379 = vmatpush1.bf16.msra.mxu0 0
  %380 = vmatprep.subr.bf16.mxu0 0
  %381 = vmatpush1.bf16.msra.mxu0 0
  %382 = vmatprep.subr.bf16.mxu0 0
  %383 = vmatpush1.bf16.msra.mxu0 0
  %384 = vmatprep.subr.bf16.mxu0 0
  %385 = vmatpush1.bf16.msra.mxu0 0
  %386 = vmatprep.subr.bf16.mxu0 0
  %387 = vmatpush1.bf16.msra.mxu0 0
  %388 = vmatprep.subr.bf16.mxu0 0
  %389 = vmatpush1.bf16.msra.mxu0 0
  %390 = vmatprep.subr.bf16.mxu0 0
  %391 = vmatpush1.bf16.msra.mxu0 0
  %392 = vmatprep.subr.bf16.mxu0 0
  %393 = vmatpush1.bf16.msra.mxu0 0
  %394 = vmatprep.subr.bf16.mxu0 0
  %395 = vmatpush1.bf16.msra.mxu0 0
  %396 = vmatprep.mubr.bf16.mxu0 0
  %397 = vmatmul.mubr.bf16.gmra.mrb[0].mxu0 %v256
  %v398 = vpop.f32.mrb[0].mxu0
  %v399 = vadd.f32 0.0, %v398
  %v400 = vpop.f32.mrb[0].mxu0
  %v401 = vpop.f32.mrb[0].mxu0
  %v402 = vadd.f32 0.0, %v401
  %v403 = vpop.f32.mrb[0].mxu0
  %404 = vdwg.mxu0
  %v409 = vunpack.c.l.b16 %v207
  %v410 = vunpack.c.l.b16 %v208
  %v411 = vunpack.c.l.b16 %v209
  %v412 = vunpack.c.l.b16 %v210
  %v413 = vpack.c.b16 %v410, %v409
  %v414 = vpack.c.b16 %v412, %v411
  %417 = vmatprep.subr.bf16.mxu0 0
  %418 = vmatpush1.bf16.msra.mxu0 %v413
  %419 = vmatprep.subr.bf16.mxu0 0
  %420 = vmatpush1.bf16.msra.mxu0 %v414
  %421 = vmatprep.subr.bf16.mxu0 0
  %422 = vmatpush1.bf16.msra.mxu0 0
  %423 = vmatprep.subr.bf16.mxu0 0
  %424 = vmatpush1.bf16.msra.mxu0 0
  %425 = vmatprep.subr.bf16.mxu0 0
  %426 = vmatpush1.bf16.msra.mxu0 0
  %427 = vmatprep.subr.bf16.mxu0 0
  %428 = vmatpush1.bf16.msra.mxu0 0
  %429 = vmatprep.subr.bf16.mxu0 0
  %430 = vmatpush1.bf16.msra.mxu0 0
  %431 = vmatprep.subr.bf16.mxu0 0
  %432 = vmatpush1.bf16.msra.mxu0 0
  %433 = vmatprep.subr.bf16.mxu0 0
  %434 = vmatpush1.bf16.msra.mxu0 0
  %435 = vmatprep.subr.bf16.mxu0 0
  %436 = vmatpush1.bf16.msra.mxu0 0
  %437 = vmatprep.subr.bf16.mxu0 0
  %438 = vmatpush1.bf16.msra.mxu0 0
  %439 = vmatprep.subr.bf16.mxu0 0
  %440 = vmatpush1.bf16.msra.mxu0 0
  %441 = vmatprep.subr.bf16.mxu0 0
  %442 = vmatpush1.bf16.msra.mxu0 0
  %443 = vmatprep.subr.bf16.mxu0 0
  %444 = vmatpush1.bf16.msra.mxu0 0
  %445 = vmatprep.subr.bf16.mxu0 0
  %446 = vmatpush1.bf16.msra.mxu0 0
  %447 = vmatprep.subr.bf16.mxu0 0
  %448 = vmatpush1.bf16.msra.mxu0 0
  %449 = vmatprep.mubr.bf16.mxu0 0
  %450 = vmatmul.mubr.bf16.gmra.mrb[0].mxu0 %v256
  %v451 = vpop.f32.mrb[0].mxu0
  %v452 = vadd.f32 0.0, %v451
  %v453 = vpop.f32.mrb[0].mxu0
  %v454 = vpop.f32.mrb[0].mxu0
  %v455 = vadd.f32 0.0, %v454
  %v456 = vpop.f32.mrb[0].mxu0
  %457 = vdwg.mxu0
  %v462 = vunpack.c.l.b16 %v211
  %v463 = vunpack.c.l.b16 %v212
  %v464 = vunpack.c.l.b16 %v213
  %v465 = vunpack.c.l.b16 %v214
  %v466 = vpack.c.b16 %v463, %v462
  %v467 = vpack.c.b16 %v465, %v464
  %470 = vmatprep.subr.bf16.mxu0 0
  %471 = vmatpush1.bf16.msra.mxu0 %v466
  %472 = vmatprep.subr.bf16.mxu0 0
  %473 = vmatpush1.bf16.msra.mxu0 %v467
  %474 = vmatprep.subr.bf16.mxu0 0
  %475 = vmatpush1.bf16.msra.mxu0 0
  %476 = vmatprep.subr.bf16.mxu0 0
  %477 = vmatpush1.bf16.msra.mxu0 0
  %478 = vmatprep.subr.bf16.mxu0 0
  %479 = vmatpush1.bf16.msra.mxu0 0
  %480 = vmatprep.subr.bf16.mxu0 0
  %481 = vmatpush1.bf16.msra.mxu0 0
  %482 = vmatprep.subr.bf16.mxu0 0
  %483 = vmatpush1.bf16.msra.mxu0 0
  %484 = vmatprep.subr.bf16.mxu0 0
  %485 = vmatpush1.bf16.msra.mxu0 0
  %486 = vmatprep.subr.bf16.mxu0 0
  %487 = vmatpush1.bf16.msra.mxu0 0
  %488 = vmatprep.subr.bf16.mxu0 0
  %489 = vmatpush1.bf16.msra.mxu0 0
  %490 = vmatprep.subr.bf16.mxu0 0
  %491 = vmatpush1.bf16.msra.mxu0 0
  %492 = vmatprep.subr.bf16.mxu0 0
  %493 = vmatpush1.bf16.msra.mxu0 0
  %494 = vmatprep.subr.bf16.mxu0 0
  %495 = vmatpush1.bf16.msra.mxu0 0
  %496 = vmatprep.subr.bf16.mxu0 0
  %497 = vmatpush1.bf16.msra.mxu0 0
  %498 = vmatprep.subr.bf16.mxu0 0
  %499 = vmatpush1.bf16.msra.mxu0 0
  %500 = vmatprep.subr.bf16.mxu0 0
  %501 = vmatpush1.bf16.msra.mxu0 0
  %502 = vmatprep.mubr.bf16.mxu0 0
  %503 = vmatmul.mubr.bf16.gmra.mrb[0].mxu0 %v256
  %v504 = vpop.f32.mrb[0].mxu0
  %v505 = vadd.f32 0.0, %v504
  %v506 = vpop.f32.mrb[0].mxu0
  %v507 = vpop.f32.mrb[0].mxu0
  %v508 = vadd.f32 0.0, %v507
  %v509 = vpop.f32.mrb[0].mxu0
  %510 = vdwg.mxu0
  %v515 = vunpack.c.l.b16 %v215
  %v516 = vunpack.c.l.b16 %v216
  %v517 = vunpack.c.l.b16 %v217
  %v518 = vunpack.c.l.b16 %v218
  %v519 = vpack.c.b16 %v516, %v515
  %v520 = vpack.c.b16 %v518, %v517
  %523 = vmatprep.subr.bf16.mxu0 0
  %524 = vmatpush1.bf16.msra.mxu0 %v519
  %525 = vmatprep.subr.bf16.mxu0 0
  %526 = vmatpush1.bf16.msra.mxu0 %v520
  %527 = vmatprep.subr.bf16.mxu0 0
  %528 = vmatpush1.bf16.msra.mxu0 0
  %529 = vmatprep.subr.bf16.mxu0 0
  %530 = vmatpush1.bf16.msra.mxu0 0
  %531 = vmatprep.subr.bf16.mxu0 0
  %532 = vmatpush1.bf16.msra.mxu0 0
  %533 = vmatprep.subr.bf16.mxu0 0
  %534 = vmatpush1.bf16.msra.mxu0 0
  %535 = vmatprep.subr.bf16.mxu0 0
  %536 = vmatpush1.bf16.msra.mxu0 0
  %537 = vmatprep.subr.bf16.mxu0 0
  %538 = vmatpush1.bf16.msra.mxu0 0
  %539 = vmatprep.subr.bf16.mxu0 0
  %540 = vmatpush1.bf16.msra.mxu0 0
  %541 = vmatprep.subr.bf16.mxu0 0
  %542 = vmatpush1.bf16.msra.mxu0 0
  %543 = vmatprep.subr.bf16.mxu0 0
  %544 = vmatpush1.bf16.msra.mxu0 0
  %545 = vmatprep.subr.bf16.mxu0 0
  %546 = vmatpush1.bf16.msra.mxu0 0
  %547 = vmatprep.subr.bf16.mxu0 0
  %548 = vmatpush1.bf16.msra.mxu0 0
  %549 = vmatprep.subr.bf16.mxu0 0
  %550 = vmatpush1.bf16.msra.mxu0 0
  %551 = vmatprep.subr.bf16.mxu0 0
  %552 = vmatpush1.bf16.msra.mxu0 0
  %553 = vmatprep.subr.bf16.mxu0 0
  %554 = vmatpush1.bf16.msra.mxu0 0
  %555 = vmatprep.mubr.bf16.mxu0 0
  %556 = vmatmul.mubr.bf16.gmra.mrb[0].mxu0 %v256
  %v557 = vpop.f32.mrb[0].mxu0
  %v558 = vadd.f32 0.0, %v557
  %v559 = vpop.f32.mrb[0].mxu0
  %v560 = vpop.f32.mrb[0].mxu0
  %v561 = vadd.f32 0.0, %v560
  %v562 = vpop.f32.mrb[0].mxu0
  %563 = vdwg.mxu0
  %v568 = vunpack.c.l.b16 %v219
  %v569 = vunpack.c.l.b16 %v220
  %v570 = vunpack.c.l.b16 %v221
  %v571 = vunpack.c.l.b16 %v222
  %v572 = vpack.c.b16 %v569, %v568
  %v573 = vpack.c.b16 %v571, %v570
  %576 = vmatprep.subr.bf16.mxu0 0
  %577 = vmatpush1.bf16.msra.mxu0 %v572
  %578 = vmatprep.subr.bf16.mxu0 0
  %579 = vmatpush1.bf16.msra.mxu0 %v573
  %580 = vmatprep.subr.bf16.mxu0 0
  %581 = vmatpush1.bf16.msra.mxu0 0
  %582 = vmatprep.subr.bf16.mxu0 0
  %583 = vmatpush1.bf16.msra.mxu0 0
  %584 = vmatprep.subr.bf16.mxu0 0
  %585 = vmatpush1.bf16.msra.mxu0 0
  %586 = vmatprep.subr.bf16.mxu0 0
  %587 = vmatpush1.bf16.msra.mxu0 0
  %588 = vmatprep.subr.bf16.mxu0 0
  %589 = vmatpush1.bf16.msra.mxu0 0
  %590 = vmatprep.subr.bf16.mxu0 0
  %591 = vmatpush1.bf16.msra.mxu0 0
  %592 = vmatprep.subr.bf16.mxu0 0
  %593 = vmatpush1.bf16.msra.mxu0 0
  %594 = vmatprep.subr.bf16.mxu0 0
  %595 = vmatpush1.bf16.msra.mxu0 0
  %596 = vmatprep.subr.bf16.mxu0 0
  %597 = vmatpush1.bf16.msra.mxu0 0
  %598 = vmatprep.subr.bf16.mxu0 0
  %599 = vmatpush1.bf16.msra.mxu0 0
  %600 = vmatprep.subr.bf16.mxu0 0
  %601 = vmatpush1.bf16.msra.mxu0 0
  %602 = vmatprep.subr.bf16.mxu0 0
  %603 = vmatpush1.bf16.msra.mxu0 0
  %604 = vmatprep.subr.bf16.mxu0 0
  %605 = vmatpush1.bf16.msra.mxu0 0
  %606 = vmatprep.subr.bf16.mxu0 0
  %607 = vmatpush1.bf16.msra.mxu0 0
  %608 = vmatprep.mubr.bf16.mxu0 0
  %609 = vmatmul.mubr.bf16.gmra.mrb[0].mxu0 %v256
  %v610 = vpop.f32.mrb[0].mxu0
  %v611 = vadd.f32 0.0, %v610
  %v612 = vpop.f32.mrb[0].mxu0
  %v613 = vpop.f32.mrb[0].mxu0
  %v614 = vadd.f32 0.0, %v613
  %v615 = vpop.f32.mrb[0].mxu0
  %616 = vdwg.mxu0
  %v621 = vunpack.c.l.b16 %v223
  %v622 = vunpack.c.l.b16 %v224
  %v623 = vunpack.c.l.b16 %v225
  %v624 = vunpack.c.l.b16 %v226
  %v625 = vpack.c.b16 %v622, %v621
  %v626 = vpack.c.b16 %v624, %v623
  %629 = vmatprep.subr.bf16.mxu0 0
  %630 = vmatpush1.bf16.msra.mxu0 %v625
  %631 = vmatprep.subr.bf16.mxu0 0
  %632 = vmatpush1.bf16.msra.mxu0 %v626
  %633 = vmatprep.subr.bf16.mxu0 0
  %634 = vmatpush1.bf16.msra.mxu0 0
  %635 = vmatprep.subr.bf16.mxu0 0
  %636 = vmatpush1.bf16.msra.mxu0 0
  %637 = vmatprep.subr.bf16.mxu0 0
  %638 = vmatpush1.bf16.msra.mxu0 0
  %639 = vmatprep.subr.bf16.mxu0 0
  %640 = vmatpush1.bf16.msra.mxu0 0
  %641 = vmatprep.subr.bf16.mxu0 0
  %642 = vmatpush1.bf16.msra.mxu0 0
  %643 = vmatprep.subr.bf16.mxu0 0
  %644 = vmatpush1.bf16.msra.mxu0 0
  %645 = vmatprep.subr.bf16.mxu0 0
  %646 = vmatpush1.bf16.msra.mxu0 0
  %647 = vmatprep.subr.bf16.mxu0 0
  %648 = vmatpush1.bf16.msra.mxu0 0
  %649 = vmatprep.subr.bf16.mxu0 0
  %650 = vmatpush1.bf16.msra.mxu0 0
  %651 = vmatprep.subr.bf16.mxu0 0
  %652 = vmatpush1.bf16.msra.mxu0 0
  %653 = vmatprep.subr.bf16.mxu0 0
  %654 = vmatpush1.bf16.msra.mxu0 0
  %655 = vmatprep.subr.bf16.mxu0 0
  %656 = vmatpush1.bf16.msra.mxu0 0
  %657 = vmatprep.subr.bf16.mxu0 0
  %658 = vmatpush1.bf16.msra.mxu0 0
  %659 = vmatprep.subr.bf16.mxu0 0
  %660 = vmatpush1.bf16.msra.mxu0 0
  %661 = vmatprep.mubr.bf16.mxu0 0
  %662 = vmatmul.mubr.bf16.gmra.mrb[0].mxu0 %v256
  %v663 = vpop.f32.mrb[0].mxu0
  %v664 = vadd.f32 0.0, %v663
  %v665 = vpop.f32.mrb[0].mxu0
  %v666 = vpop.f32.mrb[0].mxu0
  %v667 = vadd.f32 0.0, %v666
  %v668 = vpop.f32.mrb[0].mxu0
  %669 = vdwg.mxu0
  %v674 = vunpack.c.l.b16 %v227
  %v675 = vunpack.c.l.b16 %v228
  %v676 = vunpack.c.l.b16 %v229
  %v677 = vunpack.c.l.b16 %v230
  %v678 = vpack.c.b16 %v675, %v674
  %v679 = vpack.c.b16 %v677, %v676
  %682 = vmatprep.subr.bf16.mxu0 0
  %683 = vmatpush1.bf16.msra.mxu0 %v678
  %684 = vmatprep.subr.bf16.mxu0 0
  %685 = vmatpush1.bf16.msra.mxu0 %v679
  %686 = vmatprep.subr.bf16.mxu0 0
  %687 = vmatpush1.bf16.msra.mxu0 0
  %688 = vmatprep.subr.bf16.mxu0 0
  %689 = vmatpush1.bf16.msra.mxu0 0
  %690 = vmatprep.subr.bf16.mxu0 0
  %691 = vmatpush1.bf16.msra.mxu0 0
  %692 = vmatprep.subr.bf16.mxu0 0
  %693 = vmatpush1.bf16.msra.mxu0 0
  %694 = vmatprep.subr.bf16.mxu0 0
  %695 = vmatpush1.bf16.msra.mxu0 0
  %696 = vmatprep.subr.bf16.mxu0 0
  %697 = vmatpush1.bf16.msra.mxu0 0
  %698 = vmatprep.subr.bf16.mxu0 0
  %699 = vmatpush1.bf16.msra.mxu0 0
  %700 = vmatprep.subr.bf16.mxu0 0
  %701 = vmatpush1.bf16.msra.mxu0 0
  %702 = vmatprep.subr.bf16.mxu0 0
  %703 = vmatpush1.bf16.msra.mxu0 0
  %704 = vmatprep.subr.bf16.mxu0 0
  %705 = vmatpush1.bf16.msra.mxu0 0
  %706 = vmatprep.subr.bf16.mxu0 0
  %707 = vmatpush1.bf16.msra.mxu0 0
  %708 = vmatprep.subr.bf16.mxu0 0
  %709 = vmatpush1.bf16.msra.mxu0 0
  %710 = vmatprep.subr.bf16.mxu0 0
  %711 = vmatpush1.bf16.msra.mxu0 0
  %712 = vmatprep.subr.bf16.mxu0 0
  %713 = vmatpush1.bf16.msra.mxu0 0
  %714 = vmatprep.mubr.bf16.mxu0 0
  %715 = vmatmul.mubr.bf16.gmra.mrb[0].mxu0 %v256
  %v716 = vpop.f32.mrb[0].mxu0
  %v717 = vadd.f32 0.0, %v716
  %v718 = vpop.f32.mrb[0].mxu0
  %v719 = vpop.f32.mrb[0].mxu0
  %v720 = vadd.f32 0.0, %v719
  %v721 = vpop.f32.mrb[0].mxu0
  %722 = vdwg.mxu0
  %v727 = vunpack.c.l.b16 %v231
  %v728 = vunpack.c.l.b16 %v232
  %v729 = vunpack.c.l.b16 %v233
  %v730 = vunpack.c.l.b16 %v234
  %v731 = vpack.c.b16 %v728, %v727
  %v732 = vpack.c.b16 %v730, %v729
  %735 = vmatprep.subr.bf16.mxu0 0
  %736 = vmatpush1.bf16.msra.mxu0 %v731
  %737 = vmatprep.subr.bf16.mxu0 0
  %738 = vmatpush1.bf16.msra.mxu0 %v732
  %739 = vmatprep.subr.bf16.mxu0 0
  %740 = vmatpush1.bf16.msra.mxu0 0
  %741 = vmatprep.subr.bf16.mxu0 0
  %742 = vmatpush1.bf16.msra.mxu0 0
  %743 = vmatprep.subr.bf16.mxu0 0
  %744 = vmatpush1.bf16.msra.mxu0 0
  %745 = vmatprep.subr.bf16.mxu0 0
  %746 = vmatpush1.bf16.msra.mxu0 0
  %747 = vmatprep.subr.bf16.mxu0 0
  %748 = vmatpush1.bf16.msra.mxu0 0
  %749 = vmatprep.subr.bf16.mxu0 0
  %750 = vmatpush1.bf16.msra.mxu0 0
  %751 = vmatprep.subr.bf16.mxu0 0
  %752 = vmatpush1.bf16.msra.mxu0 0
  %753 = vmatprep.subr.bf16.mxu0 0
  %754 = vmatpush1.bf16.msra.mxu0 0
  %755 = vmatprep.subr.bf16.mxu0 0
  %756 = vmatpush1.bf16.msra.mxu0 0
  %757 = vmatprep.subr.bf16.mxu0 0
  %758 = vmatpush1.bf16.msra.mxu0 0
  %759 = vmatprep.subr.bf16.mxu0 0
  %760 = vmatpush1.bf16.msra.mxu0 0
  %761 = vmatprep.subr.bf16.mxu0 0
  %762 = vmatpush1.bf16.msra.mxu0 0
  %763 = vmatprep.subr.bf16.mxu0 0
  %764 = vmatpush1.bf16.msra.mxu0 0
  %765 = vmatprep.subr.bf16.mxu0 0
  %766 = vmatpush1.bf16.msra.mxu0 0
  %767 = vmatprep.mubr.bf16.mxu0 0
  %768 = vmatmul.mubr.bf16.gmra.mrb[0].mxu0 %v256
  %v769 = vpop.f32.mrb[0].mxu0
  %v770 = vadd.f32 0.0, %v769
  %v771 = vpop.f32.mrb[0].mxu0
  %v772 = vpop.f32.mrb[0].mxu0
  %v773 = vadd.f32 0.0, %v772
  %v774 = vpop.f32.mrb[0].mxu0
  %775 = vdwg.mxu0
  %v780 = vunpack.c.l.b16 %v235
  %v781 = vunpack.c.l.b16 %v236
  %v782 = vunpack.c.l.b16 %v237
  %v783 = vunpack.c.l.b16 %v238
  %v784 = vpack.c.b16 %v781, %v780
  %v785 = vpack.c.b16 %v783, %v782
  %788 = vmatprep.subr.bf16.mxu0 0
  %789 = vmatpush1.bf16.msra.mxu0 %v784
  %790 = vmatprep.subr.bf16.mxu0 0
  %791 = vmatpush1.bf16.msra.mxu0 %v785
  %792 = vmatprep.subr.bf16.mxu0 0
  %793 = vmatpush1.bf16.msra.mxu0 0
  %794 = vmatprep.subr.bf16.mxu0 0
  %795 = vmatpush1.bf16.msra.mxu0 0
  %796 = vmatprep.subr.bf16.mxu0 0
  %797 = vmatpush1.bf16.msra.mxu0 0
  %798 = vmatprep.subr.bf16.mxu0 0
  %799 = vmatpush1.bf16.msra.mxu0 0
  %800 = vmatprep.subr.bf16.mxu0 0
  %801 = vmatpush1.bf16.msra.mxu0 0
  %802 = vmatprep.subr.bf16.mxu0 0
  %803 = vmatpush1.bf16.msra.mxu0 0
  %804 = vmatprep.subr.bf16.mxu0 0
  %805 = vmatpush1.bf16.msra.mxu0 0
  %806 = vmatprep.subr.bf16.mxu0 0
  %807 = vmatpush1.bf16.msra.mxu0 0
  %808 = vmatprep.subr.bf16.mxu0 0
  %809 = vmatpush1.bf16.msra.mxu0 0
  %810 = vmatprep.subr.bf16.mxu0 0
  %811 = vmatpush1.bf16.msra.mxu0 0
  %812 = vmatprep.subr.bf16.mxu0 0
  %813 = vmatpush1.bf16.msra.mxu0 0
  %814 = vmatprep.subr.bf16.mxu0 0
  %815 = vmatpush1.bf16.msra.mxu0 0
  %816 = vmatprep.subr.bf16.mxu0 0
  %817 = vmatpush1.bf16.msra.mxu0 0
  %818 = vmatprep.subr.bf16.mxu0 0
  %819 = vmatpush1.bf16.msra.mxu0 0
  %820 = vmatprep.mubr.bf16.mxu0 0
  %821 = vmatmul.mubr.bf16.gmra.mrb[0].mxu0 %v256
  %v822 = vpop.f32.mrb[0].mxu0
  %v823 = vadd.f32 0.0, %v822
  %v824 = vpop.f32.mrb[0].mxu0
  %v825 = vpop.f32.mrb[0].mxu0
  %v826 = vadd.f32 0.0, %v825
  %v827 = vpop.f32.mrb[0].mxu0
  %828 = vdwg.mxu0
  %v833 = vunpack.c.l.b16 %v239
  %v834 = vunpack.c.l.b16 %v240
  %v835 = vunpack.c.l.b16 %v241
  %v836 = vunpack.c.l.b16 %v242
  %v837 = vpack.c.b16 %v834, %v833
  %v838 = vpack.c.b16 %v836, %v835
  %841 = vmatprep.subr.bf16.mxu0 0
  %842 = vmatpush1.bf16.msra.mxu0 %v837
  %843 = vmatprep.subr.bf16.mxu0 0
  %844 = vmatpush1.bf16.msra.mxu0 %v838
  %845 = vmatprep.subr.bf16.mxu0 0
  %846 = vmatpush1.bf16.msra.mxu0 0
  %847 = vmatprep.subr.bf16.mxu0 0
  %848 = vmatpush1.bf16.msra.mxu0 0
  %849 = vmatprep.subr.bf16.mxu0 0
  %850 = vmatpush1.bf16.msra.mxu0 0
  %851 = vmatprep.subr.bf16.mxu0 0
  %852 = vmatpush1.bf16.msra.mxu0 0
  %853 = vmatprep.subr.bf16.mxu0 0
  %854 = vmatpush1.bf16.msra.mxu0 0
  %855 = vmatprep.subr.bf16.mxu0 0
  %856 = vmatpush1.bf16.msra.mxu0 0
  %857 = vmatprep.subr.bf16.mxu0 0
  %858 = vmatpush1.bf16.msra.mxu0 0
  %859 = vmatprep.subr.bf16.mxu0 0
  %860 = vmatpush1.bf16.msra.mxu0 0
  %861 = vmatprep.subr.bf16.mxu0 0
  %862 = vmatpush1.bf16.msra.mxu0 0
  %863 = vmatprep.subr.bf16.mxu0 0
  %864 = vmatpush1.bf16.msra.mxu0 0
  %865 = vmatprep.subr.bf16.mxu0 0
  %866 = vmatpush1.bf16.msra.mxu0 0
  %867 = vmatprep.subr.bf16.mxu0 0
  %868 = vmatpush1.bf16.msra.mxu0 0
  %869 = vmatprep.subr.bf16.mxu0 0
  %870 = vmatpush1.bf16.msra.mxu0 0
  %871 = vmatprep.subr.bf16.mxu0 0
  %872 = vmatpush1.bf16.msra.mxu0 0
  %873 = vmatprep.mubr.bf16.mxu0 0
  %874 = vmatmul.mubr.bf16.gmra.mrb[0].mxu0 %v256
  %v875 = vpop.f32.mrb[0].mxu0
  %v876 = vadd.f32 0.0, %v875
  %v877 = vpop.f32.mrb[0].mxu0
  %v878 = vpop.f32.mrb[0].mxu0
  %v879 = vadd.f32 0.0, %v878
  %v880 = vpop.f32.mrb[0].mxu0
  %881 = vdwg.mxu0
  %v882 = vpack.c.bf16 %v296, %v293
  %v883 = vpack.c.bf16 %v349, %v346
  %v884 = vpack.c.bf16 %v402, %v399
  %v885 = vpack.c.bf16 %v455, %v452
  %v886 = vpack.c.bf16 %v508, %v505
  %v887 = vpack.c.bf16 %v561, %v558
  %v888 = vpack.c.bf16 %v614, %v611
  %v889 = vpack.c.bf16 %v667, %v664
  %v890 = vpack.c.bf16 %v720, %v717
  %v891 = vpack.c.bf16 %v773, %v770
  %v892 = vpack.c.bf16 %v826, %v823
  %v893 = vpack.c.bf16 %v879, %v876
  %vm894 = vcmask 64512
  %v896 = vsel %vm894, %v882, 0
  %v899 = vsel %vm894, %v886, 0
  %901 = vmatprep.subr.bf16.mxu0 0
  %902 = vmatpush1.bf16.xpose.msra.mxu0 %v899
  %903 = vmatprep.subr.bf16.mxu0 0
  %904 = vmatpush1.bf16.xpose.msra.mxu0 0
  %905 = vmatprep.subr.bf16.mxu0 0
  %906 = vmatpush1.bf16.xpose.msra.mxu0 0
  %907 = vmatprep.subr.bf16.mxu0 0
  %908 = vmatpush1.bf16.xpose.msra.mxu0 0
  %909 = vmatprep.subr.bf16.mxu0 0
  %910 = vmatpush1.bf16.xpose.msra.mxu0 0
  %911 = vmatprep.subr.bf16.mxu0 0
  %912 = vmatpush1.bf16.xpose.msra.mxu0 0
  %913 = vmatprep.subr.bf16.mxu0 0
  %914 = vmatpush1.bf16.xpose.msra.mxu0 0
  %915 = vmatprep.subr.bf16.mxu0 0
  %916 = vmatpush1.bf16.xpose.msra.mxu0 0
  %917 = vmatprep.subr.bf16.mxu0 0
  %918 = vmatpush1.bf16.xpose.msra.mxu0 0
  %919 = vmatprep.subr.bf16.mxu0 0
  %920 = vmatpush1.bf16.xpose.msra.mxu0 0
  %921 = vmatprep.subr.bf16.mxu0 0
  %922 = vmatpush1.bf16.xpose.msra.mxu0 0
  %923 = vmatprep.subr.bf16.mxu0 0
  %924 = vmatpush1.bf16.xpose.msra.mxu0 0
  %925 = vmatprep.subr.bf16.mxu0 0
  %926 = vmatpush1.bf16.xpose.msra.mxu0 0
  %927 = vmatprep.subr.bf16.mxu0 0
  %928 = vmatpush1.bf16.xpose.msra.mxu0 0
  %929 = vmatprep.subr.bf16.mxu0 0
  %930 = vmatpush1.bf16.xpose.msra.mxu0 0
  %931 = vmatprep.subr.bf16.mxu0 0
  %932 = vmatpush1.bf16.xpose.msra.mxu0 0
  %933 = vmatprep.mubr.bf16.mxu0 0
  %934 = vmatmul.mubr.bf16.gmra.mrb[0].mxu0 %v896
  %v935 = vpop.f32.mrb[0].mxu0
  %v936 = vadd.f32 %v145, %v935
  %v937 = vpop.f32.mrb[0].mxu0
  %v938 = vpop.f32.mrb[0].mxu0
  %v939 = vadd.f32 %v146, %v938
  %v940 = vpop.f32.mrb[0].mxu0
  %941 = vdwg.mxu0
  %v943 = vsel %vm894, %v883, 0
  %v946 = vsel %vm894, %v887, 0
  %948 = vmatprep.subr.bf16.mxu0 0
  %949 = vmatpush1.bf16.xpose.msra.mxu0 %v946
  %950 = vmatprep.subr.bf16.mxu0 0
  %951 = vmatpush1.bf16.xpose.msra.mxu0 0
  %952 = vmatprep.subr.bf16.mxu0 0
  %953 = vmatpush1.bf16.xpose.msra.mxu0 0
  %954 = vmatprep.subr.bf16.mxu0 0
  %955 = vmatpush1.bf16.xpose.msra.mxu0 0
  %956 = vmatprep.subr.bf16.mxu0 0
  %957 = vmatpush1.bf16.xpose.msra.mxu0 0
  %958 = vmatprep.subr.bf16.mxu0 0
  %959 = vmatpush1.bf16.xpose.msra.mxu0 0
  %960 = vmatprep.subr.bf16.mxu0 0
  %961 = vmatpush1.bf16.xpose.msra.mxu0 0
  %962 = vmatprep.subr.bf16.mxu0 0
  %963 = vmatpush1.bf16.xpose.msra.mxu0 0
  %964 = vmatprep.subr.bf16.mxu0 0
  %965 = vmatpush1.bf16.xpose.msra.mxu0 0
  %966 = vmatprep.subr.bf16.mxu0 0
  %967 = vmatpush1.bf16.xpose.msra.mxu0 0
  %968 = vmatprep.subr.bf16.mxu0 0
  %969 = vmatpush1.bf16.xpose.msra.mxu0 0
  %970 = vmatprep.subr.bf16.mxu0 0
  %971 = vmatpush1.bf16.xpose.msra.mxu0 0
  %972 = vmatprep.subr.bf16.mxu0 0
  %973 = vmatpush1.bf16.xpose.msra.mxu0 0
  %974 = vmatprep.subr.bf16.mxu0 0
  %975 = vmatpush1.bf16.xpose.msra.mxu0 0
  %976 = vmatprep.subr.bf16.mxu0 0
  %977 = vmatpush1.bf16.xpose.msra.mxu0 0
  %978 = vmatprep.subr.bf16.mxu0 0
  %979 = vmatpush1.bf16.xpose.msra.mxu0 0
  %980 = vmatprep.mubr.bf16.mxu0 0
  %981 = vmatmul.mubr.bf16.gmra.mrb[0].mxu0 %v943
  %v982 = vpop.f32.mrb[0].mxu0
  %v983 = vadd.f32 %v145, %v982
  %v984 = vpop.f32.mrb[0].mxu0
  %v985 = vpop.f32.mrb[0].mxu0
  %v986 = vadd.f32 %v146, %v985
  %v987 = vpop.f32.mrb[0].mxu0
  %988 = vdwg.mxu0
  %v990 = vsel %vm894, %v884, 0
  %v993 = vsel %vm894, %v888, 0
  %995 = vmatprep.subr.bf16.mxu0 0
  %996 = vmatpush1.bf16.xpose.msra.mxu0 %v993
  %997 = vmatprep.subr.bf16.mxu0 0
  %998 = vmatpush1.bf16.xpose.msra.mxu0 0
  %999 = vmatprep.subr.bf16.mxu0 0
  %1000 = vmatpush1.bf16.xpose.msra.mxu0 0
  %1001 = vmatprep.subr.bf16.mxu0 0
  %1002 = vmatpush1.bf16.xpose.msra.mxu0 0
  %1003 = vmatprep.subr.bf16.mxu0 0
  %1004 = vmatpush1.bf16.xpose.msra.mxu0 0
  %1005 = vmatprep.subr.bf16.mxu0 0
  %1006 = vmatpush1.bf16.xpose.msra.mxu0 0
  %1007 = vmatprep.subr.bf16.mxu0 0
  %1008 = vmatpush1.bf16.xpose.msra.mxu0 0
  %1009 = vmatprep.subr.bf16.mxu0 0
  %1010 = vmatpush1.bf16.xpose.msra.mxu0 0
  %1011 = vmatprep.subr.bf16.mxu0 0
  %1012 = vmatpush1.bf16.xpose.msra.mxu0 0
  %1013 = vmatprep.subr.bf16.mxu0 0
  %1014 = vmatpush1.bf16.xpose.msra.mxu0 0
  %1015 = vmatprep.subr.bf16.mxu0 0
  %1016 = vmatpush1.bf16.xpose.msra.mxu0 0
  %1017 = vmatprep.subr.bf16.mxu0 0
  %1018 = vmatpush1.bf16.xpose.msra.mxu0 0
  %1019 = vmatprep.subr.bf16.mxu0 0
  %1020 = vmatpush1.bf16.xpose.msra.mxu0 0
  %1021 = vmatprep.subr.bf16.mxu0 0
  %1022 = vmatpush1.bf16.xpose.msra.mxu0 0
  %1023 = vmatprep.subr.bf16.mxu0 0
  %1024 = vmatpush1.bf16.xpose.msra.mxu0 0
  %1025 = vmatprep.subr.bf16.mxu0 0
  %1026 = vmatpush1.bf16.xpose.msra.mxu0 0
  %1027 = vmatprep.mubr.bf16.mxu0 0
  %1028 = vmatmul.mubr.bf16.gmra.mrb[0].mxu0 %v990
  %v1029 = vpop.f32.mrb[0].mxu0
  %v1030 = vadd.f32 %v145, %v1029
  %v1031 = vpop.f32.mrb[0].mxu0
  %v1032 = vpop.f32.mrb[0].mxu0
  %v1033 = vadd.f32 %v146, %v1032
  %v1034 = vpop.f32.mrb[0].mxu0
  %1035 = vdwg.mxu0
  %v1037 = vsel %vm894, %v885, 0
  %v1040 = vsel %vm894, %v889, 0
  %1042 = vmatprep.subr.bf16.mxu0 0
  %1043 = vmatpush1.bf16.xpose.msra.mxu0 %v1040
  %1044 = vmatprep.subr.bf16.mxu0 0
  %1045 = vmatpush1.bf16.xpose.msra.mxu0 0
  %1046 = vmatprep.subr.bf16.mxu0 0
  %1047 = vmatpush1.bf16.xpose.msra.mxu0 0
  %1048 = vmatprep.subr.bf16.mxu0 0
  %1049 = vmatpush1.bf16.xpose.msra.mxu0 0
  %1050 = vmatprep.subr.bf16.mxu0 0
  %1051 = vmatpush1.bf16.xpose.msra.mxu0 0
  %1052 = vmatprep.subr.bf16.mxu0 0
  %1053 = vmatpush1.bf16.xpose.msra.mxu0 0
  %1054 = vmatprep.subr.bf16.mxu0 0
  %1055 = vmatpush1.bf16.xpose.msra.mxu0 0
  %1056 = vmatprep.subr.bf16.mxu0 0
  %1057 = vmatpush1.bf16.xpose.msra.mxu0 0
  %1058 = vmatprep.subr.bf16.mxu0 0
  %1059 = vmatpush1.bf16.xpose.msra.mxu0 0
  %1060 = vmatprep.subr.bf16.mxu0 0
  %1061 = vmatpush1.bf16.xpose.msra.mxu0 0
  %1062 = vmatprep.subr.bf16.mxu0 0
  %1063 = vmatpush1.bf16.xpose.msra.mxu0 0
  %1064 = vmatprep.subr.bf16.mxu0 0
  %1065 = vmatpush1.bf16.xpose.msra.mxu0 0
  %1066 = vmatprep.subr.bf16.mxu0 0
  %1067 = vmatpush1.bf16.xpose.msra.mxu0 0
  %1068 = vmatprep.subr.bf16.mxu0 0
  %1069 = vmatpush1.bf16.xpose.msra.mxu0 0
  %1070 = vmatprep.subr.bf16.mxu0 0
  %1071 = vmatpush1.bf16.xpose.msra.mxu0 0
  %1072 = vmatprep.subr.bf16.mxu0 0
  %1073 = vmatpush1.bf16.xpose.msra.mxu0 0
  %1074 = vmatprep.mubr.bf16.mxu0 0
  %1075 = vmatmul.mubr.bf16.gmra.mrb[0].mxu0 %v1037
  %v1076 = vpop.f32.mrb[0].mxu0
  %v1077 = vadd.f32 %v145, %v1076
  %v1078 = vpop.f32.mrb[0].mxu0
  %v1079 = vpop.f32.mrb[0].mxu0
  %v1080 = vadd.f32 %v146, %v1079
  %v1081 = vpop.f32.mrb[0].mxu0
  %1082 = vdwg.mxu0
  %vm1083 = vcmask 80896
  %v1084 = vsel %vm1083, %v936, -inf
  %1085 = vmax.xlane.f32.xlu0 %v1084
  %v1086 = vpop.xlane.xlu0 %1085
  %vm1087 = vcmask 74752
  %v1088 = vsel %vm1087, %v939, -inf
  %1089 = vmax.xlane.f32.xlu0 %v1088
  %v1090 = vpop.xlane.xlu0 %1089
  %v1091 = vsel %vm1083, %v983, -inf
  %1092 = vmax.xlane.f32.xlu0 %v1091
  %v1093 = vpop.xlane.xlu0 %1092
  %v1094 = vsel %vm1087, %v986, -inf
  %1095 = vmax.xlane.f32.xlu0 %v1094
  %v1096 = vpop.xlane.xlu0 %1095
  %v1097 = vsel %vm1083, %v1030, -inf
  %1098 = vmax.xlane.f32.xlu0 %v1097
  %v1099 = vpop.xlane.xlu0 %1098
  %v1100 = vsel %vm1087, %v1033, -inf
  %1101 = vmax.xlane.f32.xlu0 %v1100
  %v1102 = vpop.xlane.xlu0 %1101
  %v1103 = vsel %vm1083, %v1077, -inf
  %1104 = vmax.xlane.f32.xlu0 %v1103
  %v1105 = vpop.xlane.xlu0 %1104
  %v1106 = vsel %vm1087, %v1080, -inf
  %1107 = vmax.xlane.f32.xlu0 %v1106
  %v1108 = vpop.xlane.xlu0 %1107
  %v1109 = vsub.f32 %v936, %v1086
  %v1110 = vsub.f32 %v939, %v1090
  %v1111 = vsub.f32 %v983, %v1093
  %v1112 = vsub.f32 %v986, %v1096
  %v1113 = vsub.f32 %v1030, %v1099
  %v1114 = vsub.f32 %v1033, %v1102
  %v1115 = vsub.f32 %v1077, %v1105
  %v1116 = vsub.f32 %v1080, %v1108
  %v1117 = vmul.f32 %v1109, 1.442695
  %v1118 = vpow.pop %v1117
  %v1119 = vmul.f32 %v1110, 1.442695
  %v1120 = vpow.pop %v1119
  %v1121 = vmul.f32 %v1111, 1.442695
  %v1122 = vpow.pop %v1121
  %v1123 = vmul.f32 %v1112, 1.442695
  %v1124 = vpow.pop %v1123
  %v1125 = vmul.f32 %v1113, 1.442695
  %v1126 = vpow.pop %v1125
  %v1127 = vmul.f32 %v1114, 1.442695
  %v1128 = vpow.pop %v1127
  %v1129 = vmul.f32 %v1115, 1.442695
  %v1130 = vpow.pop %v1129
  %v1131 = vmul.f32 %v1116, 1.442695
  %v1132 = vpow.pop %v1131
  %v1133 = vsel %vm1083, %v1118, 0.0
  %1134 = vadd.xlane.f32.xlu0 %v1133
  %v1135 = vpop.xlane.xlu0 %1134
  %v1136 = vsel %vm1087, %v1120, 0.0
  %1137 = vadd.xlane.f32.xlu0 %v1136
  %v1138 = vpop.xlane.xlu0 %1137
  %v1139 = vsel %vm1083, %v1122, 0.0
  %1140 = vadd.xlane.f32.xlu0 %v1139
  %v1141 = vpop.xlane.xlu0 %1140
  %v1142 = vsel %vm1087, %v1124, 0.0
  %1143 = vadd.xlane.f32.xlu0 %v1142
  %v1144 = vpop.xlane.xlu0 %1143
  %v1145 = vsel %vm1083, %v1126, 0.0
  %1146 = vadd.xlane.f32.xlu0 %v1145
  %v1147 = vpop.xlane.xlu0 %1146
  %v1148 = vsel %vm1087, %v1128, 0.0
  %1149 = vadd.xlane.f32.xlu0 %v1148
  %v1150 = vpop.xlane.xlu0 %1149
  %v1151 = vsel %vm1083, %v1130, 0.0
  %1152 = vadd.xlane.f32.xlu0 %v1151
  %v1153 = vpop.xlane.xlu0 %1152
  %v1154 = vsel %vm1087, %v1132, 0.0
  %1155 = vadd.xlane.f32.xlu0 %v1154
  %v1156 = vpop.xlane.xlu0 %1155
  %v1157 = vrcp.pop %v1135
  %v1158 = vrcp.pop %v1138
  %v1159 = vrcp.pop %v1141
  %v1160 = vrcp.pop %v1144
  %v1161 = vrcp.pop %v1147
  %v1162 = vrcp.pop %v1150
  %v1163 = vrcp.pop %v1153
  %v1164 = vrcp.pop %v1156
  %v1165 = vmul.f32 %v1118, %v1157
  %v1166 = vmul.f32 %v1120, %v1158
  %v1167 = vmul.f32 %v1122, %v1159
  %v1168 = vmul.f32 %v1124, %v1160
  %v1169 = vmul.f32 %v1126, %v1161
  %v1170 = vmul.f32 %v1128, %v1162
  %v1171 = vmul.f32 %v1130, %v1163
  %v1172 = vmul.f32 %v1132, %v1164
  %v1173 = vpack.c.bf16 %v1166, %v1165
  %v1174 = vpack.c.bf16 %v1168, %v1167
  %v1175 = vpack.c.bf16 %v1170, %v1169
  %v1176 = vpack.c.bf16 %v1172, %v1171
  %v1178 = vsel %vm1083, %v1173, 0
  %vm1180 = vcmask 1044480
  %v1182 = vsel %vm1180, %v890, 0
  %1184 = vmatprep.subr.bf16.mxu0 0
  %1185 = vmatpush1.bf16.msra.mxu0 %v1182
  %1186 = vmatprep.subr.bf16.mxu0 0
  %1187 = vmatpush1.bf16.msra.mxu0 0
  %1188 = vmatprep.subr.bf16.mxu0 0
  %1189 = vmatpush1.bf16.msra.mxu0 0
  %1190 = vmatprep.subr.bf16.mxu0 0
  %1191 = vmatpush1.bf16.msra.mxu0 0
  %1192 = vmatprep.subr.bf16.mxu0 0
  %1193 = vmatpush1.bf16.msra.mxu0 0
  %1194 = vmatprep.subr.bf16.mxu0 0
  %1195 = vmatpush1.bf16.msra.mxu0 0
  %1196 = vmatprep.subr.bf16.mxu0 0
  %1197 = vmatpush1.bf16.msra.mxu0 0
  %1198 = vmatprep.subr.bf16.mxu0 0
  %1199 = vmatpush1.bf16.msra.mxu0 0
  %1200 = vmatprep.subr.bf16.mxu0 0
  %1201 = vmatpush1.bf16.msra.mxu0 0
  %1202 = vmatprep.subr.bf16.mxu0 0
  %1203 = vmatpush1.bf16.msra.mxu0 0
  %1204 = vmatprep.subr.bf16.mxu0 0
  %1205 = vmatpush1.bf16.msra.mxu0 0
  %1206 = vmatprep.subr.bf16.mxu0 0
  %1207 = vmatpush1.bf16.msra.mxu0 0
  %1208 = vmatprep.subr.bf16.mxu0 0
  %1209 = vmatpush1.bf16.msra.mxu0 0
  %1210 = vmatprep.subr.bf16.mxu0 0
  %1211 = vmatpush1.bf16.msra.mxu0 0
  %1212 = vmatprep.subr.bf16.mxu0 0
  %1213 = vmatpush1.bf16.msra.mxu0 0
  %1214 = vmatprep.subr.bf16.mxu0 0
  %1215 = vmatpush1.bf16.msra.mxu0 0
  %1216 = vmatprep.mubr.bf16.mxu0 0
  %1217 = vmatmul.mubr.bf16.gmra.mrb[0].mxu0 %v1178
  %v1218 = vpop.f32.mrb[0].mxu0
  %v1219 = vadd.f32 0.0, %v1218
  %v1220 = vpop.f32.mrb[0].mxu0
  %v1221 = vpop.f32.mrb[0].mxu0
  %v1222 = vadd.f32 0.0, %v1221
  %v1223 = vpop.f32.mrb[0].mxu0
  %1224 = vdwg.mxu0
  %v1226 = vsel %vm1083, %v1174, 0
  %v1229 = vsel %vm1180, %v891, 0
  %1231 = vmatprep.subr.bf16.mxu0 0
  %1232 = vmatpush1.bf16.msra.mxu0 %v1229
  %1233 = vmatprep.subr.bf16.mxu0 0
  %1234 = vmatpush1.bf16.msra.mxu0 0
  %1235 = vmatprep.subr.bf16.mxu0 0
  %1236 = vmatpush1.bf16.msra.mxu0 0
  %1237 = vmatprep.subr.bf16.mxu0 0
  %1238 = vmatpush1.bf16.msra.mxu0 0
  %1239 = vmatprep.subr.bf16.mxu0 0
  %1240 = vmatpush1.bf16.msra.mxu0 0
  %1241 = vmatprep.subr.bf16.mxu0 0
  %1242 = vmatpush1.bf16.msra.mxu0 0
  %1243 = vmatprep.subr.bf16.mxu0 0
  %1244 = vmatpush1.bf16.msra.mxu0 0
  %1245 = vmatprep.subr.bf16.mxu0 0
  %1246 = vmatpush1.bf16.msra.mxu0 0
  %1247 = vmatprep.subr.bf16.mxu0 0
  %1248 = vmatpush1.bf16.msra.mxu0 0
  %1249 = vmatprep.subr.bf16.mxu0 0
  %1250 = vmatpush1.bf16.msra.mxu0 0
  %1251 = vmatprep.subr.bf16.mxu0 0
  %1252 = vmatpush1.bf16.msra.mxu0 0
  %1253 = vmatprep.subr.bf16.mxu0 0
  %1254 = vmatpush1.bf16.msra.mxu0 0
  %1255 = vmatprep.subr.bf16.mxu0 0
  %1256 = vmatpush1.bf16.msra.mxu0 0
  %1257 = vmatprep.subr.bf16.mxu0 0
  %1258 = vmatpush1.bf16.msra.mxu0 0
  %1259 = vmatprep.subr.bf16.mxu0 0
  %1260 = vmatpush1.bf16.msra.mxu0 0
  %1261 = vmatprep.subr.bf16.mxu0 0
  %1262 = vmatpush1.bf16.msra.mxu0 0
  %1263 = vmatprep.mubr.bf16.mxu0 0
  %1264 = vmatmul.mubr.bf16.gmra.mrb[0].mxu0 %v1226
  %v1265 = vpop.f32.mrb[0].mxu0
  %v1266 = vadd.f32 0.0, %v1265
  %v1267 = vpop.f32.mrb[0].mxu0
  %v1268 = vpop.f32.mrb[0].mxu0
  %v1269 = vadd.f32 0.0, %v1268
  %v1270 = vpop.f32.mrb[0].mxu0
  %1271 = vdwg.mxu0
  %v1273 = vsel %vm1083, %v1175, 0
  %v1276 = vsel %vm1180, %v892, 0
  %1278 = vmatprep.subr.bf16.mxu0 0
  %1279 = vmatpush1.bf16.msra.mxu0 %v1276
  %1280 = vmatprep.subr.bf16.mxu0 0
  %1281 = vmatpush1.bf16.msra.mxu0 0
  %1282 = vmatprep.subr.bf16.mxu0 0
  %1283 = vmatpush1.bf16.msra.mxu0 0
  %1284 = vmatprep.subr.bf16.mxu0 0
  %1285 = vmatpush1.bf16.msra.mxu0 0
  %1286 = vmatprep.subr.bf16.mxu0 0
  %1287 = vmatpush1.bf16.msra.mxu0 0
  %1288 = vmatprep.subr.bf16.mxu0 0
  %1289 = vmatpush1.bf16.msra.mxu0 0
  %1290 = vmatprep.subr.bf16.mxu0 0
  %1291 = vmatpush1.bf16.msra.mxu0 0
  %1292 = vmatprep.subr.bf16.mxu0 0
  %1293 = vmatpush1.bf16.msra.mxu0 0
  %1294 = vmatprep.subr.bf16.mxu0 0
  %1295 = vmatpush1.bf16.msra.mxu0 0
  %1296 = vmatprep.subr.bf16.mxu0 0
  %1297 = vmatpush1.bf16.msra.mxu0 0
  %1298 = vmatprep.subr.bf16.mxu0 0
  %1299 = vmatpush1.bf16.msra.mxu0 0
  %1300 = vmatprep.subr.bf16.mxu0 0
  %1301 = vmatpush1.bf16.msra.mxu0 0
  %1302 = vmatprep.subr.bf16.mxu0 0
  %1303 = vmatpush1.bf16.msra.mxu0 0
  %1304 = vmatprep.subr.bf16.mxu0 0
  %1305 = vmatpush1.bf16.msra.mxu0 0
  %1306 = vmatprep.subr.bf16.mxu0 0
  %1307 = vmatpush1.bf16.msra.mxu0 0
  %1308 = vmatprep.subr.bf16.mxu0 0
  %1309 = vmatpush1.bf16.msra.mxu0 0
  %1310 = vmatprep.mubr.bf16.mxu0 0
  %1311 = vmatmul.mubr.bf16.gmra.mrb[0].mxu0 %v1273
  %v1312 = vpop.f32.mrb[0].mxu0
  %v1313 = vadd.f32 0.0, %v1312
  %v1314 = vpop.f32.mrb[0].mxu0
  %v1315 = vpop.f32.mrb[0].mxu0
  %v1316 = vadd.f32 0.0, %v1315
  %v1317 = vpop.f32.mrb[0].mxu0
  %1318 = vdwg.mxu0
  %v1320 = vsel %vm1083, %v1176, 0
  %v1323 = vsel %vm1180, %v893, 0
  %1325 = vmatprep.subr.bf16.mxu0 0
  %1326 = vmatpush1.bf16.msra.mxu0 %v1323
  %1327 = vmatprep.subr.bf16.mxu0 0
  %1328 = vmatpush1.bf16.msra.mxu0 0
  %1329 = vmatprep.subr.bf16.mxu0 0
  %1330 = vmatpush1.bf16.msra.mxu0 0
  %1331 = vmatprep.subr.bf16.mxu0 0
  %1332 = vmatpush1.bf16.msra.mxu0 0
  %1333 = vmatprep.subr.bf16.mxu0 0
  %1334 = vmatpush1.bf16.msra.mxu0 0
  %1335 = vmatprep.subr.bf16.mxu0 0
  %1336 = vmatpush1.bf16.msra.mxu0 0
  %1337 = vmatprep.subr.bf16.mxu0 0
  %1338 = vmatpush1.bf16.msra.mxu0 0
  %1339 = vmatprep.subr.bf16.mxu0 0
  %1340 = vmatpush1.bf16.msra.mxu0 0
  %1341 = vmatprep.subr.bf16.mxu0 0
  %1342 = vmatpush1.bf16.msra.mxu0 0
  %1343 = vmatprep.subr.bf16.mxu0 0
  %1344 = vmatpush1.bf16.msra.mxu0 0
  %1345 = vmatprep.subr.bf16.mxu0 0
  %1346 = vmatpush1.bf16.msra.mxu0 0
  %1347 = vmatprep.subr.bf16.mxu0 0
  %1348 = vmatpush1.bf16.msra.mxu0 0
  %1349 = vmatprep.subr.bf16.mxu0 0
  %1350 = vmatpush1.bf16.msra.mxu0 0
  %1351 = vmatprep.subr.bf16.mxu0 0
  %1352 = vmatpush1.bf16.msra.mxu0 0
  %1353 = vmatprep.subr.bf16.mxu0 0
  %1354 = vmatpush1.bf16.msra.mxu0 0
  %1355 = vmatprep.subr.bf16.mxu0 0
  %1356 = vmatpush1.bf16.msra.mxu0 0
  %1357 = vmatprep.mubr.bf16.mxu0 0
  %1358 = vmatmul.mubr.bf16.gmra.mrb[0].mxu0 %v1320
  %v1359 = vpop.f32.mrb[0].mxu0
  %v1360 = vadd.f32 0.0, %v1359
  %v1361 = vpop.f32.mrb[0].mxu0
  %v1362 = vpop.f32.mrb[0].mxu0
  %v1363 = vadd.f32 0.0, %v1362
  %v1364 = vpop.f32.mrb[0].mxu0
  %1365 = vdwg.mxu0
  %v1366 = vpack.c.bf16 %v1222, %v1219
  %v1367 = vpack.c.bf16 %v1269, %v1266
  %v1368 = vpack.c.bf16 %v1316, %v1313
  %v1369 = vpack.c.bf16 %v1363, %v1360
  %v1370 = vld [vmem:[%s7] sm:$0xf]
  %v1371 = vld [vmem:[%s7 + $0x4] sm:$0xf]
  %v1372 = vld [vmem:[%s7 + $0x8] sm:$0xf]
  %v1373 = vld [vmem:[%s7 + $0xc] sm:$0xf]
  %v1375 = vsel %vm894, %v1366, 0
  %vm1377 = vcmask 1043456
  %v1379 = vsel %vm1377, %v1370, 0
  %1381 = vmatprep.subr.bf16.mxu0 0
  %1382 = vmatpush1.bf16.msra.mxu0 %v1379
  %1383 = vmatprep.subr.bf16.mxu0 0
  %1384 = vmatpush1.bf16.msra.mxu0 0
  %1385 = vmatprep.subr.bf16.mxu0 0
  %1386 = vmatpush1.bf16.msra.mxu0 0
  %1387 = vmatprep.subr.bf16.mxu0 0
  %1388 = vmatpush1.bf16.msra.mxu0 0
  %1389 = vmatprep.subr.bf16.mxu0 0
  %1390 = vmatpush1.bf16.msra.mxu0 0
  %1391 = vmatprep.subr.bf16.mxu0 0
  %1392 = vmatpush1.bf16.msra.mxu0 0
  %1393 = vmatprep.subr.bf16.mxu0 0
  %1394 = vmatpush1.bf16.msra.mxu0 0
  %1395 = vmatprep.subr.bf16.mxu0 0
  %1396 = vmatpush1.bf16.msra.mxu0 0
  %1397 = vmatprep.subr.bf16.mxu0 0
  %1398 = vmatpush1.bf16.msra.mxu0 0
  %1399 = vmatprep.subr.bf16.mxu0 0
  %1400 = vmatpush1.bf16.msra.mxu0 0
  %1401 = vmatprep.subr.bf16.mxu0 0
  %1402 = vmatpush1.bf16.msra.mxu0 0
  %1403 = vmatprep.subr.bf16.mxu0 0
  %1404 = vmatpush1.bf16.msra.mxu0 0
  %1405 = vmatprep.subr.bf16.mxu0 0
  %1406 = vmatpush1.bf16.msra.mxu0 0
  %1407 = vmatprep.subr.bf16.mxu0 0
  %1408 = vmatpush1.bf16.msra.mxu0 0
  %1409 = vmatprep.subr.bf16.mxu0 0
  %1410 = vmatpush1.bf16.msra.mxu0 0
  %1411 = vmatprep.subr.bf16.mxu0 0
  %1412 = vmatpush1.bf16.msra.mxu0 0
  %1413 = vmatprep.mubr.bf16.mxu0 0
  %1414 = vmatmul.mubr.bf16.gmra.mrb[0].mxu0 %v1375
  %v1415 = vpop.f32.mrb[0].mxu0
  %v1416 = vadd.f32 0.0, %v1415
  %v1417 = vpop.f32.mrb[0].mxu0
  %v1418 = vpop.f32.mrb[0].mxu0
  %v1419 = vadd.f32 0.0, %v1418
  %v1420 = vpop.f32.mrb[0].mxu0
  %1421 = vdwg.mxu0
  %v1423 = vsel %vm894, %v1367, 0
  %v1426 = vsel %vm1377, %v1371, 0
  %1428 = vmatprep.subr.bf16.mxu0 0
  %1429 = vmatpush1.bf16.msra.mxu0 %v1426
  %1430 = vmatprep.subr.bf16.mxu0 0
  %1431 = vmatpush1.bf16.msra.mxu0 0
  %1432 = vmatprep.subr.bf16.mxu0 0
  %1433 = vmatpush1.bf16.msra.mxu0 0
  %1434 = vmatprep.subr.bf16.mxu0 0
  %1435 = vmatpush1.bf16.msra.mxu0 0
  %1436 = vmatprep.subr.bf16.mxu0 0
  %1437 = vmatpush1.bf16.msra.mxu0 0
  %1438 = vmatprep.subr.bf16.mxu0 0
  %1439 = vmatpush1.bf16.msra.mxu0 0
  %1440 = vmatprep.subr.bf16.mxu0 0
  %1441 = vmatpush1.bf16.msra.mxu0 0
  %1442 = vmatprep.subr.bf16.mxu0 0
  %1443 = vmatpush1.bf16.msra.mxu0 0
  %1444 = vmatprep.subr.bf16.mxu0 0
  %1445 = vmatpush1.bf16.msra.mxu0 0
  %1446 = vmatprep.subr.bf16.mxu0 0
  %1447 = vmatpush1.bf16.msra.mxu0 0
  %1448 = vmatprep.subr.bf16.mxu0 0
  %1449 = vmatpush1.bf16.msra.mxu0 0
  %1450 = vmatprep.subr.bf16.mxu0 0
  %1451 = vmatpush1.bf16.msra.mxu0 0
  %1452 = vmatprep.subr.bf16.mxu0 0
  %1453 = vmatpush1.bf16.msra.mxu0 0
  %1454 = vmatprep.subr.bf16.mxu0 0
  %1455 = vmatpush1.bf16.msra.mxu0 0
  %1456 = vmatprep.subr.bf16.mxu0 0
  %1457 = vmatpush1.bf16.msra.mxu0 0
  %1458 = vmatprep.subr.bf16.mxu0 0
  %1459 = vmatpush1.bf16.msra.mxu0 0
  %1460 = vmatprep.mubr.bf16.mxu0 0
  %1461 = vmatmul.mubr.bf16.gmra.mrb[0].mxu0 %v1423
  %v1462 = vpop.f32.mrb[0].mxu0
  %v1463 = vadd.f32 0.0, %v1462
  %v1464 = vpop.f32.mrb[0].mxu0
  %v1465 = vpop.f32.mrb[0].mxu0
  %v1466 = vadd.f32 0.0, %v1465
  %v1467 = vpop.f32.mrb[0].mxu0
  %1468 = vdwg.mxu0
  %v1470 = vsel %vm894, %v1368, 0
  %v1473 = vsel %vm1377, %v1372, 0
  %1475 = vmatprep.subr.bf16.mxu0 0
  %1476 = vmatpush1.bf16.msra.mxu0 %v1473
  %1477 = vmatprep.subr.bf16.mxu0 0
  %1478 = vmatpush1.bf16.msra.mxu0 0
  %1479 = vmatprep.subr.bf16.mxu0 0
  %1480 = vmatpush1.bf16.msra.mxu0 0
  %1481 = vmatprep.subr.bf16.mxu0 0
  %1482 = vmatpush1.bf16.msra.mxu0 0
  %1483 = vmatprep.subr.bf16.mxu0 0
  %1484 = vmatpush1.bf16.msra.mxu0 0
  %1485 = vmatprep.subr.bf16.mxu0 0
  %1486 = vmatpush1.bf16.msra.mxu0 0
  %1487 = vmatprep.subr.bf16.mxu0 0
  %1488 = vmatpush1.bf16.msra.mxu0 0
  %1489 = vmatprep.subr.bf16.mxu0 0
  %1490 = vmatpush1.bf16.msra.mxu0 0
  %1491 = vmatprep.subr.bf16.mxu0 0
  %1492 = vmatpush1.bf16.msra.mxu0 0
  %1493 = vmatprep.subr.bf16.mxu0 0
  %1494 = vmatpush1.bf16.msra.mxu0 0
  %1495 = vmatprep.subr.bf16.mxu0 0
  %1496 = vmatpush1.bf16.msra.mxu0 0
  %1497 = vmatprep.subr.bf16.mxu0 0
  %1498 = vmatpush1.bf16.msra.mxu0 0
  %1499 = vmatprep.subr.bf16.mxu0 0
  %1500 = vmatpush1.bf16.msra.mxu0 0
  %1501 = vmatprep.subr.bf16.mxu0 0
  %1502 = vmatpush1.bf16.msra.mxu0 0
  %1503 = vmatprep.subr.bf16.mxu0 0
  %1504 = vmatpush1.bf16.msra.mxu0 0
  %1505 = vmatprep.subr.bf16.mxu0 0
  %1506 = vmatpush1.bf16.msra.mxu0 0
  %1507 = vmatprep.mubr.bf16.mxu0 0
  %1508 = vmatmul.mubr.bf16.gmra.mrb[0].mxu0 %v1470
  %v1509 = vpop.f32.mrb[0].mxu0
  %v1510 = vadd.f32 0.0, %v1509
  %v1511 = vpop.f32.mrb[0].mxu0
  %v1512 = vpop.f32.mrb[0].mxu0
  %v1513 = vadd.f32 0.0, %v1512
  %v1514 = vpop.f32.mrb[0].mxu0
  %1515 = vdwg.mxu0
  %v1517 = vsel %vm894, %v1369, 0
  %v1520 = vsel %vm1377, %v1373, 0
  %1522 = vmatprep.subr.bf16.mxu0 0
  %1523 = vmatpush1.bf16.msra.mxu0 %v1520
  %1524 = vmatprep.subr.bf16.mxu0 0
  %1525 = vmatpush1.bf16.msra.mxu0 0
  %1526 = vmatprep.subr.bf16.mxu0 0
  %1527 = vmatpush1.bf16.msra.mxu0 0
  %1528 = vmatprep.subr.bf16.mxu0 0
  %1529 = vmatpush1.bf16.msra.mxu0 0
  %1530 = vmatprep.subr.bf16.mxu0 0
  %1531 = vmatpush1.bf16.msra.mxu0 0
  %1532 = vmatprep.subr.bf16.mxu0 0
  %1533 = vmatpush1.bf16.msra.mxu0 0
  %1534 = vmatprep.subr.bf16.mxu0 0
  %1535 = vmatpush1.bf16.msra.mxu0 0
  %1536 = vmatprep.subr.bf16.mxu0 0
  %1537 = vmatpush1.bf16.msra.mxu0 0
  %1538 = vmatprep.subr.bf16.mxu0 0
  %1539 = vmatpush1.bf16.msra.mxu0 0
  %1540 = vmatprep.subr.bf16.mxu0 0
  %1541 = vmatpush1.bf16.msra.mxu0 0
  %1542 = vmatprep.subr.bf16.mxu0 0
  %1543 = vmatpush1.bf16.msra.mxu0 0
  %1544 = vmatprep.subr.bf16.mxu0 0
  %1545 = vmatpush1.bf16.msra.mxu0 0
  %1546 = vmatprep.subr.bf16.mxu0 0
  %1547 = vmatpush1.bf16.msra.mxu0 0
  %1548 = vmatprep.subr.bf16.mxu0 0
  %1549 = vmatpush1.bf16.msra.mxu0 0
  %1550 = vmatprep.subr.bf16.mxu0 0
  %1551 = vmatpush1.bf16.msra.mxu0 0
  %1552 = vmatprep.subr.bf16.mxu0 0
  %1553 = vmatpush1.bf16.msra.mxu0 0
  %1554 = vmatprep.mubr.bf16.mxu0 0
  %1555 = vmatmul.mubr.bf16.gmra.mrb[0].mxu0 %v1517
  %v1556 = vpop.f32.mrb[0].mxu0
  %v1557 = vadd.f32 0.0, %v1556
  %v1558 = vpop.f32.mrb[0].mxu0
  %v1559 = vpop.f32.mrb[0].mxu0
  %v1560 = vadd.f32 0.0, %v1559
  %v1561 = vpop.f32.mrb[0].mxu0
  %1562 = vdwg.mxu0
  %v1563 = vadd.f32 %v1416, %v1463
  %v1564 = vadd.f32 %v1419, %v1466
  %v1565 = vadd.f32 %v1563, %v1510
  %v1566 = vadd.f32 %v1564, %v1513
  %v1567 = vadd.f32 %v1565, %v1557
  %v1568 = vadd.f32 %v1566, %v1560
  %v1569 = vadd.f32 %v143, %v1567
  %v1570 = vadd.f32 %v144, %v1568
  %v1571 = vld [vmem:[%s8] sm:$0x1]
  %v1573 = vlaneseq
  %v1574 = vshrl.u32 %v1573, 7
  %v1575 = vsub.s32 0, %v1574
  %v1576 = vrot.slane %v1571, %v1575
  %v1578 = vadd.f32 %v1569, %v1576
  %v1579 = vadd.f32 %v1570, %v1576
  %v1580 = vld [vmem:[%s9] sm:$0x1]
  %v1581 = vld [vmem:[%s10] sm:$0x1]
  %v1582 = vsel %vm149, %v1578, 0.0
  %1583 = vadd.xlane.f32.xlu0 %v1582
  %v1584 = vpop.xlane.xlu0 %1583
  %v1585 = vsel %vm153, %v1579, 0.0
  %1586 = vadd.xlane.f32.xlu0 %v1585
  %v1587 = vpop.xlane.xlu0 %1586
  %v1588 = vmul.f32 %v1584, %v157
  %v1589 = vmul.f32 %v1587, %v157
  %v1590 = vsub.f32 %v1578, %v1588
  %v1591 = vsub.f32 %v1579, %v1589
  %v1592 = vmul.f32 %v1590, %v1590
  %v1593 = vmul.f32 %v1591, %v1591
  %v1594 = vsel %vm149, %v1592, 0.0
  %1595 = vadd.xlane.f32.xlu0 %v1594
  %v1596 = vpop.xlane.xlu0 %1595
  %v1597 = vsel %vm153, %v1593, 0.0
  %1598 = vadd.xlane.f32.xlu0 %v1597
  %v1599 = vpop.xlane.xlu0 %1598
  %v1600 = vmul.f32 %v1596, %v157
  %v1601 = vmul.f32 %v1599, %v157
  %v1602 = vadd.f32 %v1600, 1e-05
  %v1603 = vadd.f32 %v1601, 1e-05
  %v1604 = vrsqrt.pop %v1602
  %v1605 = vrsqrt.pop %v1603
  %v1606 = vmul.f32 %v1590, %v1604
  %v1607 = vmul.f32 %v1591, %v1605
  %v1609 = vlaneseq
  %v1610 = vshrl.u32 %v1609, 7
  %v1611 = vsub.s32 0, %v1610
  %v1612 = vrot.slane %v1580, %v1611
  %v1614 = vmul.f32 %v1606, %v1612
  %v1615 = vmul.f32 %v1607, %v1612
  %v1617 = vlaneseq
  %v1618 = vshrl.u32 %v1617, 7
  %v1619 = vsub.s32 0, %v1618
  %v1620 = vrot.slane %v1581, %v1619
  %v1622 = vadd.f32 %v1614, %v1620
  %v1623 = vadd.f32 %v1615, %v1620
  %v1624 = vpack.c.bf16 %v1623, %v1622
  %v1625 = vld [vmem:[%s11] sm:$0xf]
  %v1626 = vld [vmem:[%s11 + $0x4] sm:$0xf]
  %v1627 = vld [vmem:[%s11 + $0x8] sm:$0xf]
  %v1628 = vld [vmem:[%s11 + $0xc] sm:$0xf]
  %v1629 = vld [vmem:[%s12] sm:$0x1]
  %v1631 = vlaneseq
  %v1632 = vshrl.u32 %v1631, 7
  %v1633 = vsub.s32 0, %v1632
  %v1634 = vrot.slane %v1629, %v1633
  %v1640 = vunpack.c.l.b16 %v1625
  %v1641 = vunpack.c.l.b16 %v1626
  %v1642 = vunpack.c.l.b16 %v1627
  %v1643 = vunpack.c.l.b16 %v1628
  %v1644 = vpack.c.b16 %v1641, %v1640
  %v1645 = vpack.c.b16 %v1643, %v1642
  %v1649 = vsel %vm149, %v1624, 0
  %1651 = vmatprep.subr.bf16.mxu0 0
  %1652 = vmatpush1.bf16.msra.mxu0 %v1644
  %1653 = vmatprep.subr.bf16.mxu0 0
  %1654 = vmatpush1.bf16.msra.mxu0 %v1645
  %1655 = vmatprep.subr.bf16.mxu0 0
  %1656 = vmatpush1.bf16.msra.mxu0 0
  %1657 = vmatprep.subr.bf16.mxu0 0
  %1658 = vmatpush1.bf16.msra.mxu0 0
  %1659 = vmatprep.subr.bf16.mxu0 0
  %1660 = vmatpush1.bf16.msra.mxu0 0
  %1661 = vmatprep.subr.bf16.mxu0 0
  %1662 = vmatpush1.bf16.msra.mxu0 0
  %1663 = vmatprep.subr.bf16.mxu0 0
  %1664 = vmatpush1.bf16.msra.mxu0 0
  %1665 = vmatprep.subr.bf16.mxu0 0
  %1666 = vmatpush1.bf16.msra.mxu0 0
  %1667 = vmatprep.subr.bf16.mxu0 0
  %1668 = vmatpush1.bf16.msra.mxu0 0
  %1669 = vmatprep.subr.bf16.mxu0 0
  %1670 = vmatpush1.bf16.msra.mxu0 0
  %1671 = vmatprep.subr.bf16.mxu0 0
  %1672 = vmatpush1.bf16.msra.mxu0 0
  %1673 = vmatprep.subr.bf16.mxu0 0
  %1674 = vmatpush1.bf16.msra.mxu0 0
  %1675 = vmatprep.subr.bf16.mxu0 0
  %1676 = vmatpush1.bf16.msra.mxu0 0
  %1677 = vmatprep.subr.bf16.mxu0 0
  %1678 = vmatpush1.bf16.msra.mxu0 0
  %1679 = vmatprep.subr.bf16.mxu0 0
  %1680 = vmatpush1.bf16.msra.mxu0 0
  %1681 = vmatprep.subr.bf16.mxu0 0
  %1682 = vmatpush1.bf16.msra.mxu0 0
  %1683 = vmatprep.mubr.bf16.mxu0 0
  %1684 = vmatmul.mubr.bf16.gmra.mrb[0].mxu0 %v1649
  %v1685 = vpop.f32.mrb[0].mxu0
  %v1686 = vadd.f32 %v1634, %v1685
  %v1687 = vpop.f32.mrb[0].mxu0
  %v1688 = vpop.f32.mrb[0].mxu0
  %v1689 = vadd.f32 %v1634, %v1688
  %v1690 = vpop.f32.mrb[0].mxu0
  %1691 = vdwg.mxu0
  %v1692 = vmul.f32 %v1686, %v1686
  %v1693 = vmul.f32 %v1689, %v1689
  %v1694 = vmul.f32 %v1686, %v1692
  %v1695 = vmul.f32 %v1689, %v1693
  %v1696 = vmul.f32 %v1694, 0.044715
  %v1697 = vmul.f32 %v1695, 0.044715
  %v1698 = vadd.f32 %v1686, %v1696
  %v1699 = vadd.f32 %v1689, %v1697
  %v1700 = vmul.f32 %v1698, 0.7978846
  %v1701 = vmul.f32 %v1699, 0.7978846
  %v1702 = vtanh.pop %v1700
  %v1703 = vtanh.pop %v1701
  %v1704 = vadd.f32 %v1702, 1.0
  %v1705 = vadd.f32 %v1703, 1.0
  %v1706 = vmul.f32 %v1704, 0.5
  %v1707 = vmul.f32 %v1705, 0.5
  %v1708 = vmul.f32 %v1686, %v1706
  %v1709 = vmul.f32 %v1689, %v1707
  %v1710 = vpack.c.bf16 %v1709, %v1708
  %v1711 = vld [vmem:[%s13] sm:$0xf]
  %v1712 = vld [vmem:[%s13 + $0x4] sm:$0xf]
  %v1713 = vld [vmem:[%s13 + $0x8] sm:$0xf]
  %v1714 = vld [vmem:[%s13 + $0xc] sm:$0xf]
  %v1715 = vld [vmem:[%s13 + $0x10] sm:$0xf]
  %v1716 = vld [vmem:[%s13 + $0x14] sm:$0xf]
  %v1717 = vld [vmem:[%s13 + $0x18] sm:$0xf]
  %v1718 = vld [vmem:[%s13 + $0x1c] sm:$0xf]
  %v1719 = vld [vmem:[%s13 + $0x20] sm:$0xf]
  %v1720 = vld [vmem:[%s13 + $0x24] sm:$0xf]
  %v1721 = vld [vmem:[%s13 + $0x28] sm:$0xf]
  %v1722 = vld [vmem:[%s13 + $0x2c] sm:$0xf]
  %v1723 = vld [vmem:[%s13 + $0x30] sm:$0xf]
  %v1724 = vld [vmem:[%s13 + $0x34] sm:$0xf]
  %v1725 = vld [vmem:[%s13 + $0x38] sm:$0xf]
  %v1726 = vld [vmem:[%s13 + $0x3c] sm:$0xf]
  %v1743 = vunpack.c.l.b16 %v1711
  %v1744 = vunpack.c.l.b16 %v1712
  %v1745 = vunpack.c.l.b16 %v1713
  %v1746 = vunpack.c.l.b16 %v1714
  %v1747 = vunpack.c.l.b16 %v1715
  %v1748 = vunpack.c.l.b16 %v1716
  %v1749 = vunpack.c.l.b16 %v1717
  %v1750 = vunpack.c.l.b16 %v1718
  %v1751 = vunpack.c.l.b16 %v1719
  %v1752 = vunpack.c.l.b16 %v1720
  %v1753 = vunpack.c.l.b16 %v1721
  %v1754 = vunpack.c.l.b16 %v1722
  %v1755 = vunpack.c.l.b16 %v1723
  %v1756 = vunpack.c.l.b16 %v1724
  %v1757 = vunpack.c.l.b16 %v1725
  %v1758 = vunpack.c.l.b16 %v1726
  %v1759 = vpack.c.b16 %v1744, %v1743
  %v1760 = vpack.c.b16 %v1746, %v1745
  %v1761 = vpack.c.b16 %v1748, %v1747
  %v1762 = vpack.c.b16 %v1750, %v1749
  %v1763 = vpack.c.b16 %v1752, %v1751
  %v1764 = vpack.c.b16 %v1754, %v1753
  %v1765 = vpack.c.b16 %v1756, %v1755
  %v1766 = vpack.c.b16 %v1758, %v1757
  %1775 = vmatprep.subr.bf16.mxu0 0
  %1776 = vmatpush1.bf16.msra.mxu0 %v1759
  %1777 = vmatprep.subr.bf16.mxu0 0
  %1778 = vmatpush1.bf16.msra.mxu0 %v1760
  %1779 = vmatprep.subr.bf16.mxu0 0
  %1780 = vmatpush1.bf16.msra.mxu0 %v1761
  %1781 = vmatprep.subr.bf16.mxu0 0
  %1782 = vmatpush1.bf16.msra.mxu0 %v1762
  %1783 = vmatprep.subr.bf16.mxu0 0
  %1784 = vmatpush1.bf16.msra.mxu0 %v1763
  %1785 = vmatprep.subr.bf16.mxu0 0
  %1786 = vmatpush1.bf16.msra.mxu0 %v1764
  %1787 = vmatprep.subr.bf16.mxu0 0
  %1788 = vmatpush1.bf16.msra.mxu0 %v1765
  %1789 = vmatprep.subr.bf16.mxu0 0
  %1790 = vmatpush1.bf16.msra.mxu0 %v1766
  %1791 = vmatprep.subr.bf16.mxu0 0
  %1792 = vmatpush1.bf16.msra.mxu0 0
  %1793 = vmatprep.subr.bf16.mxu0 0
  %1794 = vmatpush1.bf16.msra.mxu0 0
  %1795 = vmatprep.subr.bf16.mxu0 0
  %1796 = vmatpush1.bf16.msra.mxu0 0
  %1797 = vmatprep.subr.bf16.mxu0 0
  %1798 = vmatpush1.bf16.msra.mxu0 0
  %1799 = vmatprep.subr.bf16.mxu0 0
  %1800 = vmatpush1.bf16.msra.mxu0 0
  %1801 = vmatprep.subr.bf16.mxu0 0
  %1802 = vmatpush1.bf16.msra.mxu0 0
  %1803 = vmatprep.subr.bf16.mxu0 0
  %1804 = vmatpush1.bf16.msra.mxu0 0
  %1805 = vmatprep.subr.bf16.mxu0 0
  %1806 = vmatpush1.bf16.msra.mxu0 0
  %1807 = vmatprep.mubr.bf16.mxu0 0
  %1808 = vmatmul.mubr.bf16.gmra.mrb[0].mxu0 %v1710
  %v1809 = vpop.f32.mrb[0].mxu0
  %v1810 = vadd.f32 0.0, %v1809
  %v1811 = vpop.f32.mrb[0].mxu0
  %v1812 = vpop.f32.mrb[0].mxu0
  %v1813 = vadd.f32 0.0, %v1812
  %v1814 = vpop.f32.mrb[0].mxu0
  %1815 = vdwg.mxu0
  %v1816 = vadd.f32 %v1578, %v1810
  %v1817 = vadd.f32 %v1579, %v1813
  %v1818 = vld [vmem:[%s14] sm:$0x1]
  %v1820 = vlaneseq
  %v1821 = vshrl.u32 %v1820, 7
  %v1822 = vsub.s32 0, %v1821
  %v1823 = vrot.slane %v1818, %v1822
  %v1825 = vadd.f32 %v1816, %v1823
  %v1826 = vadd.f32 %v1817, %v1823
  %s1827 = scalar_lea.vmem %s4, 1
  %v1828 = vld [vmem:[%s1827] sm:$0x1]
  %s1829 = scalar_lea.vmem %s5, 1
  %v1830 = vld [vmem:[%s1829] sm:$0x1]
  %v1831 = vsel %vm149, %v1825, 0.0
  %1832 = vadd.xlane.f32.xlu0 %v1831
  %v1833 = vpop.xlane.xlu0 %1832
  %v1834 = vsel %vm153, %v1826, 0.0
  %1835 = vadd.xlane.f32.xlu0 %v1834
  %v1836 = vpop.xlane.xlu0 %1835
  %v1837 = vmul.f32 %v1833, %v157
  %v1838 = vmul.f32 %v1836, %v157
  %v1839 = vsub.f32 %v1825, %v1837
  %v1840 = vsub.f32 %v1826, %v1838
  %v1841 = vmul.f32 %v1839, %v1839
  %v1842 = vmul.f32 %v1840, %v1840
  %v1843 = vsel %vm149, %v1841, 0.0
  %1844 = vadd.xlane.f32.xlu0 %v1843
  %v1845 = vpop.xlane.xlu0 %1844
  %v1846 = vsel %vm153, %v1842, 0.0
  %1847 = vadd.xlane.f32.xlu0 %v1846
  %v1848 = vpop.xlane.xlu0 %1847
  %v1849 = vmul.f32 %v1845, %v157
  %v1850 = vmul.f32 %v1848, %v157
  %v1851 = vadd.f32 %v1849, 1e-05
  %v1852 = vadd.f32 %v1850, 1e-05
  %v1853 = vrsqrt.pop %v1851
  %v1854 = vrsqrt.pop %v1852
  %v1855 = vmul.f32 %v1839, %v1853
  %v1856 = vmul.f32 %v1840, %v1854
  %v1858 = vlaneseq
  %v1859 = vshrl.u32 %v1858, 7
  %v1860 = vsub.s32 0, %v1859
  %v1861 = vrot.slane %v1828, %v1860
  %v1863 = vmul.f32 %v1855, %v1861
  %v1864 = vmul.f32 %v1856, %v1861
  %v1866 = vlaneseq
  %v1867 = vshrl.u32 %v1866, 7
  %v1868 = vsub.s32 0, %v1867
  %v1869 = vrot.slane %v1830, %v1868
  %v1871 = vadd.f32 %v1863, %v1869
  %v1872 = vadd.f32 %v1864, %v1869
  %v1873 = vpack.c.bf16 %v1872, %v1871
  %s1874 = scalar_lea.vmem %s6, 192
  %v1875 = vld [vmem:[%s1874] sm:$0xf]
  %v1876 = vld [vmem:[%s1874 + $0x4] sm:$0xf]
  %v1877 = vld [vmem:[%s1874 + $0x8] sm:$0xf]
  %v1878 = vld [vmem:[%s1874 + $0xc] sm:$0xf]
  %v1879 = vld [vmem:[%s1874 + $0x10] sm:$0xf]
  %v1880 = vld [vmem:[%s1874 + $0x14] sm:$0xf]
  %v1881 = vld [vmem:[%s1874 + $0x18] sm:$0xf]
  %v1882 = vld [vmem:[%s1874 + $0x1c] sm:$0xf]
  %v1883 = vld [vmem:[%s1874 + $0x20] sm:$0xf]
  %v1884 = vld [vmem:[%s1874 + $0x24] sm:$0xf]
  %v1885 = vld [vmem:[%s1874 + $0x28] sm:$0xf]
  %v1886 = vld [vmem:[%s1874 + $0x2c] sm:$0xf]
  %v1887 = vld [vmem:[%s1874 + $0x30] sm:$0xf]
  %v1888 = vld [vmem:[%s1874 + $0x34] sm:$0xf]
  %v1889 = vld [vmem:[%s1874 + $0x38] sm:$0xf]
  %v1890 = vld [vmem:[%s1874 + $0x3c] sm:$0xf]
  %v1891 = vld [vmem:[%s1874 + $0x40] sm:$0xf]
  %v1892 = vld [vmem:[%s1874 + $0x44] sm:$0xf]
  %v1893 = vld [vmem:[%s1874 + $0x48] sm:$0xf]
  %v1894 = vld [vmem:[%s1874 + $0x4c] sm:$0xf]
  %v1895 = vld [vmem:[%s1874 + $0x50] sm:$0xf]
  %v1896 = vld [vmem:[%s1874 + $0x54] sm:$0xf]
  %v1897 = vld [vmem:[%s1874 + $0x58] sm:$0xf]
  %v1898 = vld [vmem:[%s1874 + $0x5c] sm:$0xf]
  %v1899 = vld [vmem:[%s1874 + $0x60] sm:$0xf]
  %v1900 = vld [vmem:[%s1874 + $0x64] sm:$0xf]
  %v1901 = vld [vmem:[%s1874 + $0x68] sm:$0xf]
  %v1902 = vld [vmem:[%s1874 + $0x6c] sm:$0xf]
  %v1903 = vld [vmem:[%s1874 + $0x70] sm:$0xf]
  %v1904 = vld [vmem:[%s1874 + $0x74] sm:$0xf]
  %v1905 = vld [vmem:[%s1874 + $0x78] sm:$0xf]
  %v1906 = vld [vmem:[%s1874 + $0x7c] sm:$0xf]
  %v1907 = vld [vmem:[%s1874 + $0x80] sm:$0xf]
  %v1908 = vld [vmem:[%s1874 + $0x84] sm:$0xf]
  %v1909 = vld [vmem:[%s1874 + $0x88] sm:$0xf]
  %v1910 = vld [vmem:[%s1874 + $0x8c] sm:$0xf]
  %v1911 = vld [vmem:[%s1874 + $0x90] sm:$0xf]
  %v1912 = vld [vmem:[%s1874 + $0x94] sm:$0xf]
  %v1913 = vld [vmem:[%s1874 + $0x98] sm:$0xf]
  %v1914 = vld [vmem:[%s1874 + $0x9c] sm:$0xf]
  %v1915 = vld [vmem:[%s1874 + $0xa0] sm:$0xf]
  %v1916 = vld [vmem:[%s1874 + $0xa4] sm:$0xf]
  %v1917 = vld [vmem:[%s1874 + $0xa8] sm:$0xf]
  %v1918 = vld [vmem:[%s1874 + $0xac] sm:$0xf]
  %v1919 = vld [vmem:[%s1874 + $0xb0] sm:$0xf]
  %v1920 = vld [vmem:[%s1874 + $0xb4] sm:$0xf]
  %v1921 = vld [vmem:[%s1874 + $0xb8] sm:$0xf]
  %v1922 = vld [vmem:[%s1874 + $0xbc] sm:$0xf]
  %v1927 = vunpack.c.l.b16 %v1875
  %v1928 = vunpack.c.l.b16 %v1876
  %v1929 = vunpack.c.l.b16 %v1877
  %v1930 = vunpack.c.l.b16 %v1878
  %v1931 = vpack.c.b16 %v1928, %v1927
  %v1932 = vpack.c.b16 %v1930, %v1929
  %v1936 = vsel %vm149, %v1873, 0
  %1938 = vmatprep.subr.bf16.mxu0 0
  %1939 = vmatpush1.bf16.msra.mxu0 %v1931
  %1940 = vmatprep.subr.bf16.mxu0 0
  %1941 = vmatpush1.bf16.msra.mxu0 %v1932
  %1942 = vmatprep.subr.bf16.mxu0 0
  %1943 = vmatpush1.bf16.msra.mxu0 0
  %1944 = vmatprep.subr.bf16.mxu0 0
  %1945 = vmatpush1.bf16.msra.mxu0 0
  %1946 = vmatprep.subr.bf16.mxu0 0
  %1947 = vmatpush1.bf16.msra.mxu0 0
  %1948 = vmatprep.subr.bf16.mxu0 0
  %1949 = vmatpush1.bf16.msra.mxu0 0
  %1950 = vmatprep.subr.bf16.mxu0 0
  %1951 = vmatpush1.bf16.msra.mxu0 0
  %1952 = vmatprep.subr.bf16.mxu0 0
  %1953 = vmatpush1.bf16.msra.mxu0 0
  %1954 = vmatprep.subr.bf16.mxu0 0
  %1955 = vmatpush1.bf16.msra.mxu0 0
  %1956 = vmatprep.subr.bf16.mxu0 0
  %1957 = vmatpush1.bf16.msra.mxu0 0
  %1958 = vmatprep.subr.bf16.mxu0 0
  %1959 = vmatpush1.bf16.msra.mxu0 0
  %1960 = vmatprep.subr.bf16.mxu0 0
  %1961 = vmatpush1.bf16.msra.mxu0 0
  %1962 = vmatprep.subr.bf16.mxu0 0
  %1963 = vmatpush1.bf16.msra.mxu0 0
  %1964 = vmatprep.subr.bf16.mxu0 0
  %1965 = vmatpush1.bf16.msra.mxu0 0
  %1966 = vmatprep.subr.bf16.mxu0 0
  %1967 = vmatpush1.bf16.msra.mxu0 0
  %1968 = vmatprep.subr.bf16.mxu0 0
  %1969 = vmatpush1.bf16.msra.mxu0 0
  %1970 = vmatprep.mubr.bf16.mxu0 0
  %1971 = vmatmul.mubr.bf16.gmra.mrb[0].mxu0 %v1936
  %v1972 = vpop.f32.mrb[0].mxu0
  %v1973 = vadd.f32 0.0, %v1972
  %v1974 = vpop.f32.mrb[0].mxu0
  %v1975 = vpop.f32.mrb[0].mxu0
  %v1976 = vadd.f32 0.0, %v1975
  %v1977 = vpop.f32.mrb[0].mxu0
  %1978 = vdwg.mxu0
  %v1983 = vunpack.c.l.b16 %v1879
  %v1984 = vunpack.c.l.b16 %v1880
  %v1985 = vunpack.c.l.b16 %v1881
  %v1986 = vunpack.c.l.b16 %v1882
  %v1987 = vpack.c.b16 %v1984, %v1983
  %v1988 = vpack.c.b16 %v1986, %v1985
  %1991 = vmatprep.subr.bf16.mxu0 0
  %1992 = vmatpush1.bf16.msra.mxu0 %v1987
  %1993 = vmatprep.subr.bf16.mxu0 0
  %1994 = vmatpush1.bf16.msra.mxu0 %v1988
  %1995 = vmatprep.subr.bf16.mxu0 0
  %1996 = vmatpush1.bf16.msra.mxu0 0
  %1997 = vmatprep.subr.bf16.mxu0 0
  %1998 = vmatpush1.bf16.msra.mxu0 0
  %1999 = vmatprep.subr.bf16.mxu0 0
  %2000 = vmatpush1.bf16.msra.mxu0 0
  %2001 = vmatprep.subr.bf16.mxu0 0
  %2002 = vmatpush1.bf16.msra.mxu0 0
  %2003 = vmatprep.subr.bf16.mxu0 0
  %2004 = vmatpush1.bf16.msra.mxu0 0
  %2005 = vmatprep.subr.bf16.mxu0 0
  %2006 = vmatpush1.bf16.msra.mxu0 0
  %2007 = vmatprep.subr.bf16.mxu0 0
  %2008 = vmatpush1.bf16.msra.mxu0 0
  %2009 = vmatprep.subr.bf16.mxu0 0
  %2010 = vmatpush1.bf16.msra.mxu0 0
  %2011 = vmatprep.subr.bf16.mxu0 0
  %2012 = vmatpush1.bf16.msra.mxu0 0
  %2013 = vmatprep.subr.bf16.mxu0 0
  %2014 = vmatpush1.bf16.msra.mxu0 0
  %2015 = vmatprep.subr.bf16.mxu0 0
  %2016 = vmatpush1.bf16.msra.mxu0 0
  %2017 = vmatprep.subr.bf16.mxu0 0
  %2018 = vmatpush1.bf16.msra.mxu0 0
  %2019 = vmatprep.subr.bf16.mxu0 0
  %2020 = vmatpush1.bf16.msra.mxu0 0
  %2021 = vmatprep.subr.bf16.mxu0 0
  %2022 = vmatpush1.bf16.msra.mxu0 0
  %2023 = vmatprep.mubr.bf16.mxu0 0
  %2024 = vmatmul.mubr.bf16.gmra.mrb[0].mxu0 %v1936
  %v2025 = vpop.f32.mrb[0].mxu0
  %v2026 = vadd.f32 0.0, %v2025
  %v2027 = vpop.f32.mrb[0].mxu0
  %v2028 = vpop.f32.mrb[0].mxu0
  %v2029 = vadd.f32 0.0, %v2028
  %v2030 = vpop.f32.mrb[0].mxu0
  %2031 = vdwg.mxu0
  %v2036 = vunpack.c.l.b16 %v1883
  %v2037 = vunpack.c.l.b16 %v1884
  %v2038 = vunpack.c.l.b16 %v1885
  %v2039 = vunpack.c.l.b16 %v1886
  %v2040 = vpack.c.b16 %v2037, %v2036
  %v2041 = vpack.c.b16 %v2039, %v2038
  %2044 = vmatprep.subr.bf16.mxu0 0
  %2045 = vmatpush1.bf16.msra.mxu0 %v2040
  %2046 = vmatprep.subr.bf16.mxu0 0
  %2047 = vmatpush1.bf16.msra.mxu0 %v2041
  %2048 = vmatprep.subr.bf16.mxu0 0
  %2049 = vmatpush1.bf16.msra.mxu0 0
  %2050 = vmatprep.subr.bf16.mxu0 0
  %2051 = vmatpush1.bf16.msra.mxu0 0
  %2052 = vmatprep.subr.bf16.mxu0 0
  %2053 = vmatpush1.bf16.msra.mxu0 0
  %2054 = vmatprep.subr.bf16.mxu0 0
  %2055 = vmatpush1.bf16.msra.mxu0 0
  %2056 = vmatprep.subr.bf16.mxu0 0
  %2057 = vmatpush1.bf16.msra.mxu0 0
  %2058 = vmatprep.subr.bf16.mxu0 0
  %2059 = vmatpush1.bf16.msra.mxu0 0
  %2060 = vmatprep.subr.bf16.mxu0 0
  %2061 = vmatpush1.bf16.msra.mxu0 0
  %2062 = vmatprep.subr.bf16.mxu0 0
  %2063 = vmatpush1.bf16.msra.mxu0 0
  %2064 = vmatprep.subr.bf16.mxu0 0
  %2065 = vmatpush1.bf16.msra.mxu0 0
  %2066 = vmatprep.subr.bf16.mxu0 0
  %2067 = vmatpush1.bf16.msra.mxu0 0
  %2068 = vmatprep.subr.bf16.mxu0 0
  %2069 = vmatpush1.bf16.msra.mxu0 0
  %2070 = vmatprep.subr.bf16.mxu0 0
  %2071 = vmatpush1.bf16.msra.mxu0 0
  %2072 = vmatprep.subr.bf16.mxu0 0
  %2073 = vmatpush1.bf16.msra.mxu0 0
  %2074 = vmatprep.subr.bf16.mxu0 0
  %2075 = vmatpush1.bf16.msra.mxu0 0
  %2076 = vmatprep.mubr.bf16.mxu0 0
  %2077 = vmatmul.mubr.bf16.gmra.mrb[0].mxu0 %v1936
  %v2078 = vpop.f32.mrb[0].mxu0
  %v2079 = vadd.f32 0.0, %v2078
  %v2080 = vpop.f32.mrb[0].mxu0
  %v2081 = vpop.f32.mrb[0].mxu0
  %v2082 = vadd.f32 0.0, %v2081
  %v2083 = vpop.f32.mrb[0].mxu0
  %2084 = vdwg.mxu0
  %v2089 = vunpack.c.l.b16 %v1887
  %v2090 = vunpack.c.l.b16 %v1888
  %v2091 = vunpack.c.l.b16 %v1889
  %v2092 = vunpack.c.l.b16 %v1890
  %v2093 = vpack.c.b16 %v2090, %v2089
  %v2094 = vpack.c.b16 %v2092, %v2091
  %2097 = vmatprep.subr.bf16.mxu0 0
  %2098 = vmatpush1.bf16.msra.mxu0 %v2093
  %2099 = vmatprep.subr.bf16.mxu0 0
  %2100 = vmatpush1.bf16.msra.mxu0 %v2094
  %2101 = vmatprep.subr.bf16.mxu0 0
  %2102 = vmatpush1.bf16.msra.mxu0 0
  %2103 = vmatprep.subr.bf16.mxu0 0
  %2104 = vmatpush1.bf16.msra.mxu0 0
  %2105 = vmatprep.subr.bf16.mxu0 0
  %2106 = vmatpush1.bf16.msra.mxu0 0
  %2107 = vmatprep.subr.bf16.mxu0 0
  %2108 = vmatpush1.bf16.msra.mxu0 0
  %2109 = vmatprep.subr.bf16.mxu0 0
  %2110 = vmatpush1.bf16.msra.mxu0 0
  %2111 = vmatprep.subr.bf16.mxu0 0
  %2112 = vmatpush1.bf16.msra.mxu0 0
  %2113 = vmatprep.subr.bf16.mxu0 0
  %2114 = vmatpush1.bf16.msra.mxu0 0
  %2115 = vmatprep.subr.bf16.mxu0 0
  %2116 = vmatpush1.bf16.msra.mxu0 0
  %2117 = vmatprep.subr.bf16.mxu0 0
  %2118 = vmatpush1.bf16.msra.mxu0 0
  %2119 = vmatprep.subr.bf16.mxu0 0
  %2120 = vmatpush1.bf16.msra.mxu0 0
  %2121 = vmatprep.subr.bf16.mxu0 0
  %2122 = vmatpush1.bf16.msra.mxu0 0
  %2123 = vmatprep.subr.bf16.mxu0 0
  %2124 = vmatpush1.bf16.msra.mxu0 0
  %2125 = vmatprep.subr.bf16.mxu0 0
  %2126 = vmatpush1.bf16.msra.mxu0 0
  %2127 = vmatprep.subr.bf16.mxu0 0
  %2128 = vmatpush1.bf16.msra.mxu0 0
  %2129 = vmatprep.mubr.bf16.mxu0 0
  %2130 = vmatmul.mubr.bf16.gmra.mrb[0].mxu0 %v1936
  %v2131 = vpop.f32.mrb[0].mxu0
  %v2132 = vadd.f32 0.0, %v2131
  %v2133 = vpop.f32.mrb[0].mxu0
  %v2134 = vpop.f32.mrb[0].mxu0
  %v2135 = vadd.f32 0.0, %v2134
  %v2136 = vpop.f32.mrb[0].mxu0
  %2137 = vdwg.mxu0
  %v2142 = vunpack.c.l.b16 %v1891
  %v2143 = vunpack.c.l.b16 %v1892
  %v2144 = vunpack.c.l.b16 %v1893
  %v2145 = vunpack.c.l.b16 %v1894
  %v2146 = vpack.c.b16 %v2143, %v2142
  %v2147 = vpack.c.b16 %v2145, %v2144
  %2150 = vmatprep.subr.bf16.mxu0 0
  %2151 = vmatpush1.bf16.msra.mxu0 %v2146
  %2152 = vmatprep.subr.bf16.mxu0 0
  %2153 = vmatpush1.bf16.msra.mxu0 %v2147
  %2154 = vmatprep.subr.bf16.mxu0 0
  %2155 = vmatpush1.bf16.msra.mxu0 0
  %2156 = vmatprep.subr.bf16.mxu0 0
  %2157 = vmatpush1.bf16.msra.mxu0 0
  %2158 = vmatprep.subr.bf16.mxu0 0
  %2159 = vmatpush1.bf16.msra.mxu0 0
  %2160 = vmatprep.subr.bf16.mxu0 0
  %2161 = vmatpush1.bf16.msra.mxu0 0
  %2162 = vmatprep.subr.bf16.mxu0 0
  %2163 = vmatpush1.bf16.msra.mxu0 0
  %2164 = vmatprep.subr.bf16.mxu0 0
  %2165 = vmatpush1.bf16.msra.mxu0 0
  %2166 = vmatprep.subr.bf16.mxu0 0
  %2167 = vmatpush1.bf16.msra.mxu0 0
  %2168 = vmatprep.subr.bf16.mxu0 0
  %2169 = vmatpush1.bf16.msra.mxu0 0
  %2170 = vmatprep.subr.bf16.mxu0 0
  %2171 = vmatpush1.bf16.msra.mxu0 0
  %2172 = vmatprep.subr.bf16.mxu0 0
  %2173 = vmatpush1.bf16.msra.mxu0 0
  %2174 = vmatprep.subr.bf16.mxu0 0
  %2175 = vmatpush1.bf16.msra.mxu0 0
  %2176 = vmatprep.subr.bf16.mxu0 0
  %2177 = vmatpush1.bf16.msra.mxu0 0
  %2178 = vmatprep.subr.bf16.mxu0 0
  %2179 = vmatpush1.bf16.msra.mxu0 0
  %2180 = vmatprep.subr.bf16.mxu0 0
  %2181 = vmatpush1.bf16.msra.mxu0 0
  %2182 = vmatprep.mubr.bf16.mxu0 0
  %2183 = vmatmul.mubr.bf16.gmra.mrb[0].mxu0 %v1936
  %v2184 = vpop.f32.mrb[0].mxu0
  %v2185 = vadd.f32 0.0, %v2184
  %v2186 = vpop.f32.mrb[0].mxu0
  %v2187 = vpop.f32.mrb[0].mxu0
  %v2188 = vadd.f32 0.0, %v2187
  %v2189 = vpop.f32.mrb[0].mxu0
  %2190 = vdwg.mxu0
  %v2195 = vunpack.c.l.b16 %v1895
  %v2196 = vunpack.c.l.b16 %v1896
  %v2197 = vunpack.c.l.b16 %v1897
  %v2198 = vunpack.c.l.b16 %v1898
  %v2199 = vpack.c.b16 %v2196, %v2195
  %v2200 = vpack.c.b16 %v2198, %v2197
  %2203 = vmatprep.subr.bf16.mxu0 0
  %2204 = vmatpush1.bf16.msra.mxu0 %v2199
  %2205 = vmatprep.subr.bf16.mxu0 0
  %2206 = vmatpush1.bf16.msra.mxu0 %v2200
  %2207 = vmatprep.subr.bf16.mxu0 0
  %2208 = vmatpush1.bf16.msra.mxu0 0
  %2209 = vmatprep.subr.bf16.mxu0 0
  %2210 = vmatpush1.bf16.msra.mxu0 0
  %2211 = vmatprep.subr.bf16.mxu0 0
  %2212 = vmatpush1.bf16.msra.mxu0 0
  %2213 = vmatprep.subr.bf16.mxu0 0
  %2214 = vmatpush1.bf16.msra.mxu0 0
  %2215 = vmatprep.subr.bf16.mxu0 0
  %2216 = vmatpush1.bf16.msra.mxu0 0
  %2217 = vmatprep.subr.bf16.mxu0 0
  %2218 = vmatpush1.bf16.msra.mxu0 0
  %2219 = vmatprep.subr.bf16.mxu0 0
  %2220 = vmatpush1.bf16.msra.mxu0 0
  %2221 = vmatprep.subr.bf16.mxu0 0
  %2222 = vmatpush1.bf16.msra.mxu0 0
  %2223 = vmatprep.subr.bf16.mxu0 0
  %2224 = vmatpush1.bf16.msra.mxu0 0
  %2225 = vmatprep.subr.bf16.mxu0 0
  %2226 = vmatpush1.bf16.msra.mxu0 0
  %2227 = vmatprep.subr.bf16.mxu0 0
  %2228 = vmatpush1.bf16.msra.mxu0 0
  %2229 = vmatprep.subr.bf16.mxu0 0
  %2230 = vmatpush1.bf16.msra.mxu0 0
  %2231 = vmatprep.subr.bf16.mxu0 0
  %2232 = vmatpush1.bf16.msra.mxu0 0
  %2233 = vmatprep.subr.bf16.mxu0 0
  %2234 = vmatpush1.bf16.msra.mxu0 0
  %2235 = vmatprep.mubr.bf16.mxu0 0
  %2236 = vmatmul.mubr.bf16.gmra.mrb[0].mxu0 %v1936
  %v2237 = vpop.f32.mrb[0].mxu0
  %v2238 = vadd.f32 0.0, %v2237
  %v2239 = vpop.f32.mrb[0].mxu0
  %v2240 = vpop.f32.mrb[0].mxu0
  %v2241 = vadd.f32 0.0, %v2240
  %v2242 = vpop.f32.mrb[0].mxu0
  %2243 = vdwg.mxu0
  %v2248 = vunpack.c.l.b16 %v1899
  %v2249 = vunpack.c.l.b16 %v1900
  %v2250 = vunpack.c.l.b16 %v1901
  %v2251 = vunpack.c.l.b16 %v1902
  %v2252 = vpack.c.b16 %v2249, %v2248
  %v2253 = vpack.c.b16 %v2251, %v2250
  %2256 = vmatprep.subr.bf16.mxu0 0
  %2257 = vmatpush1.bf16.msra.mxu0 %v2252
  %2258 = vmatprep.subr.bf16.mxu0 0
  %2259 = vmatpush1.bf16.msra.mxu0 %v2253
  %2260 = vmatprep.subr.bf16.mxu0 0
  %2261 = vmatpush1.bf16.msra.mxu0 0
  %2262 = vmatprep.subr.bf16.mxu0 0
  %2263 = vmatpush1.bf16.msra.mxu0 0
  %2264 = vmatprep.subr.bf16.mxu0 0
  %2265 = vmatpush1.bf16.msra.mxu0 0
  %2266 = vmatprep.subr.bf16.mxu0 0
  %2267 = vmatpush1.bf16.msra.mxu0 0
  %2268 = vmatprep.subr.bf16.mxu0 0
  %2269 = vmatpush1.bf16.msra.mxu0 0
  %2270 = vmatprep.subr.bf16.mxu0 0
  %2271 = vmatpush1.bf16.msra.mxu0 0
  %2272 = vmatprep.subr.bf16.mxu0 0
  %2273 = vmatpush1.bf16.msra.mxu0 0
  %2274 = vmatprep.subr.bf16.mxu0 0
  %2275 = vmatpush1.bf16.msra.mxu0 0
  %2276 = vmatprep.subr.bf16.mxu0 0
  %2277 = vmatpush1.bf16.msra.mxu0 0
  %2278 = vmatprep.subr.bf16.mxu0 0
  %2279 = vmatpush1.bf16.msra.mxu0 0
  %2280 = vmatprep.subr.bf16.mxu0 0
  %2281 = vmatpush1.bf16.msra.mxu0 0
  %2282 = vmatprep.subr.bf16.mxu0 0
  %2283 = vmatpush1.bf16.msra.mxu0 0
  %2284 = vmatprep.subr.bf16.mxu0 0
  %2285 = vmatpush1.bf16.msra.mxu0 0
  %2286 = vmatprep.subr.bf16.mxu0 0
  %2287 = vmatpush1.bf16.msra.mxu0 0
  %2288 = vmatprep.mubr.bf16.mxu0 0
  %2289 = vmatmul.mubr.bf16.gmra.mrb[0].mxu0 %v1936
  %v2290 = vpop.f32.mrb[0].mxu0
  %v2291 = vadd.f32 0.0, %v2290
  %v2292 = vpop.f32.mrb[0].mxu0
  %v2293 = vpop.f32.mrb[0].mxu0
  %v2294 = vadd.f32 0.0, %v2293
  %v2295 = vpop.f32.mrb[0].mxu0
  %2296 = vdwg.mxu0
  %v2301 = vunpack.c.l.b16 %v1903
  %v2302 = vunpack.c.l.b16 %v1904
  %v2303 = vunpack.c.l.b16 %v1905
  %v2304 = vunpack.c.l.b16 %v1906
  %v2305 = vpack.c.b16 %v2302, %v2301
  %v2306 = vpack.c.b16 %v2304, %v2303
  %2309 = vmatprep.subr.bf16.mxu0 0
  %2310 = vmatpush1.bf16.msra.mxu0 %v2305
  %2311 = vmatprep.subr.bf16.mxu0 0
  %2312 = vmatpush1.bf16.msra.mxu0 %v2306
  %2313 = vmatprep.subr.bf16.mxu0 0
  %2314 = vmatpush1.bf16.msra.mxu0 0
  %2315 = vmatprep.subr.bf16.mxu0 0
  %2316 = vmatpush1.bf16.msra.mxu0 0
  %2317 = vmatprep.subr.bf16.mxu0 0
  %2318 = vmatpush1.bf16.msra.mxu0 0
  %2319 = vmatprep.subr.bf16.mxu0 0
  %2320 = vmatpush1.bf16.msra.mxu0 0
  %2321 = vmatprep.subr.bf16.mxu0 0
  %2322 = vmatpush1.bf16.msra.mxu0 0
  %2323 = vmatprep.subr.bf16.mxu0 0
  %2324 = vmatpush1.bf16.msra.mxu0 0
  %2325 = vmatprep.subr.bf16.mxu0 0
  %2326 = vmatpush1.bf16.msra.mxu0 0
  %2327 = vmatprep.subr.bf16.mxu0 0
  %2328 = vmatpush1.bf16.msra.mxu0 0
  %2329 = vmatprep.subr.bf16.mxu0 0
  %2330 = vmatpush1.bf16.msra.mxu0 0
  %2331 = vmatprep.subr.bf16.mxu0 0
  %2332 = vmatpush1.bf16.msra.mxu0 0
  %2333 = vmatprep.subr.bf16.mxu0 0
  %2334 = vmatpush1.bf16.msra.mxu0 0
  %2335 = vmatprep.subr.bf16.mxu0 0
  %2336 = vmatpush1.bf16.msra.mxu0 0
  %2337 = vmatprep.subr.bf16.mxu0 0
  %2338 = vmatpush1.bf16.msra.mxu0 0
  %2339 = vmatprep.subr.bf16.mxu0 0
  %2340 = vmatpush1.bf16.msra.mxu0 0
  %2341 = vmatprep.mubr.bf16.mxu0 0
  %2342 = vmatmul.mubr.bf16.gmra.mrb[0].mxu0 %v1936
  %v2343 = vpop.f32.mrb[0].mxu0
  %v2344 = vadd.f32 0.0, %v2343
  %v2345 = vpop.f32.mrb[0].mxu0
  %v2346 = vpop.f32.mrb[0].mxu0
  %v2347 = vadd.f32 0.0, %v2346
  %v2348 = vpop.f32.mrb[0].mxu0
  %2349 = vdwg.mxu0
  %v2354 = vunpack.c.l.b16 %v1907
  %v2355 = vunpack.c.l.b16 %v1908
  %v2356 = vunpack.c.l.b16 %v1909
  %v2357 = vunpack.c.l.b16 %v1910
  %v2358 = vpack.c.b16 %v2355, %v2354
  %v2359 = vpack.c.b16 %v2357, %v2356
  %2362 = vmatprep.subr.bf16.mxu0 0
  %2363 = vmatpush1.bf16.msra.mxu0 %v2358
  %2364 = vmatprep.subr.bf16.mxu0 0
  %2365 = vmatpush1.bf16.msra.mxu0 %v2359
  %2366 = vmatprep.subr.bf16.mxu0 0
  %2367 = vmatpush1.bf16.msra.mxu0 0
  %2368 = vmatprep.subr.bf16.mxu0 0
  %2369 = vmatpush1.bf16.msra.mxu0 0
  %2370 = vmatprep.subr.bf16.mxu0 0
  %2371 = vmatpush1.bf16.msra.mxu0 0
  %2372 = vmatprep.subr.bf16.mxu0 0
  %2373 = vmatpush1.bf16.msra.mxu0 0
  %2374 = vmatprep.subr.bf16.mxu0 0
  %2375 = vmatpush1.bf16.msra.mxu0 0
  %2376 = vmatprep.subr.bf16.mxu0 0
  %2377 = vmatpush1.bf16.msra.mxu0 0
  %2378 = vmatprep.subr.bf16.mxu0 0
  %2379 = vmatpush1.bf16.msra.mxu0 0
  %2380 = vmatprep.subr.bf16.mxu0 0
  %2381 = vmatpush1.bf16.msra.mxu0 0
  %2382 = vmatprep.subr.bf16.mxu0 0
  %2383 = vmatpush1.bf16.msra.mxu0 0
  %2384 = vmatprep.subr.bf16.mxu0 0
  %2385 = vmatpush1.bf16.msra.mxu0 0
  %2386 = vmatprep.subr.bf16.mxu0 0
  %2387 = vmatpush1.bf16.msra.mxu0 0
  %2388 = vmatprep.subr.bf16.mxu0 0
  %2389 = vmatpush1.bf16.msra.mxu0 0
  %2390 = vmatprep.subr.bf16.mxu0 0
  %2391 = vmatpush1.bf16.msra.mxu0 0
  %2392 = vmatprep.subr.bf16.mxu0 0
  %2393 = vmatpush1.bf16.msra.mxu0 0
  %2394 = vmatprep.mubr.bf16.mxu0 0
  %2395 = vmatmul.mubr.bf16.gmra.mrb[0].mxu0 %v1936
  %v2396 = vpop.f32.mrb[0].mxu0
  %v2397 = vadd.f32 0.0, %v2396
  %v2398 = vpop.f32.mrb[0].mxu0
  %v2399 = vpop.f32.mrb[0].mxu0
  %v2400 = vadd.f32 0.0, %v2399
  %v2401 = vpop.f32.mrb[0].mxu0
  %2402 = vdwg.mxu0
  %v2407 = vunpack.c.l.b16 %v1911
  %v2408 = vunpack.c.l.b16 %v1912
  %v2409 = vunpack.c.l.b16 %v1913
  %v2410 = vunpack.c.l.b16 %v1914
  %v2411 = vpack.c.b16 %v2408, %v2407
  %v2412 = vpack.c.b16 %v2410, %v2409
  %2415 = vmatprep.subr.bf16.mxu0 0
  %2416 = vmatpush1.bf16.msra.mxu0 %v2411
  %2417 = vmatprep.subr.bf16.mxu0 0
  %2418 = vmatpush1.bf16.msra.mxu0 %v2412
  %2419 = vmatprep.subr.bf16.mxu0 0
  %2420 = vmatpush1.bf16.msra.mxu0 0
  %2421 = vmatprep.subr.bf16.mxu0 0
  %2422 = vmatpush1.bf16.msra.mxu0 0
  %2423 = vmatprep.subr.bf16.mxu0 0
  %2424 = vmatpush1.bf16.msra.mxu0 0
  %2425 = vmatprep.subr.bf16.mxu0 0
  %2426 = vmatpush1.bf16.msra.mxu0 0
  %2427 = vmatprep.subr.bf16.mxu0 0
  %2428 = vmatpush1.bf16.msra.mxu0 0
  %2429 = vmatprep.subr.bf16.mxu0 0
  %2430 = vmatpush1.bf16.msra.mxu0 0
  %2431 = vmatprep.subr.bf16.mxu0 0
  %2432 = vmatpush1.bf16.msra.mxu0 0
  %2433 = vmatprep.subr.bf16.mxu0 0
  %2434 = vmatpush1.bf16.msra.mxu0 0
  %2435 = vmatprep.subr.bf16.mxu0 0
  %2436 = vmatpush1.bf16.msra.mxu0 0
  %2437 = vmatprep.subr.bf16.mxu0 0
  %2438 = vmatpush1.bf16.msra.mxu0 0
  %2439 = vmatprep.subr.bf16.mxu0 0
  %2440 = vmatpush1.bf16.msra.mxu0 0
  %2441 = vmatprep.subr.bf16.mxu0 0
  %2442 = vmatpush1.bf16.msra.mxu0 0
  %2443 = vmatprep.subr.bf16.mxu0 0
  %2444 = vmatpush1.bf16.msra.mxu0 0
  %2445 = vmatprep.subr.bf16.mxu0 0
  %2446 = vmatpush1.bf16.msra.mxu0 0
  %2447 = vmatprep.mubr.bf16.mxu0 0
  %2448 = vmatmul.mubr.bf16.gmra.mrb[0].mxu0 %v1936
  %v2449 = vpop.f32.mrb[0].mxu0
  %v2450 = vadd.f32 0.0, %v2449
  %v2451 = vpop.f32.mrb[0].mxu0
  %v2452 = vpop.f32.mrb[0].mxu0
  %v2453 = vadd.f32 0.0, %v2452
  %v2454 = vpop.f32.mrb[0].mxu0
  %2455 = vdwg.mxu0
  %v2460 = vunpack.c.l.b16 %v1915
  %v2461 = vunpack.c.l.b16 %v1916
  %v2462 = vunpack.c.l.b16 %v1917
  %v2463 = vunpack.c.l.b16 %v1918
  %v2464 = vpack.c.b16 %v2461, %v2460
  %v2465 = vpack.c.b16 %v2463, %v2462
  %2468 = vmatprep.subr.bf16.mxu0 0
  %2469 = vmatpush1.bf16.msra.mxu0 %v2464
  %2470 = vmatprep.subr.bf16.mxu0 0
  %2471 = vmatpush1.bf16.msra.mxu0 %v2465
  %2472 = vmatprep.subr.bf16.mxu0 0
  %2473 = vmatpush1.bf16.msra.mxu0 0
  %2474 = vmatprep.subr.bf16.mxu0 0
  %2475 = vmatpush1.bf16.msra.mxu0 0
  %2476 = vmatprep.subr.bf16.mxu0 0
  %2477 = vmatpush1.bf16.msra.mxu0 0
  %2478 = vmatprep.subr.bf16.mxu0 0
  %2479 = vmatpush1.bf16.msra.mxu0 0
  %2480 = vmatprep.subr.bf16.mxu0 0
  %2481 = vmatpush1.bf16.msra.mxu0 0
  %2482 = vmatprep.subr.bf16.mxu0 0
  %2483 = vmatpush1.bf16.msra.mxu0 0
  %2484 = vmatprep.subr.bf16.mxu0 0
  %2485 = vmatpush1.bf16.msra.mxu0 0
  %2486 = vmatprep.subr.bf16.mxu0 0
  %2487 = vmatpush1.bf16.msra.mxu0 0
  %2488 = vmatprep.subr.bf16.mxu0 0
  %2489 = vmatpush1.bf16.msra.mxu0 0
  %2490 = vmatprep.subr.bf16.mxu0 0
  %2491 = vmatpush1.bf16.msra.mxu0 0
  %2492 = vmatprep.subr.bf16.mxu0 0
  %2493 = vmatpush1.bf16.msra.mxu0 0
  %2494 = vmatprep.subr.bf16.mxu0 0
  %2495 = vmatpush1.bf16.msra.mxu0 0
  %2496 = vmatprep.subr.bf16.mxu0 0
  %2497 = vmatpush1.bf16.msra.mxu0 0
  %2498 = vmatprep.subr.bf16.mxu0 0
  %2499 = vmatpush1.bf16.msra.mxu0 0
  %2500 = vmatprep.mubr.bf16.mxu0 0
  %2501 = vmatmul.mubr.bf16.gmra.mrb[0].mxu0 %v1936
  %v2502 = vpop.f32.mrb[0].mxu0
  %v2503 = vadd.f32 0.0, %v2502
  %v2504 = vpop.f32.mrb[0].mxu0
  %v2505 = vpop.f32.mrb[0].mxu0
  %v2506 = vadd.f32 0.0, %v2505
  %v2507 = vpop.f32.mrb[0].mxu0
  %2508 = vdwg.mxu0
  %v2513 = vunpack.c.l.b16 %v1919
  %v2514 = vunpack.c.l.b16 %v1920
  %v2515 = vunpack.c.l.b16 %v1921
  %v2516 = vunpack.c.l.b16 %v1922
  %v2517 = vpack.c.b16 %v2514, %v2513
  %v2518 = vpack.c.b16 %v2516, %v2515
  %2521 = vmatprep.subr.bf16.mxu0 0
  %2522 = vmatpush1.bf16.msra.mxu0 %v2517
  %2523 = vmatprep.subr.bf16.mxu0 0
  %2524 = vmatpush1.bf16.msra.mxu0 %v2518
  %2525 = vmatprep.subr.bf16.mxu0 0
  %2526 = vmatpush1.bf16.msra.mxu0 0
  %2527 = vmatprep.subr.bf16.mxu0 0
  %2528 = vmatpush1.bf16.msra.mxu0 0
  %2529 = vmatprep.subr.bf16.mxu0 0
  %2530 = vmatpush1.bf16.msra.mxu0 0
  %2531 = vmatprep.subr.bf16.mxu0 0
  %2532 = vmatpush1.bf16.msra.mxu0 0
  %2533 = vmatprep.subr.bf16.mxu0 0
  %2534 = vmatpush1.bf16.msra.mxu0 0
  %2535 = vmatprep.subr.bf16.mxu0 0
  %2536 = vmatpush1.bf16.msra.mxu0 0
  %2537 = vmatprep.subr.bf16.mxu0 0
  %2538 = vmatpush1.bf16.msra.mxu0 0
  %2539 = vmatprep.subr.bf16.mxu0 0
  %2540 = vmatpush1.bf16.msra.mxu0 0
  %2541 = vmatprep.subr.bf16.mxu0 0
  %2542 = vmatpush1.bf16.msra.mxu0 0
  %2543 = vmatprep.subr.bf16.mxu0 0
  %2544 = vmatpush1.bf16.msra.mxu0 0
  %2545 = vmatprep.subr.bf16.mxu0 0
  %2546 = vmatpush1.bf16.msra.mxu0 0
  %2547 = vmatprep.subr.bf16.mxu0 0
  %2548 = vmatpush1.bf16.msra.mxu0 0
  %2549 = vmatprep.subr.bf16.mxu0 0
  %2550 = vmatpush1.bf16.msra.mxu0 0
  %2551 = vmatprep.subr.bf16.mxu0 0
  %2552 = vmatpush1.bf16.msra.mxu0 0
  %2553 = vmatprep.mubr.bf16.mxu0 0
  %2554 = vmatmul.mubr.bf16.gmra.mrb[0].mxu0 %v1936
  %v2555 = vpop.f32.mrb[0].mxu0
  %v2556 = vadd.f32 0.0, %v2555
  %v2557 = vpop.f32.mrb[0].mxu0
  %v2558 = vpop.f32.mrb[0].mxu0
  %v2559 = vadd.f32 0.0, %v2558
  %v2560 = vpop.f32.mrb[0].mxu0
  %2561 = vdwg.mxu0
  %v2562 = vpack.c.bf16 %v1976, %v1973
  %v2563 = vpack.c.bf16 %v2029, %v2026
  %v2564 = vpack.c.bf16 %v2082, %v2079
  %v2565 = vpack.c.bf16 %v2135, %v2132
  %v2566 = vpack.c.bf16 %v2188, %v2185
  %v2567 = vpack.c.bf16 %v2241, %v2238
  %v2568 = vpack.c.bf16 %v2294, %v2291
  %v2569 = vpack.c.bf16 %v2347, %v2344
  %v2570 = vpack.c.bf16 %v2400, %v2397
  %v2571 = vpack.c.bf16 %v2453, %v2450
  %v2572 = vpack.c.bf16 %v2506, %v2503
  %v2573 = vpack.c.bf16 %v2559, %v2556
  %v2575 = vsel %vm894, %v2562, 0
  %v2578 = vsel %vm894, %v2566, 0
  %2580 = vmatprep.subr.bf16.mxu0 0
  %2581 = vmatpush1.bf16.xpose.msra.mxu0 %v2578
  %2582 = vmatprep.subr.bf16.mxu0 0
  %2583 = vmatpush1.bf16.xpose.msra.mxu0 0
  %2584 = vmatprep.subr.bf16.mxu0 0
  %2585 = vmatpush1.bf16.xpose.msra.mxu0 0
  %2586 = vmatprep.subr.bf16.mxu0 0
  %2587 = vmatpush1.bf16.xpose.msra.mxu0 0
  %2588 = vmatprep.subr.bf16.mxu0 0
  %2589 = vmatpush1.bf16.xpose.msra.mxu0 0
  %2590 = vmatprep.subr.bf16.mxu0 0
  %2591 = vmatpush1.bf16.xpose.msra.mxu0 0
  %2592 = vmatprep.subr.bf16.mxu0 0
  %2593 = vmatpush1.bf16.xpose.msra.mxu0 0
  %2594 = vmatprep.subr.bf16.mxu0 0
  %2595 = vmatpush1.bf16.xpose.msra.mxu0 0
  %2596 = vmatprep.subr.bf16.mxu0 0
  %2597 = vmatpush1.bf16.xpose.msra.mxu0 0
  %2598 = vmatprep.subr.bf16.mxu0 0
  %2599 = vmatpush1.bf16.xpose.msra.mxu0 0
  %2600 = vmatprep.subr.bf16.mxu0 0
  %2601 = vmatpush1.bf16.xpose.msra.mxu0 0
  %2602 = vmatprep.subr.bf16.mxu0 0
  %2603 = vmatpush1.bf16.xpose.msra.mxu0 0
  %2604 = vmatprep.subr.bf16.mxu0 0
  %2605 = vmatpush1.bf16.xpose.msra.mxu0 0
  %2606 = vmatprep.subr.bf16.mxu0 0
  %2607 = vmatpush1.bf16.xpose.msra.mxu0 0
  %2608 = vmatprep.subr.bf16.mxu0 0
  %2609 = vmatpush1.bf16.xpose.msra.mxu0 0
  %2610 = vmatprep.subr.bf16.mxu0 0
  %2611 = vmatpush1.bf16.xpose.msra.mxu0 0
  %2612 = vmatprep.mubr.bf16.mxu0 0
  %2613 = vmatmul.mubr.bf16.gmra.mrb[0].mxu0 %v2575
  %v2614 = vpop.f32.mrb[0].mxu0
  %v2615 = vadd.f32 %v145, %v2614
  %v2616 = vpop.f32.mrb[0].mxu0
  %v2617 = vpop.f32.mrb[0].mxu0
  %v2618 = vadd.f32 %v146, %v2617
  %v2619 = vpop.f32.mrb[0].mxu0
  %2620 = vdwg.mxu0
  %v2622 = vsel %vm894, %v2563, 0
  %v2625 = vsel %vm894, %v2567, 0
  %2627 = vmatprep.subr.bf16.mxu0 0
  %2628 = vmatpush1.bf16.xpose.msra.mxu0 %v2625
  %2629 = vmatprep.subr.bf16.mxu0 0
  %2630 = vmatpush1.bf16.xpose.msra.mxu0 0
  %2631 = vmatprep.subr.bf16.mxu0 0
  %2632 = vmatpush1.bf16.xpose.msra.mxu0 0
  %2633 = vmatprep.subr.bf16.mxu0 0
  %2634 = vmatpush1.bf16.xpose.msra.mxu0 0
  %2635 = vmatprep.subr.bf16.mxu0 0
  %2636 = vmatpush1.bf16.xpose.msra.mxu0 0
  %2637 = vmatprep.subr.bf16.mxu0 0
  %2638 = vmatpush1.bf16.xpose.msra.mxu0 0
  %2639 = vmatprep.subr.bf16.mxu0 0
  %2640 = vmatpush1.bf16.xpose.msra.mxu0 0
  %2641 = vmatprep.subr.bf16.mxu0 0
  %2642 = vmatpush1.bf16.xpose.msra.mxu0 0
  %2643 = vmatprep.subr.bf16.mxu0 0
  %2644 = vmatpush1.bf16.xpose.msra.mxu0 0
  %2645 = vmatprep.subr.bf16.mxu0 0
  %2646 = vmatpush1.bf16.xpose.msra.mxu0 0
  %2647 = vmatprep.subr.bf16.mxu0 0
  %2648 = vmatpush1.bf16.xpose.msra.mxu0 0
  %2649 = vmatprep.subr.bf16.mxu0 0
  %2650 = vmatpush1.bf16.xpose.msra.mxu0 0
  %2651 = vmatprep.subr.bf16.mxu0 0
  %2652 = vmatpush1.bf16.xpose.msra.mxu0 0
  %2653 = vmatprep.subr.bf16.mxu0 0
  %2654 = vmatpush1.bf16.xpose.msra.mxu0 0
  %2655 = vmatprep.subr.bf16.mxu0 0
  %2656 = vmatpush1.bf16.xpose.msra.mxu0 0
  %2657 = vmatprep.subr.bf16.mxu0 0
  %2658 = vmatpush1.bf16.xpose.msra.mxu0 0
  %2659 = vmatprep.mubr.bf16.mxu0 0
  %2660 = vmatmul.mubr.bf16.gmra.mrb[0].mxu0 %v2622
  %v2661 = vpop.f32.mrb[0].mxu0
  %v2662 = vadd.f32 %v145, %v2661
  %v2663 = vpop.f32.mrb[0].mxu0
  %v2664 = vpop.f32.mrb[0].mxu0
  %v2665 = vadd.f32 %v146, %v2664
  %v2666 = vpop.f32.mrb[0].mxu0
  %2667 = vdwg.mxu0
  %v2669 = vsel %vm894, %v2564, 0
  %v2672 = vsel %vm894, %v2568, 0
  %2674 = vmatprep.subr.bf16.mxu0 0
  %2675 = vmatpush1.bf16.xpose.msra.mxu0 %v2672
  %2676 = vmatprep.subr.bf16.mxu0 0
  %2677 = vmatpush1.bf16.xpose.msra.mxu0 0
  %2678 = vmatprep.subr.bf16.mxu0 0
  %2679 = vmatpush1.bf16.xpose.msra.mxu0 0
  %2680 = vmatprep.subr.bf16.mxu0 0
  %2681 = vmatpush1.bf16.xpose.msra.mxu0 0
  %2682 = vmatprep.subr.bf16.mxu0 0
  %2683 = vmatpush1.bf16.xpose.msra.mxu0 0
  %2684 = vmatprep.subr.bf16.mxu0 0
  %2685 = vmatpush1.bf16.xpose.msra.mxu0 0
  %2686 = vmatprep.subr.bf16.mxu0 0
  %2687 = vmatpush1.bf16.xpose.msra.mxu0 0
  %2688 = vmatprep.subr.bf16.mxu0 0
  %2689 = vmatpush1.bf16.xpose.msra.mxu0 0
  %2690 = vmatprep.subr.bf16.mxu0 0
  %2691 = vmatpush1.bf16.xpose.msra.mxu0 0
  %2692 = vmatprep.subr.bf16.mxu0 0
  %2693 = vmatpush1.bf16.xpose.msra.mxu0 0
  %2694 = vmatprep.subr.bf16.mxu0 0
  %2695 = vmatpush1.bf16.xpose.msra.mxu0 0
  %2696 = vmatprep.subr.bf16.mxu0 0
  %2697 = vmatpush1.bf16.xpose.msra.mxu0 0
  %2698 = vmatprep.subr.bf16.mxu0 0
  %2699 = vmatpush1.bf16.xpose.msra.mxu0 0
  %2700 = vmatprep.subr.bf16.mxu0 0
  %2701 = vmatpush1.bf16.xpose.msra.mxu0 0
  %2702 = vmatprep.subr.bf16.mxu0 0
  %2703 = vmatpush1.bf16.xpose.msra.mxu0 0
  %2704 = vmatprep.subr.bf16.mxu0 0
  %2705 = vmatpush1.bf16.xpose.msra.mxu0 0
  %2706 = vmatprep.mubr.bf16.mxu0 0
  %2707 = vmatmul.mubr.bf16.gmra.mrb[0].mxu0 %v2669
  %v2708 = vpop.f32.mrb[0].mxu0
  %v2709 = vadd.f32 %v145, %v2708
  %v2710 = vpop.f32.mrb[0].mxu0
  %v2711 = vpop.f32.mrb[0].mxu0
  %v2712 = vadd.f32 %v146, %v2711
  %v2713 = vpop.f32.mrb[0].mxu0
  %2714 = vdwg.mxu0
  %v2716 = vsel %vm894, %v2565, 0
  %v2719 = vsel %vm894, %v2569, 0
  %2721 = vmatprep.subr.bf16.mxu0 0
  %2722 = vmatpush1.bf16.xpose.msra.mxu0 %v2719
  %2723 = vmatprep.subr.bf16.mxu0 0
  %2724 = vmatpush1.bf16.xpose.msra.mxu0 0
  %2725 = vmatprep.subr.bf16.mxu0 0
  %2726 = vmatpush1.bf16.xpose.msra.mxu0 0
  %2727 = vmatprep.subr.bf16.mxu0 0
  %2728 = vmatpush1.bf16.xpose.msra.mxu0 0
  %2729 = vmatprep.subr.bf16.mxu0 0
  %2730 = vmatpush1.bf16.xpose.msra.mxu0 0
  %2731 = vmatprep.subr.bf16.mxu0 0
  %2732 = vmatpush1.bf16.xpose.msra.mxu0 0
  %2733 = vmatprep.subr.bf16.mxu0 0
  %2734 = vmatpush1.bf16.xpose.msra.mxu0 0
  %2735 = vmatprep.subr.bf16.mxu0 0
  %2736 = vmatpush1.bf16.xpose.msra.mxu0 0
  %2737 = vmatprep.subr.bf16.mxu0 0
  %2738 = vmatpush1.bf16.xpose.msra.mxu0 0
  %2739 = vmatprep.subr.bf16.mxu0 0
  %2740 = vmatpush1.bf16.xpose.msra.mxu0 0
  %2741 = vmatprep.subr.bf16.mxu0 0
  %2742 = vmatpush1.bf16.xpose.msra.mxu0 0
  %2743 = vmatprep.subr.bf16.mxu0 0
  %2744 = vmatpush1.bf16.xpose.msra.mxu0 0
  %2745 = vmatprep.subr.bf16.mxu0 0
  %2746 = vmatpush1.bf16.xpose.msra.mxu0 0
  %2747 = vmatprep.subr.bf16.mxu0 0
  %2748 = vmatpush1.bf16.xpose.msra.mxu0 0
  %2749 = vmatprep.subr.bf16.mxu0 0
  %2750 = vmatpush1.bf16.xpose.msra.mxu0 0
  %2751 = vmatprep.subr.bf16.mxu0 0
  %2752 = vmatpush1.bf16.xpose.msra.mxu0 0
  %2753 = vmatprep.mubr.bf16.mxu0 0
  %2754 = vmatmul.mubr.bf16.gmra.mrb[0].mxu0 %v2716
  %v2755 = vpop.f32.mrb[0].mxu0
  %v2756 = vadd.f32 %v145, %v2755
  %v2757 = vpop.f32.mrb[0].mxu0
  %v2758 = vpop.f32.mrb[0].mxu0
  %v2759 = vadd.f32 %v146, %v2758
  %v2760 = vpop.f32.mrb[0].mxu0
  %2761 = vdwg.mxu0
  %v2762 = vsel %vm1083, %v2615, -inf
  %2763 = vmax.xlane.f32.xlu0 %v2762
  %v2764 = vpop.xlane.xlu0 %2763
  %v2765 = vsel %vm1087, %v2618, -inf
  %2766 = vmax.xlane.f32.xlu0 %v2765
  %v2767 = vpop.xlane.xlu0 %2766
  %v2768 = vsel %vm1083, %v2662, -inf
  %2769 = vmax.xlane.f32.xlu0 %v2768
  %v2770 = vpop.xlane.xlu0 %2769
  %v2771 = vsel %vm1087, %v2665, -inf
  %2772 = vmax.xlane.f32.xlu0 %v2771
  %v2773 = vpop.xlane.xlu0 %2772
  %v2774 = vsel %vm1083, %v2709, -inf
  %2775 = vmax.xlane.f32.xlu0 %v2774
  %v2776 = vpop.xlane.xlu0 %2775
  %v2777 = vsel %vm1087, %v2712, -inf
  %2778 = vmax.xlane.f32.xlu0 %v2777
  %v2779 = vpop.xlane.xlu0 %2778
  %v2780 = vsel %vm1083, %v2756, -inf
  %2781 = vmax.xlane.f32.xlu0 %v2780
  %v2782 = vpop.xlane.xlu0 %2781
  %v2783 = vsel %vm1087, %v2759, -inf
  %2784 = vmax.xlane.f32.xlu0 %v2783
  %v2785 = vpop.xlane.xlu0 %2784
  %v2786 = vsub.f32 %v2615, %v2764
  %v2787 = vsub.f32 %v2618, %v2767
  %v2788 = vsub.f32 %v2662, %v2770
  %v2789 = vsub.f32 %v2665, %v2773
  %v2790 = vsub.f32 %v2709, %v2776
  %v2791 = vsub.f32 %v2712, %v2779
  %v2792 = vsub.f32 %v2756, %v2782
  %v2793 = vsub.f32 %v2759, %v2785
  %v2794 = vmul.f32 %v2786, 1.442695
  %v2795 = vpow.pop %v2794
  %v2796 = vmul.f32 %v2787, 1.442695
  %v2797 = vpow.pop %v2796
  %v2798 = vmul.f32 %v2788, 1.442695
  %v2799 = vpow.pop %v2798
  %v2800 = vmul.f32 %v2789, 1.442695
  %v2801 = vpow.pop %v2800
  %v2802 = vmul.f32 %v2790, 1.442695
  %v2803 = vpow.pop %v2802
  %v2804 = vmul.f32 %v2791, 1.442695
  %v2805 = vpow.pop %v2804
  %v2806 = vmul.f32 %v2792, 1.442695
  %v2807 = vpow.pop %v2806
  %v2808 = vmul.f32 %v2793, 1.442695
  %v2809 = vpow.pop %v2808
  %v2810 = vsel %vm1083, %v2795, 0.0
  %2811 = vadd.xlane.f32.xlu0 %v2810
  %v2812 = vpop.xlane.xlu0 %2811
  %v2813 = vsel %vm1087, %v2797, 0.0
  %2814 = vadd.xlane.f32.xlu0 %v2813
  %v2815 = vpop.xlane.xlu0 %2814
  %v2816 = vsel %vm1083, %v2799, 0.0
  %2817 = vadd.xlane.f32.xlu0 %v2816
  %v2818 = vpop.xlane.xlu0 %2817
  %v2819 = vsel %vm1087, %v2801, 0.0
  %2820 = vadd.xlane.f32.xlu0 %v2819
  %v2821 = vpop.xlane.xlu0 %2820
  %v2822 = vsel %vm1083, %v2803, 0.0
  %2823 = vadd.xlane.f32.xlu0 %v2822
  %v2824 = vpop.xlane.xlu0 %2823
  %v2825 = vsel %vm1087, %v2805, 0.0
  %2826 = vadd.xlane.f32.xlu0 %v2825
  %v2827 = vpop.xlane.xlu0 %2826
  %v2828 = vsel %vm1083, %v2807, 0.0
  %2829 = vadd.xlane.f32.xlu0 %v2828
  %v2830 = vpop.xlane.xlu0 %2829
  %v2831 = vsel %vm1087, %v2809, 0.0
  %2832 = vadd.xlane.f32.xlu0 %v2831
  %v2833 = vpop.xlane.xlu0 %2832
  %v2834 = vrcp.pop %v2812
  %v2835 = vrcp.pop %v2815
  %v2836 = vrcp.pop %v2818
  %v2837 = vrcp.pop %v2821
  %v2838 = vrcp.pop %v2824
  %v2839 = vrcp.pop %v2827
  %v2840 = vrcp.pop %v2830
  %v2841 = vrcp.pop %v2833
  %v2842 = vmul.f32 %v2795, %v2834
  %v2843 = vmul.f32 %v2797, %v2835
  %v2844 = vmul.f32 %v2799, %v2836
  %v2845 = vmul.f32 %v2801, %v2837
  %v2846 = vmul.f32 %v2803, %v2838
  %v2847 = vmul.f32 %v2805, %v2839
  %v2848 = vmul.f32 %v2807, %v2840
  %v2849 = vmul.f32 %v2809, %v2841
  %v2850 = vpack.c.bf16 %v2843, %v2842
  %v2851 = vpack.c.bf16 %v2845, %v2844
  %v2852 = vpack.c.bf16 %v2847, %v2846
  %v2853 = vpack.c.bf16 %v2849, %v2848
  %v2855 = vsel %vm1083, %v2850, 0
  %v2858 = vsel %vm1180, %v2570, 0
  %2860 = vmatprep.subr.bf16.mxu0 0
  %2861 = vmatpush1.bf16.msra.mxu0 %v2858
  %2862 = vmatprep.subr.bf16.mxu0 0
  %2863 = vmatpush1.bf16.msra.mxu0 0
  %2864 = vmatprep.subr.bf16.mxu0 0
  %2865 = vmatpush1.bf16.msra.mxu0 0
  %2866 = vmatprep.subr.bf16.mxu0 0
  %2867 = vmatpush1.bf16.msra.mxu0 0
  %2868 = vmatprep.subr.bf16.mxu0 0
  %2869 = vmatpush1.bf16.msra.mxu0 0
  %2870 = vmatprep.subr.bf16.mxu0 0
  %2871 = vmatpush1.bf16.msra.mxu0 0
  %2872 = vmatprep.subr.bf16.mxu0 0
  %2873 = vmatpush1.bf16.msra.mxu0 0
  %2874 = vmatprep.subr.bf16.mxu0 0
  %2875 = vmatpush1.bf16.msra.mxu0 0
  %2876 = vmatprep.subr.bf16.mxu0 0
  %2877 = vmatpush1.bf16.msra.mxu0 0
  %2878 = vmatprep.subr.bf16.mxu0 0
  %2879 = vmatpush1.bf16.msra.mxu0 0
  %2880 = vmatprep.subr.bf16.mxu0 0
  %2881 = vmatpush1.bf16.msra.mxu0 0
  %2882 = vmatprep.subr.bf16.mxu0 0
  %2883 = vmatpush1.bf16.msra.mxu0 0
  %2884 = vmatprep.subr.bf16.mxu0 0
  %2885 = vmatpush1.bf16.msra.mxu0 0
  %2886 = vmatprep.subr.bf16.mxu0 0
  %2887 = vmatpush1.bf16.msra.mxu0 0
  %2888 = vmatprep.subr.bf16.mxu0 0
  %2889 = vmatpush1.bf16.msra.mxu0 0
  %2890 = vmatprep.subr.bf16.mxu0 0
  %2891 = vmatpush1.bf16.msra.mxu0 0
  %2892 = vmatprep.mubr.bf16.mxu0 0
  %2893 = vmatmul.mubr.bf16.gmra.mrb[0].mxu0 %v2855
  %v2894 = vpop.f32.mrb[0].mxu0
  %v2895 = vadd.f32 0.0, %v2894
  %v2896 = vpop.f32.mrb[0].mxu0
  %v2897 = vpop.f32.mrb[0].mxu0
  %v2898 = vadd.f32 0.0, %v2897
  %v2899 = vpop.f32.mrb[0].mxu0
  %2900 = vdwg.mxu0
  %v2902 = vsel %vm1083, %v2851, 0
  %v2905 = vsel %vm1180, %v2571, 0
  %2907 = vmatprep.subr.bf16.mxu0 0
  %2908 = vmatpush1.bf16.msra.mxu0 %v2905
  %2909 = vmatprep.subr.bf16.mxu0 0
  %2910 = vmatpush1.bf16.msra.mxu0 0
  %2911 = vmatprep.subr.bf16.mxu0 0
  %2912 = vmatpush1.bf16.msra.mxu0 0
  %2913 = vmatprep.subr.bf16.mxu0 0
  %2914 = vmatpush1.bf16.msra.mxu0 0
  %2915 = vmatprep.subr.bf16.mxu0 0
  %2916 = vmatpush1.bf16.msra.mxu0 0
  %2917 = vmatprep.subr.bf16.mxu0 0
  %2918 = vmatpush1.bf16.msra.mxu0 0
  %2919 = vmatprep.subr.bf16.mxu0 0
  %2920 = vmatpush1.bf16.msra.mxu0 0
  %2921 = vmatprep.subr.bf16.mxu0 0
  %2922 = vmatpush1.bf16.msra.mxu0 0
  %2923 = vmatprep.subr.bf16.mxu0 0
  %2924 = vmatpush1.bf16.msra.mxu0 0
  %2925 = vmatprep.subr.bf16.mxu0 0
  %2926 = vmatpush1.bf16.msra.mxu0 0
  %2927 = vmatprep.subr.bf16.mxu0 0
  %2928 = vmatpush1.bf16.msra.mxu0 0
  %2929 = vmatprep.subr.bf16.mxu0 0
  %2930 = vmatpush1.bf16.msra.mxu0 0
  %2931 = vmatprep.subr.bf16.mxu0 0
  %2932 = vmatpush1.bf16.msra.mxu0 0
  %2933 = vmatprep.subr.bf16.mxu0 0
  %2934 = vmatpush1.bf16.msra.mxu0 0
  %2935 = vmatprep.subr.bf16.mxu0 0
  %2936 = vmatpush1.bf16.msra.mxu0 0
  %2937 = vmatprep.subr.bf16.mxu0 0
  %2938 = vmatpush1.bf16.msra.mxu0 0
  %2939 = vmatprep.mubr.bf16.mxu0 0
  %2940 = vmatmul.mubr.bf16.gmra.mrb[0].mxu0 %v2902
  %v2941 = vpop.f32.mrb[0].mxu0
  %v2942 = vadd.f32 0.0, %v2941
  %v2943 = vpop.f32.mrb[0].mxu0
  %v2944 = vpop.f32.mrb[0].mxu0
  %v2945 = vadd.f32 0.0, %v2944
  %v2946 = vpop.f32.mrb[0].mxu0
  %2947 = vdwg.mxu0
  %v2949 = vsel %vm1083, %v2852, 0
  %v2952 = vsel %vm1180, %v2572, 0
  %2954 = vmatprep.subr.bf16.mxu0 0
  %2955 = vmatpush1.bf16.msra.mxu0 %v2952
  %2956 = vmatprep.subr.bf16.mxu0 0
  %2957 = vmatpush1.bf16.msra.mxu0 0
  %2958 = vmatprep.subr.bf16.mxu0 0
  %2959 = vmatpush1.bf16.msra.mxu0 0
  %2960 = vmatprep.subr.bf16.mxu0 0
  %2961 = vmatpush1.bf16.msra.mxu0 0
  %2962 = vmatprep.subr.bf16.mxu0 0
  %2963 = vmatpush1.bf16.msra.mxu0 0
  %2964 = vmatprep.subr.bf16.mxu0 0
  %2965 = vmatpush1.bf16.msra.mxu0 0
  %2966 = vmatprep.subr.bf16.mxu0 0
  %2967 = vmatpush1.bf16.msra.mxu0 0
  %2968 = vmatprep.subr.bf16.mxu0 0
  %2969 = vmatpush1.bf16.msra.mxu0 0
  %2970 = vmatprep.subr.bf16.mxu0 0
  %2971 = vmatpush1.bf16.msra.mxu0 0
  %2972 = vmatprep.subr.bf16.mxu0 0
  %2973 = vmatpush1.bf16.msra.mxu0 0
  %2974 = vmatprep.subr.bf16.mxu0 0
  %2975 = vmatpush1.bf16.msra.mxu0 0
  %2976 = vmatprep.subr.bf16.mxu0 0
  %2977 = vmatpush1.bf16.msra.mxu0 0
  %2978 = vmatprep.subr.bf16.mxu0 0
  %2979 = vmatpush1.bf16.msra.mxu0 0
  %2980 = vmatprep.subr.bf16.mxu0 0
  %2981 = vmatpush1.bf16.msra.mxu0 0
  %2982 = vmatprep.subr.bf16.mxu0 0
  %2983 = vmatpush1.bf16.msra.mxu0 0
  %2984 = vmatprep.subr.bf16.mxu0 0
  %2985 = vmatpush1.bf16.msra.mxu0 0
  %2986 = vmatprep.mubr.bf16.mxu0 0
  %2987 = vmatmul.mubr.bf16.gmra.mrb[0].mxu0 %v2949
  %v2988 = vpop.f32.mrb[0].mxu0
  %v2989 = vadd.f32 0.0, %v2988
  %v2990 = vpop.f32.mrb[0].mxu0
  %v2991 = vpop.f32.mrb[0].mxu0
  %v2992 = vadd.f32 0.0, %v2991
  %v2993 = vpop.f32.mrb[0].mxu0
  %2994 = vdwg.mxu0
  %v2996 = vsel %vm1083, %v2853, 0
  %v2999 = vsel %vm1180, %v2573, 0
  %3001 = vmatprep.subr.bf16.mxu0 0
  %3002 = vmatpush1.bf16.msra.mxu0 %v2999
  %3003 = vmatprep.subr.bf16.mxu0 0
  %3004 = vmatpush1.bf16.msra.mxu0 0
  %3005 = vmatprep.subr.bf16.mxu0 0
  %3006 = vmatpush1.bf16.msra.mxu0 0
  %3007 = vmatprep.subr.bf16.mxu0 0
  %3008 = vmatpush1.bf16.msra.mxu0 0
  %3009 = vmatprep.subr.bf16.mxu0 0
  %3010 = vmatpush1.bf16.msra.mxu0 0
  %3011 = vmatprep.subr.bf16.mxu0 0
  %3012 = vmatpush1.bf16.msra.mxu0 0
  %3013 = vmatprep.subr.bf16.mxu0 0
  %3014 = vmatpush1.bf16.msra.mxu0 0
  %3015 = vmatprep.subr.bf16.mxu0 0
  %3016 = vmatpush1.bf16.msra.mxu0 0
  %3017 = vmatprep.subr.bf16.mxu0 0
  %3018 = vmatpush1.bf16.msra.mxu0 0
  %3019 = vmatprep.subr.bf16.mxu0 0
  %3020 = vmatpush1.bf16.msra.mxu0 0
  %3021 = vmatprep.subr.bf16.mxu0 0
  %3022 = vmatpush1.bf16.msra.mxu0 0
  %3023 = vmatprep.subr.bf16.mxu0 0
  %3024 = vmatpush1.bf16.msra.mxu0 0
  %3025 = vmatprep.subr.bf16.mxu0 0
  %3026 = vmatpush1.bf16.msra.mxu0 0
  %3027 = vmatprep.subr.bf16.mxu0 0
  %3028 = vmatpush1.bf16.msra.mxu0 0
  %3029 = vmatprep.subr.bf16.mxu0 0
  %3030 = vmatpush1.bf16.msra.mxu0 0
  %3031 = vmatprep.subr.bf16.mxu0 0
  %3032 = vmatpush1.bf16.msra.mxu0 0
  %3033 = vmatprep.mubr.bf16.mxu0 0
  %3034 = vmatmul.mubr.bf16.gmra.mrb[0].mxu0 %v2996
  %v3035 = vpop.f32.mrb[0].mxu0
  %v3036 = vadd.f32 0.0, %v3035
  %v3037 = vpop.f32.mrb[0].mxu0
  %v3038 = vpop.f32.mrb[0].mxu0
  %v3039 = vadd.f32 0.0, %v3038
  %v3040 = vpop.f32.mrb[0].mxu0
  %3041 = vdwg.mxu0
  %v3042 = vpack.c.bf16 %v2898, %v2895
  %v3043 = vpack.c.bf16 %v2945, %v2942
  %v3044 = vpack.c.bf16 %v2992, %v2989
  %v3045 = vpack.c.bf16 %v3039, %v3036
  %s3046 = scalar_lea.vmem %s7, 16
  %v3047 = vld [vmem:[%s3046] sm:$0xf]
  %v3048 = vld [vmem:[%s3046 + $0x4] sm:$0xf]
  %v3049 = vld [vmem:[%s3046 + $0x8] sm:$0xf]
  %v3050 = vld [vmem:[%s3046 + $0xc] sm:$0xf]
  %v3052 = vsel %vm894, %v3042, 0
  %v3055 = vsel %vm1377, %v3047, 0
  %3057 = vmatprep.subr.bf16.mxu0 0
  %3058 = vmatpush1.bf16.msra.mxu0 %v3055
  %3059 = vmatprep.subr.bf16.mxu0 0
  %3060 = vmatpush1.bf16.msra.mxu0 0
  %3061 = vmatprep.subr.bf16.mxu0 0
  %3062 = vmatpush1.bf16.msra.mxu0 0
  %3063 = vmatprep.subr.bf16.mxu0 0
  %3064 = vmatpush1.bf16.msra.mxu0 0
  %3065 = vmatprep.subr.bf16.mxu0 0
  %3066 = vmatpush1.bf16.msra.mxu0 0
  %3067 = vmatprep.subr.bf16.mxu0 0
  %3068 = vmatpush1.bf16.msra.mxu0 0
  %3069 = vmatprep.subr.bf16.mxu0 0
  %3070 = vmatpush1.bf16.msra.mxu0 0
  %3071 = vmatprep.subr.bf16.mxu0 0
  %3072 = vmatpush1.bf16.msra.mxu0 0
  %3073 = vmatprep.subr.bf16.mxu0 0
  %3074 = vmatpush1.bf16.msra.mxu0 0
  %3075 = vmatprep.subr.bf16.mxu0 0
  %3076 = vmatpush1.bf16.msra.mxu0 0
  %3077 = vmatprep.subr.bf16.mxu0 0
  %3078 = vmatpush1.bf16.msra.mxu0 0
  %3079 = vmatprep.subr.bf16.mxu0 0
  %3080 = vmatpush1.bf16.msra.mxu0 0
  %3081 = vmatprep.subr.bf16.mxu0 0
  %3082 = vmatpush1.bf16.msra.mxu0 0
  %3083 = vmatprep.subr.bf16.mxu0 0
  %3084 = vmatpush1.bf16.msra.mxu0 0
  %3085 = vmatprep.subr.bf16.mxu0 0
  %3086 = vmatpush1.bf16.msra.mxu0 0
  %3087 = vmatprep.subr.bf16.mxu0 0
  %3088 = vmatpush1.bf16.msra.mxu0 0
  %3089 = vmatprep.mubr.bf16.mxu0 0
  %3090 = vmatmul.mubr.bf16.gmra.mrb[0].mxu0 %v3052
  %v3091 = vpop.f32.mrb[0].mxu0
  %v3092 = vadd.f32 0.0, %v3091
  %v3093 = vpop.f32.mrb[0].mxu0
  %v3094 = vpop.f32.mrb[0].mxu0
  %v3095 = vadd.f32 0.0, %v3094
  %v3096 = vpop.f32.mrb[0].mxu0
  %3097 = vdwg.mxu0
  %v3099 = vsel %vm894, %v3043, 0
  %v3102 = vsel %vm1377, %v3048, 0
  %3104 = vmatprep.subr.bf16.mxu0 0
  %3105 = vmatpush1.bf16.msra.mxu0 %v3102
  %3106 = vmatprep.subr.bf16.mxu0 0
  %3107 = vmatpush1.bf16.msra.mxu0 0
  %3108 = vmatprep.subr.bf16.mxu0 0
  %3109 = vmatpush1.bf16.msra.mxu0 0
  %3110 = vmatprep.subr.bf16.mxu0 0
  %3111 = vmatpush1.bf16.msra.mxu0 0
  %3112 = vmatprep.subr.bf16.mxu0 0
  %3113 = vmatpush1.bf16.msra.mxu0 0
  %3114 = vmatprep.subr.bf16.mxu0 0
  %3115 = vmatpush1.bf16.msra.mxu0 0
  %3116 = vmatprep.subr.bf16.mxu0 0
  %3117 = vmatpush1.bf16.msra.mxu0 0
  %3118 = vmatprep.subr.bf16.mxu0 0
  %3119 = vmatpush1.bf16.msra.mxu0 0
  %3120 = vmatprep.subr.bf16.mxu0 0
  %3121 = vmatpush1.bf16.msra.mxu0 0
  %3122 = vmatprep.subr.bf16.mxu0 0
  %3123 = vmatpush1.bf16.msra.mxu0 0
  %3124 = vmatprep.subr.bf16.mxu0 0
  %3125 = vmatpush1.bf16.msra.mxu0 0
  %3126 = vmatprep.subr.bf16.mxu0 0
  %3127 = vmatpush1.bf16.msra.mxu0 0
  %3128 = vmatprep.subr.bf16.mxu0 0
  %3129 = vmatpush1.bf16.msra.mxu0 0
  %3130 = vmatprep.subr.bf16.mxu0 0
  %3131 = vmatpush1.bf16.msra.mxu0 0
  %3132 = vmatprep.subr.bf16.mxu0 0
  %3133 = vmatpush1.bf16.msra.mxu0 0
  %3134 = vmatprep.subr.bf16.mxu0 0
  %3135 = vmatpush1.bf16.msra.mxu0 0
  %3136 = vmatprep.mubr.bf16.mxu0 0
  %3137 = vmatmul.mubr.bf16.gmra.mrb[0].mxu0 %v3099
  %v3138 = vpop.f32.mrb[0].mxu0
  %v3139 = vadd.f32 0.0, %v3138
  %v3140 = vpop.f32.mrb[0].mxu0
  %v3141 = vpop.f32.mrb[0].mxu0
  %v3142 = vadd.f32 0.0, %v3141
  %v3143 = vpop.f32.mrb[0].mxu0
  %3144 = vdwg.mxu0
  %v3146 = vsel %vm894, %v3044, 0
  %v3149 = vsel %vm1377, %v3049, 0
  %3151 = vmatprep.subr.bf16.mxu0 0
  %3152 = vmatpush1.bf16.msra.mxu0 %v3149
  %3153 = vmatprep.subr.bf16.mxu0 0
  %3154 = vmatpush1.bf16.msra.mxu0 0
  %3155 = vmatprep.subr.bf16.mxu0 0
  %3156 = vmatpush1.bf16.msra.mxu0 0
  %3157 = vmatprep.subr.bf16.mxu0 0
  %3158 = vmatpush1.bf16.msra.mxu0 0
  %3159 = vmatprep.subr.bf16.mxu0 0
  %3160 = vmatpush1.bf16.msra.mxu0 0
  %3161 = vmatprep.subr.bf16.mxu0 0
  %3162 = vmatpush1.bf16.msra.mxu0 0
  %3163 = vmatprep.subr.bf16.mxu0 0
  %3164 = vmatpush1.bf16.msra.mxu0 0
  %3165 = vmatprep.subr.bf16.mxu0 0
  %3166 = vmatpush1.bf16.msra.mxu0 0
  %3167 = vmatprep.subr.bf16.mxu0 0
  %3168 = vmatpush1.bf16.msra.mxu0 0
  %3169 = vmatprep.subr.bf16.mxu0 0
  %3170 = vmatpush1.bf16.msra.mxu0 0
  %3171 = vmatprep.subr.bf16.mxu0 0
  %3172 = vmatpush1.bf16.msra.mxu0 0
  %3173 = vmatprep.subr.bf16.mxu0 0
  %3174 = vmatpush1.bf16.msra.mxu0 0
  %3175 = vmatprep.subr.bf16.mxu0 0
  %3176 = vmatpush1.bf16.msra.mxu0 0
  %3177 = vmatprep.subr.bf16.mxu0 0
  %3178 = vmatpush1.bf16.msra.mxu0 0
  %3179 = vmatprep.subr.bf16.mxu0 0
  %3180 = vmatpush1.bf16.msra.mxu0 0
  %3181 = vmatprep.subr.bf16.mxu0 0
  %3182 = vmatpush1.bf16.msra.mxu0 0
  %3183 = vmatprep.mubr.bf16.mxu0 0
  %3184 = vmatmul.mubr.bf16.gmra.mrb[0].mxu0 %v3146
  %v3185 = vpop.f32.mrb[0].mxu0
  %v3186 = vadd.f32 0.0, %v3185
  %v3187 = vpop.f32.mrb[0].mxu0
  %v3188 = vpop.f32.mrb[0].mxu0
  %v3189 = vadd.f32 0.0, %v3188
  %v3190 = vpop.f32.mrb[0].mxu0
  %3191 = vdwg.mxu0
  %v3193 = vsel %vm894, %v3045, 0
  %v3196 = vsel %vm1377, %v3050, 0
  %3198 = vmatprep.subr.bf16.mxu0 0
  %3199 = vmatpush1.bf16.msra.mxu0 %v3196
  %3200 = vmatprep.subr.bf16.mxu0 0
  %3201 = vmatpush1.bf16.msra.mxu0 0
  %3202 = vmatprep.subr.bf16.mxu0 0
  %3203 = vmatpush1.bf16.msra.mxu0 0
  %3204 = vmatprep.subr.bf16.mxu0 0
  %3205 = vmatpush1.bf16.msra.mxu0 0
  %3206 = vmatprep.subr.bf16.mxu0 0
  %3207 = vmatpush1.bf16.msra.mxu0 0
  %3208 = vmatprep.subr.bf16.mxu0 0
  %3209 = vmatpush1.bf16.msra.mxu0 0
  %3210 = vmatprep.subr.bf16.mxu0 0
  %3211 = vmatpush1.bf16.msra.mxu0 0
  %3212 = vmatprep.subr.bf16.mxu0 0
  %3213 = vmatpush1.bf16.msra.mxu0 0
  %3214 = vmatprep.subr.bf16.mxu0 0
  %3215 = vmatpush1.bf16.msra.mxu0 0
  %3216 = vmatprep.subr.bf16.mxu0 0
  %3217 = vmatpush1.bf16.msra.mxu0 0
  %3218 = vmatprep.subr.bf16.mxu0 0
  %3219 = vmatpush1.bf16.msra.mxu0 0
  %3220 = vmatprep.subr.bf16.mxu0 0
  %3221 = vmatpush1.bf16.msra.mxu0 0
  %3222 = vmatprep.subr.bf16.mxu0 0
  %3223 = vmatpush1.bf16.msra.mxu0 0
  %3224 = vmatprep.subr.bf16.mxu0 0
  %3225 = vmatpush1.bf16.msra.mxu0 0
  %3226 = vmatprep.subr.bf16.mxu0 0
  %3227 = vmatpush1.bf16.msra.mxu0 0
  %3228 = vmatprep.subr.bf16.mxu0 0
  %3229 = vmatpush1.bf16.msra.mxu0 0
  %3230 = vmatprep.mubr.bf16.mxu0 0
  %3231 = vmatmul.mubr.bf16.gmra.mrb[0].mxu0 %v3193
  %v3232 = vpop.f32.mrb[0].mxu0
  %v3233 = vadd.f32 0.0, %v3232
  %v3234 = vpop.f32.mrb[0].mxu0
  %v3235 = vpop.f32.mrb[0].mxu0
  %v3236 = vadd.f32 0.0, %v3235
  %v3237 = vpop.f32.mrb[0].mxu0
  %3238 = vdwg.mxu0
  %v3239 = vadd.f32 %v3092, %v3139
  %v3240 = vadd.f32 %v3095, %v3142
  %v3241 = vadd.f32 %v3239, %v3186
  %v3242 = vadd.f32 %v3240, %v3189
  %v3243 = vadd.f32 %v3241, %v3233
  %v3244 = vadd.f32 %v3242, %v3236
  %v3245 = vadd.f32 %v1825, %v3243
  %v3246 = vadd.f32 %v1826, %v3244
  %s3247 = scalar_lea.vmem %s8, 1
  %v3248 = vld [vmem:[%s3247] sm:$0x1]
  %v3250 = vlaneseq
  %v3251 = vshrl.u32 %v3250, 7
  %v3252 = vsub.s32 0, %v3251
  %v3253 = vrot.slane %v3248, %v3252
  %v3255 = vadd.f32 %v3245, %v3253
  %v3256 = vadd.f32 %v3246, %v3253
  %s3257 = scalar_lea.vmem %s9, 1
  %v3258 = vld [vmem:[%s3257] sm:$0x1]
  %s3259 = scalar_lea.vmem %s10, 1
  %v3260 = vld [vmem:[%s3259] sm:$0x1]
  %v3261 = vsel %vm149, %v3255, 0.0
  %3262 = vadd.xlane.f32.xlu0 %v3261
  %v3263 = vpop.xlane.xlu0 %3262
  %v3264 = vsel %vm153, %v3256, 0.0
  %3265 = vadd.xlane.f32.xlu0 %v3264
  %v3266 = vpop.xlane.xlu0 %3265
  %v3267 = vmul.f32 %v3263, %v157
  %v3268 = vmul.f32 %v3266, %v157
  %v3269 = vsub.f32 %v3255, %v3267
  %v3270 = vsub.f32 %v3256, %v3268
  %v3271 = vmul.f32 %v3269, %v3269
  %v3272 = vmul.f32 %v3270, %v3270
  %v3273 = vsel %vm149, %v3271, 0.0
  %3274 = vadd.xlane.f32.xlu0 %v3273
  %v3275 = vpop.xlane.xlu0 %3274
  %v3276 = vsel %vm153, %v3272, 0.0
  %3277 = vadd.xlane.f32.xlu0 %v3276
  %v3278 = vpop.xlane.xlu0 %3277
  %v3279 = vmul.f32 %v3275, %v157
  %v3280 = vmul.f32 %v3278, %v157
  %v3281 = vadd.f32 %v3279, 1e-05
  %v3282 = vadd.f32 %v3280, 1e-05
  %v3283 = vrsqrt.pop %v3281
  %v3284 = vrsqrt.pop %v3282
  %v3285 = vmul.f32 %v3269, %v3283
  %v3286 = vmul.f32 %v3270, %v3284
  %v3288 = vlaneseq
  %v3289 = vshrl.u32 %v3288, 7
  %v3290 = vsub.s32 0, %v3289
  %v3291 = vrot.slane %v3258, %v3290
  %v3293 = vmul.f32 %v3285, %v3291
  %v3294 = vmul.f32 %v3286, %v3291
  %v3296 = vlaneseq
  %v3297 = vshrl.u32 %v3296, 7
  %v3298 = vsub.s32 0, %v3297
  %v3299 = vrot.slane %v3260, %v3298
  %v3301 = vadd.f32 %v3293, %v3299
  %v3302 = vadd.f32 %v3294, %v3299
  %v3303 = vpack.c.bf16 %v3302, %v3301
  %s3304 = scalar_lea.vmem %s11, 16
  %v3305 = vld [vmem:[%s3304] sm:$0xf]
  %v3306 = vld [vmem:[%s3304 + $0x4] sm:$0xf]
  %v3307 = vld [vmem:[%s3304 + $0x8] sm:$0xf]
  %v3308 = vld [vmem:[%s3304 + $0xc] sm:$0xf]
  %s3309 = scalar_lea.vmem %s12, 1
  %v3310 = vld [vmem:[%s3309] sm:$0x1]
  %v3312 = vlaneseq
  %v3313 = vshrl.u32 %v3312, 7
  %v3314 = vsub.s32 0, %v3313
  %v3315 = vrot.slane %v3310, %v3314
  %v3321 = vunpack.c.l.b16 %v3305
  %v3322 = vunpack.c.l.b16 %v3306
  %v3323 = vunpack.c.l.b16 %v3307
  %v3324 = vunpack.c.l.b16 %v3308
  %v3325 = vpack.c.b16 %v3322, %v3321
  %v3326 = vpack.c.b16 %v3324, %v3323
  %v3330 = vsel %vm149, %v3303, 0
  %3332 = vmatprep.subr.bf16.mxu0 0
  %3333 = vmatpush1.bf16.msra.mxu0 %v3325
  %3334 = vmatprep.subr.bf16.mxu0 0
  %3335 = vmatpush1.bf16.msra.mxu0 %v3326
  %3336 = vmatprep.subr.bf16.mxu0 0
  %3337 = vmatpush1.bf16.msra.mxu0 0
  %3338 = vmatprep.subr.bf16.mxu0 0
  %3339 = vmatpush1.bf16.msra.mxu0 0
  %3340 = vmatprep.subr.bf16.mxu0 0
  %3341 = vmatpush1.bf16.msra.mxu0 0
  %3342 = vmatprep.subr.bf16.mxu0 0
  %3343 = vmatpush1.bf16.msra.mxu0 0
  %3344 = vmatprep.subr.bf16.mxu0 0
  %3345 = vmatpush1.bf16.msra.mxu0 0
  %3346 = vmatprep.subr.bf16.mxu0 0
  %3347 = vmatpush1.bf16.msra.mxu0 0
  %3348 = vmatprep.subr.bf16.mxu0 0
  %3349 = vmatpush1.bf16.msra.mxu0 0
  %3350 = vmatprep.subr.bf16.mxu0 0
  %3351 = vmatpush1.bf16.msra.mxu0 0
  %3352 = vmatprep.subr.bf16.mxu0 0
  %3353 = vmatpush1.bf16.msra.mxu0 0
  %3354 = vmatprep.subr.bf16.mxu0 0
  %3355 = vmatpush1.bf16.msra.mxu0 0
  %3356 = vmatprep.subr.bf16.mxu0 0
  %3357 = vmatpush1.bf16.msra.mxu0 0
  %3358 = vmatprep.subr.bf16.mxu0 0
  %3359 = vmatpush1.bf16.msra.mxu0 0
  %3360 = vmatprep.subr.bf16.mxu0 0
  %3361 = vmatpush1.bf16.msra.mxu0 0
  %3362 = vmatprep.subr.bf16.mxu0 0
  %3363 = vmatpush1.bf16.msra.mxu0 0
  %3364 = vmatprep.mubr.bf16.mxu0 0
  %3365 = vmatmul.mubr.bf16.gmra.mrb[0].mxu0 %v3330
  %v3366 = vpop.f32.mrb[0].mxu0
  %v3367 = vadd.f32 %v3315, %v3366
  %v3368 = vpop.f32.mrb[0].mxu0
  %v3369 = vpop.f32.mrb[0].mxu0
  %v3370 = vadd.f32 %v3315, %v3369
  %v3371 = vpop.f32.mrb[0].mxu0
  %3372 = vdwg.mxu0
  %v3373 = vmul.f32 %v3367, %v3367
  %v3374 = vmul.f32 %v3370, %v3370
  %v3375 = vmul.f32 %v3367, %v3373
  %v3376 = vmul.f32 %v3370, %v3374
  %v3377 = vmul.f32 %v3375, 0.044715
  %v3378 = vmul.f32 %v3376, 0.044715
  %v3379 = vadd.f32 %v3367, %v3377
  %v3380 = vadd.f32 %v3370, %v3378
  %v3381 = vmul.f32 %v3379, 0.7978846
  %v3382 = vmul.f32 %v3380, 0.7978846
  %v3383 = vtanh.pop %v3381
  %v3384 = vtanh.pop %v3382
  %v3385 = vadd.f32 %v3383, 1.0
  %v3386 = vadd.f32 %v3384, 1.0
  %v3387 = vmul.f32 %v3385, 0.5
  %v3388 = vmul.f32 %v3386, 0.5
  %v3389 = vmul.f32 %v3367, %v3387
  %v3390 = vmul.f32 %v3370, %v3388
  %v3391 = vpack.c.bf16 %v3390, %v3389
  %s3392 = scalar_lea.vmem %s13, 64
  %v3393 = vld [vmem:[%s3392] sm:$0xf]
  %v3394 = vld [vmem:[%s3392 + $0x4] sm:$0xf]
  %v3395 = vld [vmem:[%s3392 + $0x8] sm:$0xf]
  %v3396 = vld [vmem:[%s3392 + $0xc] sm:$0xf]
  %v3397 = vld [vmem:[%s3392 + $0x10] sm:$0xf]
  %v3398 = vld [vmem:[%s3392 + $0x14] sm:$0xf]
  %v3399 = vld [vmem:[%s3392 + $0x18] sm:$0xf]
  %v3400 = vld [vmem:[%s3392 + $0x1c] sm:$0xf]
  %v3401 = vld [vmem:[%s3392 + $0x20] sm:$0xf]
  %v3402 = vld [vmem:[%s3392 + $0x24] sm:$0xf]
  %v3403 = vld [vmem:[%s3392 + $0x28] sm:$0xf]
  %v3404 = vld [vmem:[%s3392 + $0x2c] sm:$0xf]
  %v3405 = vld [vmem:[%s3392 + $0x30] sm:$0xf]
  %v3406 = vld [vmem:[%s3392 + $0x34] sm:$0xf]
  %v3407 = vld [vmem:[%s3392 + $0x38] sm:$0xf]
  %v3408 = vld [vmem:[%s3392 + $0x3c] sm:$0xf]
  %v3425 = vunpack.c.l.b16 %v3393
  %v3426 = vunpack.c.l.b16 %v3394
  %v3427 = vunpack.c.l.b16 %v3395
  %v3428 = vunpack.c.l.b16 %v3396
  %v3429 = vunpack.c.l.b16 %v3397
  %v3430 = vunpack.c.l.b16 %v3398
  %v3431 = vunpack.c.l.b16 %v3399
  %v3432 = vunpack.c.l.b16 %v3400
  %v3433 = vunpack.c.l.b16 %v3401
  %v3434 = vunpack.c.l.b16 %v3402
  %v3435 = vunpack.c.l.b16 %v3403
  %v3436 = vunpack.c.l.b16 %v3404
  %v3437 = vunpack.c.l.b16 %v3405
  %v3438 = vunpack.c.l.b16 %v3406
  %v3439 = vunpack.c.l.b16 %v3407
  %v3440 = vunpack.c.l.b16 %v3408
  %v3441 = vpack.c.b16 %v3426, %v3425
  %v3442 = vpack.c.b16 %v3428, %v3427
  %v3443 = vpack.c.b16 %v3430, %v3429
  %v3444 = vpack.c.b16 %v3432, %v3431
  %v3445 = vpack.c.b16 %v3434, %v3433
  %v3446 = vpack.c.b16 %v3436, %v3435
  %v3447 = vpack.c.b16 %v3438, %v3437
  %v3448 = vpack.c.b16 %v3440, %v3439
  %3457 = vmatprep.subr.bf16.mxu0 0
  %3458 = vmatpush1.bf16.msra.mxu0 %v3441
  %3459 = vmatprep.subr.bf16.mxu0 0
  %3460 = vmatpush1.bf16.msra.mxu0 %v3442
  %3461 = vmatprep.subr.bf16.mxu0 0
  %3462 = vmatpush1.bf16.msra.mxu0 %v3443
  %3463 = vmatprep.subr.bf16.mxu0 0
  %3464 = vmatpush1.bf16.msra.mxu0 %v3444
  %3465 = vmatprep.subr.bf16.mxu0 0
  %3466 = vmatpush1.bf16.msra.mxu0 %v3445
  %3467 = vmatprep.subr.bf16.mxu0 0
  %3468 = vmatpush1.bf16.msra.mxu0 %v3446
  %3469 = vmatprep.subr.bf16.mxu0 0
  %3470 = vmatpush1.bf16.msra.mxu0 %v3447
  %3471 = vmatprep.subr.bf16.mxu0 0
  %3472 = vmatpush1.bf16.msra.mxu0 %v3448
  %3473 = vmatprep.subr.bf16.mxu0 0
  %3474 = vmatpush1.bf16.msra.mxu0 0
  %3475 = vmatprep.subr.bf16.mxu0 0
  %3476 = vmatpush1.bf16.msra.mxu0 0
  %3477 = vmatprep.subr.bf16.mxu0 0
  %3478 = vmatpush1.bf16.msra.mxu0 0
  %3479 = vmatprep.subr.bf16.mxu0 0
  %3480 = vmatpush1.bf16.msra.mxu0 0
  %3481 = vmatprep.subr.bf16.mxu0 0
  %3482 = vmatpush1.bf16.msra.mxu0 0
  %3483 = vmatprep.subr.bf16.mxu0 0
  %3484 = vmatpush1.bf16.msra.mxu0 0
  %3485 = vmatprep.subr.bf16.mxu0 0
  %3486 = vmatpush1.bf16.msra.mxu0 0
  %3487 = vmatprep.subr.bf16.mxu0 0
  %3488 = vmatpush1.bf16.msra.mxu0 0
  %3489 = vmatprep.mubr.bf16.mxu0 0
  %3490 = vmatmul.mubr.bf16.gmra.mrb[0].mxu0 %v3391
  %v3491 = vpop.f32.mrb[0].mxu0
  %v3492 = vadd.f32 0.0, %v3491
  %v3493 = vpop.f32.mrb[0].mxu0
  %v3494 = vpop.f32.mrb[0].mxu0
  %v3495 = vadd.f32 0.0, %v3494
  %v3496 = vpop.f32.mrb[0].mxu0
  %3497 = vdwg.mxu0
  %v3498 = vadd.f32 %v3255, %v3492
  %v3499 = vadd.f32 %v3256, %v3495
  %s3500 = scalar_lea.vmem %s14, 1
  %v3501 = vld [vmem:[%s3500] sm:$0x1]
  %v3503 = vlaneseq
  %v3504 = vshrl.u32 %v3503, 7
  %v3505 = vsub.s32 0, %v3504
  %v3506 = vrot.slane %v3501, %v3505
  %v3508 = vadd.f32 %v3498, %v3506
  %v3509 = vadd.f32 %v3499, %v3506
  %v3510 = vld [vmem:[%s15] sm:$0x1]
  %v3511 = vld [vmem:[%s16] sm:$0x1]
  %v3512 = vsel %vm149, %v3508, 0.0
  %3513 = vadd.xlane.f32.xlu0 %v3512
  %v3514 = vpop.xlane.xlu0 %3513
  %v3515 = vsel %vm153, %v3509, 0.0
  %3516 = vadd.xlane.f32.xlu0 %v3515
  %v3517 = vpop.xlane.xlu0 %3516
  %v3518 = vmul.f32 %v3514, %v157
  %v3519 = vmul.f32 %v3517, %v157
  %v3520 = vsub.f32 %v3508, %v3518
  %v3521 = vsub.f32 %v3509, %v3519
  %v3522 = vmul.f32 %v3520, %v3520
  %v3523 = vmul.f32 %v3521, %v3521
  %v3524 = vsel %vm149, %v3522, 0.0
  %3525 = vadd.xlane.f32.xlu0 %v3524
  %v3526 = vpop.xlane.xlu0 %3525
  %v3527 = vsel %vm153, %v3523, 0.0
  %3528 = vadd.xlane.f32.xlu0 %v3527
  %v3529 = vpop.xlane.xlu0 %3528
  %v3530 = vmul.f32 %v3526, %v157
  %v3531 = vmul.f32 %v3529, %v157
  %v3532 = vadd.f32 %v3530, 1e-05
  %v3533 = vadd.f32 %v3531, 1e-05
  %v3534 = vrsqrt.pop %v3532
  %v3535 = vrsqrt.pop %v3533
  %v3536 = vmul.f32 %v3520, %v3534
  %v3537 = vmul.f32 %v3521, %v3535
  %v3539 = vlaneseq
  %v3540 = vshrl.u32 %v3539, 7
  %v3541 = vsub.s32 0, %v3540
  %v3542 = vrot.slane %v3510, %v3541
  %v3544 = vmul.f32 %v3536, %v3542
  %v3545 = vmul.f32 %v3537, %v3542
  %v3547 = vlaneseq
  %v3548 = vshrl.u32 %v3547, 7
  %v3549 = vsub.s32 0, %v3548
  %v3550 = vrot.slane %v3511, %v3549
  %v3552 = vadd.f32 %v3544, %v3550
  %v3553 = vadd.f32 %v3545, %v3550
  %3554 = vst.msk [vmem:[%s17] sm:$0xff] %vm149, %v3552
  %3555 = vst.msk [vmem:[%s17 + $0x8] sm:$0x3] %vm153, %v3553
  // Predicated region
  $region70: #{vit_forward.1} parent=0 // pred_check
    _
  $region71: #{vit_forward.1} parent=0 // pred_check_branch
    %3557 = sbr.rel (0) target = $region73
  $region72: #{vit_forward.1} parent=0 // pred_region
    _
  $region73: #{vit_forward.1} parent=0 // pred_fallthru
    _
  // Predicated region
  $region74: #{vit_forward.1} parent=0 // pred_check
    _
  $region75: #{vit_forward.1} parent=0 // pred_check_branch
    %3559 = sbr.rel (0) target = $region77
  $region76: #{vit_forward.1} parent=0 // pred_region
    _
  $region77: #{vit_forward.1} parent=0 // pred_fallthru
    _

</llo_original>
